<compile_context>
chip_gen: v6e
topology: v6e:2x2x1
jax: 0.10.0
libtpu: 0.0.40
codegen_flags: <defaults>
</compile_context>

<pallas_src>
import functools

import jax
import jax.numpy as jnp
from jax import lax
from jax.experimental import pallas as pl
from jax.experimental.pallas import tpu as pltpu


def _layer_norm(h, gamma, beta, eps=1e-5):
    mu = jnp.mean(h, axis=-1, keepdims=True)
    c = h - mu
    var = jnp.mean(c * c, axis=-1, keepdims=True)
    return c * lax.rsqrt(var + eps) * gamma + beta


def _cycling_decoder_kernel(num_layers,
                            x_ref,
                            g1_ref, be1_ref, wq_ref, wk_ref, wv_ref, wo_ref,
                            g2_ref, be2_ref, w1_ref, bb1_ref, w2_ref, bb2_ref,
                            out_ref):
    """Bb batch elements per grid step; all num_layers cycles fused in-kernel."""
    Bb, S, D = x_ref.shape
    H = w1_ref.shape[1]
    rows = Bb * S
    bf16 = jnp.bfloat16

    # Flatten (Bb, S, D) -> (Bb*S, D): leading-dim merge only (layout-cheap),
    # gives the MXU `rows`-tall tiles for the QKV / out-proj / FFN matmuls.
    x = x_ref[...].reshape(rows, D).astype(jnp.float32)

    # bf16 weights at the MXU (cast once in the wrapper); f32 accumulation.
    wq, wk, wv, wo = wq_ref[...], wk_ref[...], wv_ref[...], wo_ref[...]
    w1, w2 = w1_ref[...], w2_ref[...]

    # Hoist parameter broadcasts out of the (possibly unrolled) layer loop:
    # JAX does not CSE broadcast_in_dim, so doing these inside _layer would
    # re-emit sublane broadcasts for every unrolled iteration.
    g1 = jnp.broadcast_to(g1_ref[...], (rows, D))
    be1 = jnp.broadcast_to(be1_ref[...], (rows, D))
    g2 = jnp.broadcast_to(g2_ref[...], (rows, D))
    be2 = jnp.broadcast_to(be2_ref[...], (rows, D))
    bb1 = jnp.broadcast_to(bb1_ref[...], (rows, H))
    bb2 = jnp.broadcast_to(bb2_ref[...], (rows, D))

    scale = 1.0 / (float(D) ** 0.5)
    row_id = lax.broadcasted_iota(jnp.int32, (S, S), 0)
    col_id = lax.broadcasted_iota(jnp.int32, (S, S), 1)
    causal = jnp.broadcast_to((row_id >= col_id)[None, :, :], (Bb, S, S))

    # Batched dot_general dim numbers: contraction on LAST axes (no k.T).
    qk_dims = (((2,), (2,)), ((0,), (0,)))   # (Bb,S,D) x (Bb,S,D) -> (Bb,S,S)
    pv_dims = (((2,), (1,)), ((0,), (0,)))   # (Bb,S,S) x (Bb,S,D) -> (Bb,S,D)

    def _layer(_, h):
        # ---- seq block: h = h + dropout(attn(norm(h))); dropout p=0 -> id ----
        n = _layer_norm(h, g1, be1).astype(bf16)
        q = jnp.dot(n, wq, preferred_element_type=jnp.float32)
        k = jnp.dot(n, wk, preferred_element_type=jnp.float32)
        v = jnp.dot(n, wv, preferred_element_type=jnp.float32)
        qb = q.reshape(Bb, S, D).astype(bf16)
        kb = k.reshape(Bb, S, D).astype(bf16)
        vb = v.reshape(Bb, S, D).astype(bf16)
        s = lax.dot_general(qb, kb, qk_dims,
                            preferred_element_type=jnp.float32) * scale
        s = jnp.where(causal, s, -1e30)
        s = s - jnp.max(s, axis=-1, keepdims=True)
        p = jnp.exp(s)
        # EUP approximate reciprocal instead of a VALU divide.
        p = p * pl.reciprocal(jnp.sum(p, axis=-1, keepdims=True), approx=True)
        a = lax.dot_general(p.astype(bf16), vb, pv_dims,
                            preferred_element_type=jnp.float32)
        a = a.reshape(rows, D)
        h = h + jnp.dot(a.astype(bf16), wo, preferred_element_type=jnp.float32)

        # ---- ff block: h = h + dropout(mlp(norm(h))); dropout p=0 -> id ----
        n2 = _layer_norm(h, g2, be2).astype(bf16)
        u = jnp.dot(n2, w1, preferred_element_type=jnp.float32) + bb1
        u = jax.nn.gelu(u, approximate=True)
        h = h + jnp.dot(u.astype(bf16), w2, preferred_element_type=jnp.float32) + bb2
        return h

    # Fully unroll only short cycles; long cycles keep a rolled loop so code
    # size and vreg live ranges stay bounded (avoids the spill-bound regime).
    h = lax.fori_loop(0, num_layers, _layer, x, unroll=(num_layers <= 4))
    out_ref[...] = h.reshape(Bb, S, D).astype(out_ref.dtype)

    # TODO(synk): dropout with p > 0 in training mode would need
    # pltpu.prng_seed + pltpu.stateful_bernoulli inside the loop; the module
    # default p = 0.0 (eval) makes it an identity, so it is omitted.
    # TODO(synk): for large S, replace the dense (Bb,S,S) score tensor with a
    # flash-style online-softmax loop over K/V tiles to keep VMEM bounded.
    # TODO(synk): for store-bound configs with D < 128, a lane-dense (B, S*D)
    # output slab (wrapper reshape) would avoid masked vst; this kernel is
    # MXU-bound (num_layers of work per single tile store), so it is skipped.


def _pick_block_batch(B, S, target_rows=128):
    """Largest divisor of B whose packed row count Bb*S stays near target."""
    bb = max(1, min(B, max(1, target_rows // max(S, 1))))
    while B % bb:
        bb -= 1
    return bb


def cycling_decoder_forward(x, params, num_layers, *, block_batch=None,
                            single_buffer_weights=True):
    """Pallas implementation of CyclingDecoderBackbone.forward.

    Args:
      x: (B, S, D) activations.
      params: dict of shared seq/ff block weights (see __main__ for shapes).
      num_layers: number of cycling repetitions of (seq_block, ff_block).
    Returns:
      (B, S, D) array.
    """
    B, S, D = x.shape
    H = params["w1"].shape[1]
    Bb = block_batch if block_batch is not None else _pick_block_batch(B, S)
    assert B % Bb == 0, (B, Bb)

    # Weights feeding the MXU go in as bf16 (f32 accumulation in-kernel);
    # LayerNorm scales/shifts and biases stay f32 on the VPU/EUP path.
    bf16 = jnp.bfloat16
    args = (
        x,
        params["g1"], params["be1"],
        params["wq"].astype(bf16), params["wk"].astype(bf16),
        params["wv"].astype(bf16), params["wo"].astype(bf16),
        params["g2"], params["be2"],
        params["w1"].astype(bf16), params["bb1"],
        params["w2"].astype(bf16), params["bb2"],
    )

    # The fused kernel does num_layers x more work than its I/O suggests.
    flops = 2 * num_layers * B * S * (4 * D * D + 2 * S * D + 2 * D * H)
    transcendentals = num_layers * B * S * (S + H)
    weight_bytes = sum(int(a.size) * a.dtype.itemsize for a in args[1:])
    bytes_accessed = 2 * int(x.size) * x.dtype.itemsize + weight_bytes
    cost = pl.CostEstimate(flops=flops, transcendentals=transcendentals,
                           bytes_accessed=bytes_accessed)

    kernel = functools.partial(_cycling_decoder_kernel, num_layers)

    # TODO(synk): for v7x small-batch inference, a second "parallel" grid axis
    # (e.g. over query tiles) would keep both TensorCores busy when B//Bb < 2.

    def _build(use_single_buffered_weights):
        wkw = {}
        if use_single_buffered_weights:
            # Constant index maps: double-buffering the weight set only doubles
            # resident VMEM with zero DMA benefit — request a single buffer.
            wkw = dict(pipeline_mode=pl.Buffered(1))

        def wspec(shape):
            n = len(shape)
            return pl.BlockSpec(shape, lambda b, _n=n: (0,) * _n, **wkw)

        in_specs = [
            pl.BlockSpec((Bb, S, D), lambda b: (b, 0, 0)),                # x
            wspec((1, D)), wspec((1, D)),                                  # ln1
            wspec((D, D)), wspec((D, D)), wspec((D, D)), wspec((D, D)),   # QKVO
            wspec((1, D)), wspec((1, D)),                                  # ln2
            wspec((D, H)), wspec((1, H)),                                  # W1 b1
            wspec((H, D)), wspec((1, D)),                                  # W2 b2
        ]
        return pl.pallas_call(
            kernel,
            out_shape=jax.ShapeDtypeStruct((B, S, D), x.dtype),
            grid_spec=pltpu.PrefetchScalarGridSpec(
                num_scalar_prefetch=0,
                grid=(B // Bb,),
                in_specs=in_specs,
                out_specs=pl.BlockSpec((Bb, S, D), lambda b: (b, 0, 0)),
            ),
            compiler_params=pltpu.CompilerParams(
                dimension_semantics=("parallel",),
                vmem_limit_bytes=32 * 1024 * 1024,
            ),
            cost_estimate=cost,
        )

    if single_buffer_weights:
        try:
            return _build(True)(*args)
        except Exception:
            # jax builds without BlockSpec(pipeline_mode=...) support: fall
            # back to default double-buffered weights (correct, more VMEM).
            pass
    return _build(False)(*args)


def _reference_forward(x, params, num_layers):
    """Pure-JAX f32 reference with identical math (for correctness checking)."""
    g1, be1 = params["g1"], params["be1"]
    g2, be2 = params["g2"], params["be2"]
    wq, wk, wv, wo = params["wq"], params["wk"], params["wv"], params["wo"]
    w1, bb1, w2, bb2 = params["w1"], params["bb1"], params["w2"], params["bb2"]
    B, S, D = x.shape
    scale = 1.0 / (float(D) ** 0.5)
    causal = jnp.tril(jnp.ones((S, S), dtype=bool))

    def ln(h, g, b):
        mu = h.mean(-1, keepdims=True)
        var = ((h - mu) ** 2).mean(-1, keepdims=True)
        return (h - mu) / jnp.sqrt(var + 1e-5) * g + b

    for _ in range(num_layers):
        n = ln(x, g1, be1)
        q, k, v = n @ wq, n @ wk, n @ wv
        s = jnp.einsum("bqd,bkd->bqk", q, k) * scale
        s = jnp.where(causal, s, -1e30)
        p = jax.nn.softmax(s, axis=-1)
        a = jnp.einsum("bqk,bkd->bqd", p, v)
        x = x + a @ wo
        n2 = ln(x, g2, be2)
        u = jax.nn.gelu(n2 @ w1 + bb1, approximate=True)
        x = x + u @ w2 + bb2
    return x


if __name__ == "__main__":
    # Small shapes consistent with the module: model_size=32, batch=2, seq=8,
    # num_layers=2 cycling repetitions, FFN hidden = 4*model_size = 128.
    batch, seq, model_size, num_layers = 2, 8, 32, 2
    hidden = 4 * model_size

    key = jax.random.PRNGKey(0)
    ks = jax.random.split(key, 8)
    wscale = 0.1
    params = {
        "g1": jnp.ones((1, model_size), jnp.float32),
        "be1": jnp.zeros((1, model_size), jnp.float32),
        "wq": wscale * jax.random.normal(ks[0], (model_size, model_size), jnp.float32),
        "wk": wscale * jax.random.normal(ks[1], (model_size, model_size), jnp.float32),
        "wv": wscale * jax.random.normal(ks[2], (model_size, model_size), jnp.float32),
        "wo": wscale * jax.random.normal(ks[3], (model_size, model_size), jnp.float32),
        "g2": jnp.ones((1, model_size), jnp.float32),
        "be2": jnp.zeros((1, model_size), jnp.float32),
        "w1": wscale * jax.random.normal(ks[4], (model_size, hidden), jnp.float32),
        "bb1": jnp.zeros((1, hidden), jnp.float32),
        "w2": wscale * jax.random.normal(ks[5], (hidden, model_size), jnp.float32),
        "bb2": jnp.zeros((1, model_size), jnp.float32),
    }
    x = jax.random.normal(ks[6], (batch, seq, model_size), jnp.float32)

    out = cycling_decoder_forward(x, params, num_layers)
    out = jax.block_until_ready(out)

    ref = _reference_forward(x, params, num_layers)
    assert out.shape == (batch, seq, model_size)
    # Kernel runs bf16 at the MXU (f32 accumulation) and uses an approximate
    # EUP reciprocal in the softmax; compare against the f32 reference with a
    # correspondingly loose tolerance.
    assert jnp.allclose(out, ref, atol=3e-2, rtol=3e-2), (
        "Pallas CyclingDecoderBackbone mismatch: max abs err = "
        f"{float(jnp.max(jnp.abs(out - ref)))}")

    print("KERNEL_OK")
</pallas_src>

<mosaic_0001>
module attributes {stable_mosaic.version = 11 : i64} {
  func.func @_cycling_decoder_kernel(%arg0: i32, %arg1: memref<2x8x32xf32, #tpu.memory_space<vmem>>, %arg2: memref<1x32xf32, #tpu.memory_space<vmem>>, %arg3: memref<1x32xf32, #tpu.memory_space<vmem>>, %arg4: memref<32x32xbf16, #tpu.memory_space<vmem>>, %arg5: memref<32x32xbf16, #tpu.memory_space<vmem>>, %arg6: memref<32x32xbf16, #tpu.memory_space<vmem>>, %arg7: memref<32x32xbf16, #tpu.memory_space<vmem>>, %arg8: memref<1x32xf32, #tpu.memory_space<vmem>>, %arg9: memref<1x32xf32, #tpu.memory_space<vmem>>, %arg10: memref<32x128xbf16, #tpu.memory_space<vmem>>, %arg11: memref<1x128xf32, #tpu.memory_space<vmem>>, %arg12: memref<128x32xbf16, #tpu.memory_space<vmem>>, %arg13: memref<1x32xf32, #tpu.memory_space<vmem>>, %arg14: memref<2x8x32xf32, #tpu.memory_space<vmem>>) attributes {dimension_semantics = [#tpu.dimension_semantics<parallel>], iteration_bounds = array<i64: 1>, scalar_prefetch = 0 : i64, scratch_operands = 0 : i64, tpu.core_type = #tpu.core_type<tc>, window_params = [{transform_indices = @transform_0, window_bounds = array<i64: 2, 8, 32>}, {pipeline_mode = #tpu.pipeline_mode<synchronous>, transform_indices = @transform_1, window_bounds = array<i64: 1, 32>}, {pipeline_mode = #tpu.pipeline_mode<synchronous>, transform_indices = @transform_2, window_bounds = array<i64: 1, 32>}, {pipeline_mode = #tpu.pipeline_mode<synchronous>, transform_indices = @transform_3, window_bounds = array<i64: 32, 32>}, {pipeline_mode = #tpu.pipeline_mode<synchronous>, transform_indices = @transform_4, window_bounds = array<i64: 32, 32>}, {pipeline_mode = #tpu.pipeline_mode<synchronous>, transform_indices = @transform_5, window_bounds = array<i64: 32, 32>}, {pipeline_mode = #tpu.pipeline_mode<synchronous>, transform_indices = @transform_6, window_bounds = array<i64: 32, 32>}, {pipeline_mode = #tpu.pipeline_mode<synchronous>, transform_indices = @transform_7, window_bounds = array<i64: 1, 32>}, {pipeline_mode = #tpu.pipeline_mode<synchronous>, transform_indices = @transform_8, window_bounds = array<i64: 1, 32>}, {pipeline_mode = #tpu.pipeline_mode<synchronous>, transform_indices = @transform_9, window_bounds = array<i64: 32, 128>}, {pipeline_mode = #tpu.pipeline_mode<synchronous>, transform_indices = @transform_10, window_bounds = array<i64: 1, 128>}, {pipeline_mode = #tpu.pipeline_mode<synchronous>, transform_indices = @transform_11, window_bounds = array<i64: 128, 32>}, {pipeline_mode = #tpu.pipeline_mode<synchronous>, transform_indices = @transform_12, window_bounds = array<i64: 1, 32>}, {transform_indices = @transform_13, window_bounds = array<i64: 2, 8, 32>}]} {
    %c0 = arith.constant 0 : index
    %c0_0 = arith.constant 0 : index
    %c0_1 = arith.constant 0 : index
    %0 = vector.load %arg1[%c0, %c0_0, %c0_1] : memref<2x8x32xf32, #tpu.memory_space<vmem>>, vector<2x8x32xf32>
    %1 = vector.shape_cast %0 : vector<2x8x32xf32> to vector<16x32xf32>
    %c0_2 = arith.constant 0 : index
    %c0_3 = arith.constant 0 : index
    %2 = vector.load %arg4[%c0_2, %c0_3] : memref<32x32xbf16, #tpu.memory_space<vmem>>, vector<32x32xbf16>
    %c0_4 = arith.constant 0 : index
    %c0_5 = arith.constant 0 : index
    %3 = vector.load %arg5[%c0_4, %c0_5] : memref<32x32xbf16, #tpu.memory_space<vmem>>, vector<32x32xbf16>
    %c0_6 = arith.constant 0 : index
    %c0_7 = arith.constant 0 : index
    %4 = vector.load %arg6[%c0_6, %c0_7] : memref<32x32xbf16, #tpu.memory_space<vmem>>, vector<32x32xbf16>
    %c0_8 = arith.constant 0 : index
    %c0_9 = arith.constant 0 : index
    %5 = vector.load %arg7[%c0_8, %c0_9] : memref<32x32xbf16, #tpu.memory_space<vmem>>, vector<32x32xbf16>
    %c0_10 = arith.constant 0 : index
    %c0_11 = arith.constant 0 : index
    %6 = vector.load %arg10[%c0_10, %c0_11] : memref<32x128xbf16, #tpu.memory_space<vmem>>, vector<32x128xbf16>
    %c0_12 = arith.constant 0 : index
    %c0_13 = arith.constant 0 : index
    %7 = vector.load %arg12[%c0_12, %c0_13] : memref<128x32xbf16, #tpu.memory_space<vmem>>, vector<128x32xbf16>
    %c0_14 = arith.constant 0 : index
    %c0_15 = arith.constant 0 : index
    %8 = vector.load %arg2[%c0_14, %c0_15] : memref<1x32xf32, #tpu.memory_space<vmem>>, vector<1x32xf32>
    %9 = vector.shape_cast %8 : vector<1x32xf32> to vector<1x32xf32>
    %10 = vector.broadcast %9 : vector<1x32xf32> to vector<16x32xf32>
    %c0_16 = arith.constant 0 : index
    %c0_17 = arith.constant 0 : index
    %11 = vector.load %arg3[%c0_16, %c0_17] : memref<1x32xf32, #tpu.memory_space<vmem>>, vector<1x32xf32>
    %12 = vector.shape_cast %11 : vector<1x32xf32> to vector<1x32xf32>
    %13 = vector.broadcast %12 : vector<1x32xf32> to vector<16x32xf32>
    %c0_18 = arith.constant 0 : index
    %c0_19 = arith.constant 0 : index
    %14 = vector.load %arg8[%c0_18, %c0_19] : memref<1x32xf32, #tpu.memory_space<vmem>>, vector<1x32xf32>
    %15 = vector.shape_cast %14 : vector<1x32xf32> to vector<1x32xf32>
    %16 = vector.broadcast %15 : vector<1x32xf32> to vector<16x32xf32>
    %c0_20 = arith.constant 0 : index
    %c0_21 = arith.constant 0 : index
    %17 = vector.load %arg9[%c0_20, %c0_21] : memref<1x32xf32, #tpu.memory_space<vmem>>, vector<1x32xf32>
    %18 = vector.shape_cast %17 : vector<1x32xf32> to vector<1x32xf32>
    %19 = vector.broadcast %18 : vector<1x32xf32> to vector<16x32xf32>
    %c0_22 = arith.constant 0 : index
    %c0_23 = arith.constant 0 : index
    %20 = vector.load %arg11[%c0_22, %c0_23] : memref<1x128xf32, #tpu.memory_space<vmem>>, vector<1x128xf32>
    %21 = vector.shape_cast %20 : vector<1x128xf32> to vector<1x128xf32>
    %22 = vector.broadcast %21 : vector<1x128xf32> to vector<16x128xf32>
    %c0_24 = arith.constant 0 : index
    %c0_25 = arith.constant 0 : index
    %23 = vector.load %arg13[%c0_24, %c0_25] : memref<1x32xf32, #tpu.memory_space<vmem>>, vector<1x32xf32>
    %24 = vector.shape_cast %23 : vector<1x32xf32> to vector<1x32xf32>
    %25 = vector.broadcast %24 : vector<1x32xf32> to vector<16x32xf32>
    %26 = tpu.iota {dimensions = array<i32: 0>} : vector<8x8xi32>
    %27 = tpu.iota {dimensions = array<i32: 1>} : vector<8x8xi32>
    %28 = arith.cmpi sge, %26, %27 : vector<8x8xi32>
    %29 = vector.shape_cast %28 : vector<8x8xi1> to vector<1x8x8xi1>
    %30 = vector.shape_cast %29 : vector<1x8x8xi1> to vector<1x8x8xi1>
    %31 = vector.broadcast %30 : vector<1x8x8xi1> to vector<2x8x8xi1>
    %c0_i32 = arith.constant 0 : i32
    %cst = arith.constant dense<0.000000e+00> : vector<16xf32>
    %32 = vector.multi_reduction <add>, %1, %cst [1] : vector<16x32xf32> to vector<16xf32>
    %33 = vector.shape_cast %32 : vector<16xf32> to vector<16x1xf32>
    %cst_26 = arith.constant 3.200000e+01 : f32
    %34 = vector.broadcast %cst_26 : f32 to vector<16x1xf32>
    %35 = arith.divf %33, %34 : vector<16x1xf32>
    %36 = vector.broadcast %35 : vector<16x1xf32> to vector<16x32xf32>
    %37 = arith.subf %1, %36 : vector<16x32xf32>
    %38 = arith.mulf %37, %37 : vector<16x32xf32>
    %cst_27 = arith.constant dense<0.000000e+00> : vector<16xf32>
    %39 = vector.multi_reduction <add>, %38, %cst_27 [1] : vector<16x32xf32> to vector<16xf32>
    %40 = vector.shape_cast %39 : vector<16xf32> to vector<16x1xf32>
    %cst_28 = arith.constant 3.200000e+01 : f32
    %41 = vector.broadcast %cst_28 : f32 to vector<16x1xf32>
    %42 = arith.divf %40, %41 : vector<16x1xf32>
    %cst_29 = arith.constant 9.99999974E-6 : f32
    %43 = vector.broadcast %cst_29 : f32 to vector<16x1xf32>
    %44 = arith.addf %42, %43 : vector<16x1xf32>
    %45 = math.rsqrt %44 : vector<16x1xf32>
    %46 = vector.broadcast %45 : vector<16x1xf32> to vector<16x32xf32>
    %47 = arith.mulf %37, %46 : vector<16x32xf32>
    %48 = arith.mulf %47, %10 : vector<16x32xf32>
    %49 = arith.addf %48, %13 : vector<16x32xf32>
    %50 = arith.truncf %49 : vector<16x32xf32> to vector<16x32xbf16>
    %cst_30 = arith.constant dense<0.000000e+00> : vector<16x32xf32>
    %51 = tpu.matmul %50, %2, %cst_30 {dimension_numbers = #tpu.dot_dimension_numbers<[1], [0], [0], [1], [0, 0, 1, 1], [], []>} : vector<16x32xbf16>, vector<32x32xbf16>, vector<16x32xf32> -> vector<16x32xf32>
    %cst_31 = arith.constant dense<0.000000e+00> : vector<16x32xf32>
    %52 = tpu.matmul %50, %3, %cst_31 {dimension_numbers = #tpu.dot_dimension_numbers<[1], [0], [0], [1], [0, 0, 1, 1], [], []>} : vector<16x32xbf16>, vector<32x32xbf16>, vector<16x32xf32> -> vector<16x32xf32>
    %cst_32 = arith.constant dense<0.000000e+00> : vector<16x32xf32>
    %53 = tpu.matmul %50, %4, %cst_32 {dimension_numbers = #tpu.dot_dimension_numbers<[1], [0], [0], [1], [0, 0, 1, 1], [], []>} : vector<16x32xbf16>, vector<32x32xbf16>, vector<16x32xf32> -> vector<16x32xf32>
    %54 = vector.shape_cast %51 : vector<16x32xf32> to vector<2x8x32xf32>
    %55 = arith.truncf %54 : vector<2x8x32xf32> to vector<2x8x32xbf16>
    %56 = vector.shape_cast %52 : vector<16x32xf32> to vector<2x8x32xf32>
    %57 = arith.truncf %56 : vector<2x8x32xf32> to vector<2x8x32xbf16>
    %58 = vector.shape_cast %53 : vector<16x32xf32> to vector<2x8x32xf32>
    %59 = arith.truncf %58 : vector<2x8x32xf32> to vector<2x8x32xbf16>
    %cst_33 = arith.constant dense<0.000000e+00> : vector<2x8x8xf32>
    %60 = tpu.matmul %55, %57, %cst_33 {dimension_numbers = #tpu.dot_dimension_numbers<[2], [2], [1], [1], [0, 0, 0, 1, 1, 1], [0], [0]>} : vector<2x8x32xbf16>, vector<2x8x32xbf16>, vector<2x8x8xf32> -> vector<2x8x8xf32>
    %cst_34 = arith.constant 0.176776692 : f32
    %61 = vector.broadcast %cst_34 : f32 to vector<2x8x8xf32>
    %62 = arith.mulf %60, %61 : vector<2x8x8xf32>
    %cst_35 = arith.constant -1.000000e+30 : f32
    %63 = vector.broadcast %cst_35 : f32 to vector<2x8x8xf32>
    %64 = arith.select %31, %62, %63 : vector<2x8x8xi1>, vector<2x8x8xf32>
    %cst_36 = arith.constant dense<0xFF800000> : vector<2x8xf32>
    %65 = vector.multi_reduction <maximumf>, %64, %cst_36 [2] : vector<2x8x8xf32> to vector<2x8xf32>
    %66 = vector.shape_cast %65 : vector<2x8xf32> to vector<2x8x1xf32>
    %67 = vector.broadcast %66 : vector<2x8x1xf32> to vector<2x8x8xf32>
    %68 = arith.subf %64, %67 : vector<2x8x8xf32>
    %69 = math.exp %68 : vector<2x8x8xf32>
    %cst_37 = arith.constant dense<0.000000e+00> : vector<2x8xf32>
    %70 = vector.multi_reduction <add>, %69, %cst_37 [2] : vector<2x8x8xf32> to vector<2x8xf32>
    %71 = vector.shape_cast %70 : vector<2x8xf32> to vector<2x8x1xf32>
    %72 = tpu.reciprocal %71 {approx = true} : vector<2x8x1xf32> -> vector<2x8x1xf32>
    %73 = vector.broadcast %72 : vector<2x8x1xf32> to vector<2x8x8xf32>
    %74 = arith.mulf %69, %73 : vector<2x8x8xf32>
    %75 = arith.truncf %74 : vector<2x8x8xf32> to vector<2x8x8xbf16>
    %cst_38 = arith.constant dense<0.000000e+00> : vector<2x8x32xf32>
    %76 = tpu.matmul %75, %59, %cst_38 {dimension_numbers = #tpu.dot_dimension_numbers<[2], [1], [1], [2], [0, 0, 0, 1, 1, 2], [0], [0]>} : vector<2x8x8xbf16>, vector<2x8x32xbf16>, vector<2x8x32xf32> -> vector<2x8x32xf32>
    %77 = vector.shape_cast %76 : vector<2x8x32xf32> to vector<16x32xf32>
    %78 = arith.truncf %77 : vector<16x32xf32> to vector<16x32xbf16>
    %cst_39 = arith.constant dense<0.000000e+00> : vector<16x32xf32>
    %79 = tpu.matmul %78, %5, %cst_39 {dimension_numbers = #tpu.dot_dimension_numbers<[1], [0], [0], [1], [0, 0, 1, 1], [], []>} : vector<16x32xbf16>, vector<32x32xbf16>, vector<16x32xf32> -> vector<16x32xf32>
    %80 = arith.addf %1, %79 : vector<16x32xf32>
    %cst_40 = arith.constant dense<0.000000e+00> : vector<16xf32>
    %81 = vector.multi_reduction <add>, %80, %cst_40 [1] : vector<16x32xf32> to vector<16xf32>
    %82 = vector.shape_cast %81 : vector<16xf32> to vector<16x1xf32>
    %cst_41 = arith.constant 3.200000e+01 : f32
    %83 = vector.broadcast %cst_41 : f32 to vector<16x1xf32>
    %84 = arith.divf %82, %83 : vector<16x1xf32>
    %85 = vector.broadcast %84 : vector<16x1xf32> to vector<16x32xf32>
    %86 = arith.subf %80, %85 : vector<16x32xf32>
    %87 = arith.mulf %86, %86 : vector<16x32xf32>
    %cst_42 = arith.constant dense<0.000000e+00> : vector<16xf32>
    %88 = vector.multi_reduction <add>, %87, %cst_42 [1] : vector<16x32xf32> to vector<16xf32>
    %89 = vector.shape_cast %88 : vector<16xf32> to vector<16x1xf32>
    %cst_43 = arith.constant 3.200000e+01 : f32
    %90 = vector.broadcast %cst_43 : f32 to vector<16x1xf32>
    %91 = arith.divf %89, %90 : vector<16x1xf32>
    %cst_44 = arith.constant 9.99999974E-6 : f32
    %92 = vector.broadcast %cst_44 : f32 to vector<16x1xf32>
    %93 = arith.addf %91, %92 : vector<16x1xf32>
    %94 = math.rsqrt %93 : vector<16x1xf32>
    %95 = vector.broadcast %94 : vector<16x1xf32> to vector<16x32xf32>
    %96 = arith.mulf %86, %95 : vector<16x32xf32>
    %97 = arith.mulf %96, %16 : vector<16x32xf32>
    %98 = arith.addf %97, %19 : vector<16x32xf32>
    %99 = arith.truncf %98 : vector<16x32xf32> to vector<16x32xbf16>
    %cst_45 = arith.constant dense<0.000000e+00> : vector<16x128xf32>
    %100 = tpu.matmul %99, %6, %cst_45 {dimension_numbers = #tpu.dot_dimension_numbers<[1], [0], [0], [1], [0, 0, 1, 1], [], []>} : vector<16x32xbf16>, vector<32x128xbf16>, vector<16x128xf32> -> vector<16x128xf32>
    %101 = arith.addf %100, %22 : vector<16x128xf32>
    %102 = arith.mulf %101, %101 : vector<16x128xf32>
    %103 = arith.mulf %101, %102 : vector<16x128xf32>
    %cst_46 = arith.constant 4.471500e-02 : f32
    %104 = vector.broadcast %cst_46 : f32 to vector<16x128xf32>
    %105 = arith.mulf %104, %103 : vector<16x128xf32>
    %106 = arith.addf %101, %105 : vector<16x128xf32>
    %cst_47 = arith.constant 0.797884583 : f32
    %107 = vector.broadcast %cst_47 : f32 to vector<16x128xf32>
    %108 = arith.mulf %107, %106 : vector<16x128xf32>
    %109 = math.tanh %108 : vector<16x128xf32>
    %cst_48 = arith.constant 1.000000e+00 : f32
    %110 = vector.broadcast %cst_48 : f32 to vector<16x128xf32>
    %111 = arith.addf %110, %109 : vector<16x128xf32>
    %cst_49 = arith.constant 5.000000e-01 : f32
    %112 = vector.broadcast %cst_49 : f32 to vector<16x128xf32>
    %113 = arith.mulf %112, %111 : vector<16x128xf32>
    %114 = arith.mulf %101, %113 : vector<16x128xf32>
    %115 = arith.truncf %114 : vector<16x128xf32> to vector<16x128xbf16>
    %cst_50 = arith.constant dense<0.000000e+00> : vector<16x32xf32>
    %116 = tpu.matmul %115, %7, %cst_50 {dimension_numbers = #tpu.dot_dimension_numbers<[1], [0], [0], [1], [0, 0, 1, 1], [], []>} : vector<16x128xbf16>, vector<128x32xbf16>, vector<16x32xf32> -> vector<16x32xf32>
    %117 = arith.addf %80, %116 : vector<16x32xf32>
    %118 = arith.addf %117, %25 : vector<16x32xf32>
    %c1_i32 = arith.constant 1 : i32
    %cst_51 = arith.constant dense<0.000000e+00> : vector<16xf32>
    %119 = vector.multi_reduction <add>, %118, %cst_51 [1] : vector<16x32xf32> to vector<16xf32>
    %120 = vector.shape_cast %119 : vector<16xf32> to vector<16x1xf32>
    %cst_52 = arith.constant 3.200000e+01 : f32
    %121 = vector.broadcast %cst_52 : f32 to vector<16x1xf32>
    %122 = arith.divf %120, %121 : vector<16x1xf32>
    %123 = vector.broadcast %122 : vector<16x1xf32> to vector<16x32xf32>
    %124 = arith.subf %118, %123 : vector<16x32xf32>
    %125 = arith.mulf %124, %124 : vector<16x32xf32>
    %cst_53 = arith.constant dense<0.000000e+00> : vector<16xf32>
    %126 = vector.multi_reduction <add>, %125, %cst_53 [1] : vector<16x32xf32> to vector<16xf32>
    %127 = vector.shape_cast %126 : vector<16xf32> to vector<16x1xf32>
    %cst_54 = arith.constant 3.200000e+01 : f32
    %128 = vector.broadcast %cst_54 : f32 to vector<16x1xf32>
    %129 = arith.divf %127, %128 : vector<16x1xf32>
    %cst_55 = arith.constant 9.99999974E-6 : f32
    %130 = vector.broadcast %cst_55 : f32 to vector<16x1xf32>
    %131 = arith.addf %129, %130 : vector<16x1xf32>
    %132 = math.rsqrt %131 : vector<16x1xf32>
    %133 = vector.broadcast %132 : vector<16x1xf32> to vector<16x32xf32>
    %134 = arith.mulf %124, %133 : vector<16x32xf32>
    %135 = arith.mulf %134, %10 : vector<16x32xf32>
    %136 = arith.addf %135, %13 : vector<16x32xf32>
    %137 = arith.truncf %136 : vector<16x32xf32> to vector<16x32xbf16>
    %cst_56 = arith.constant dense<0.000000e+00> : vector<16x32xf32>
    %138 = tpu.matmul %137, %2, %cst_56 {dimension_numbers = #tpu.dot_dimension_numbers<[1], [0], [0], [1], [0, 0, 1, 1], [], []>} : vector<16x32xbf16>, vector<32x32xbf16>, vector<16x32xf32> -> vector<16x32xf32>
    %cst_57 = arith.constant dense<0.000000e+00> : vector<16x32xf32>
    %139 = tpu.matmul %137, %3, %cst_57 {dimension_numbers = #tpu.dot_dimension_numbers<[1], [0], [0], [1], [0, 0, 1, 1], [], []>} : vector<16x32xbf16>, vector<32x32xbf16>, vector<16x32xf32> -> vector<16x32xf32>
    %cst_58 = arith.constant dense<0.000000e+00> : vector<16x32xf32>
    %140 = tpu.matmul %137, %4, %cst_58 {dimension_numbers = #tpu.dot_dimension_numbers<[1], [0], [0], [1], [0, 0, 1, 1], [], []>} : vector<16x32xbf16>, vector<32x32xbf16>, vector<16x32xf32> -> vector<16x32xf32>
    %141 = vector.shape_cast %138 : vector<16x32xf32> to vector<2x8x32xf32>
    %142 = arith.truncf %141 : vector<2x8x32xf32> to vector<2x8x32xbf16>
    %143 = vector.shape_cast %139 : vector<16x32xf32> to vector<2x8x32xf32>
    %144 = arith.truncf %143 : vector<2x8x32xf32> to vector<2x8x32xbf16>
    %145 = vector.shape_cast %140 : vector<16x32xf32> to vector<2x8x32xf32>
    %146 = arith.truncf %145 : vector<2x8x32xf32> to vector<2x8x32xbf16>
    %cst_59 = arith.constant dense<0.000000e+00> : vector<2x8x8xf32>
    %147 = tpu.matmul %142, %144, %cst_59 {dimension_numbers = #tpu.dot_dimension_numbers<[2], [2], [1], [1], [0, 0, 0, 1, 1, 1], [0], [0]>} : vector<2x8x32xbf16>, vector<2x8x32xbf16>, vector<2x8x8xf32> -> vector<2x8x8xf32>
    %cst_60 = arith.constant 0.176776692 : f32
    %148 = vector.broadcast %cst_60 : f32 to vector<2x8x8xf32>
    %149 = arith.mulf %147, %148 : vector<2x8x8xf32>
    %cst_61 = arith.constant -1.000000e+30 : f32
    %150 = vector.broadcast %cst_61 : f32 to vector<2x8x8xf32>
    %151 = arith.select %31, %149, %150 : vector<2x8x8xi1>, vector<2x8x8xf32>
    %cst_62 = arith.constant dense<0xFF800000> : vector<2x8xf32>
    %152 = vector.multi_reduction <maximumf>, %151, %cst_62 [2] : vector<2x8x8xf32> to vector<2x8xf32>
    %153 = vector.shape_cast %152 : vector<2x8xf32> to vector<2x8x1xf32>
    %154 = vector.broadcast %153 : vector<2x8x1xf32> to vector<2x8x8xf32>
    %155 = arith.subf %151, %154 : vector<2x8x8xf32>
    %156 = math.exp %155 : vector<2x8x8xf32>
    %cst_63 = arith.constant dense<0.000000e+00> : vector<2x8xf32>
    %157 = vector.multi_reduction <add>, %156, %cst_63 [2] : vector<2x8x8xf32> to vector<2x8xf32>
    %158 = vector.shape_cast %157 : vector<2x8xf32> to vector<2x8x1xf32>
    %159 = tpu.reciprocal %158 {approx = true} : vector<2x8x1xf32> -> vector<2x8x1xf32>
    %160 = vector.broadcast %159 : vector<2x8x1xf32> to vector<2x8x8xf32>
    %161 = arith.mulf %156, %160 : vector<2x8x8xf32>
    %162 = arith.truncf %161 : vector<2x8x8xf32> to vector<2x8x8xbf16>
    %cst_64 = arith.constant dense<0.000000e+00> : vector<2x8x32xf32>
    %163 = tpu.matmul %162, %146, %cst_64 {dimension_numbers = #tpu.dot_dimension_numbers<[2], [1], [1], [2], [0, 0, 0, 1, 1, 2], [0], [0]>} : vector<2x8x8xbf16>, vector<2x8x32xbf16>, vector<2x8x32xf32> -> vector<2x8x32xf32>
    %164 = vector.shape_cast %163 : vector<2x8x32xf32> to vector<16x32xf32>
    %165 = arith.truncf %164 : vector<16x32xf32> to vector<16x32xbf16>
    %cst_65 = arith.constant dense<0.000000e+00> : vector<16x32xf32>
    %166 = tpu.matmul %165, %5, %cst_65 {dimension_numbers = #tpu.dot_dimension_numbers<[1], [0], [0], [1], [0, 0, 1, 1], [], []>} : vector<16x32xbf16>, vector<32x32xbf16>, vector<16x32xf32> -> vector<16x32xf32>
    %167 = arith.addf %118, %166 : vector<16x32xf32>
    %cst_66 = arith.constant dense<0.000000e+00> : vector<16xf32>
    %168 = vector.multi_reduction <add>, %167, %cst_66 [1] : vector<16x32xf32> to vector<16xf32>
    %169 = vector.shape_cast %168 : vector<16xf32> to vector<16x1xf32>
    %cst_67 = arith.constant 3.200000e+01 : f32
    %170 = vector.broadcast %cst_67 : f32 to vector<16x1xf32>
    %171 = arith.divf %169, %170 : vector<16x1xf32>
    %172 = vector.broadcast %171 : vector<16x1xf32> to vector<16x32xf32>
    %173 = arith.subf %167, %172 : vector<16x32xf32>
    %174 = arith.mulf %173, %173 : vector<16x32xf32>
    %cst_68 = arith.constant dense<0.000000e+00> : vector<16xf32>
    %175 = vector.multi_reduction <add>, %174, %cst_68 [1] : vector<16x32xf32> to vector<16xf32>
    %176 = vector.shape_cast %175 : vector<16xf32> to vector<16x1xf32>
    %cst_69 = arith.constant 3.200000e+01 : f32
    %177 = vector.broadcast %cst_69 : f32 to vector<16x1xf32>
    %178 = arith.divf %176, %177 : vector<16x1xf32>
    %cst_70 = arith.constant 9.99999974E-6 : f32
    %179 = vector.broadcast %cst_70 : f32 to vector<16x1xf32>
    %180 = arith.addf %178, %179 : vector<16x1xf32>
    %181 = math.rsqrt %180 : vector<16x1xf32>
    %182 = vector.broadcast %181 : vector<16x1xf32> to vector<16x32xf32>
    %183 = arith.mulf %173, %182 : vector<16x32xf32>
    %184 = arith.mulf %183, %16 : vector<16x32xf32>
    %185 = arith.addf %184, %19 : vector<16x32xf32>
    %186 = arith.truncf %185 : vector<16x32xf32> to vector<16x32xbf16>
    %cst_71 = arith.constant dense<0.000000e+00> : vector<16x128xf32>
    %187 = tpu.matmul %186, %6, %cst_71 {dimension_numbers = #tpu.dot_dimension_numbers<[1], [0], [0], [1], [0, 0, 1, 1], [], []>} : vector<16x32xbf16>, vector<32x128xbf16>, vector<16x128xf32> -> vector<16x128xf32>
    %188 = arith.addf %187, %22 : vector<16x128xf32>
    %189 = arith.mulf %188, %188 : vector<16x128xf32>
    %190 = arith.mulf %188, %189 : vector<16x128xf32>
    %cst_72 = arith.constant 4.471500e-02 : f32
    %191 = vector.broadcast %cst_72 : f32 to vector<16x128xf32>
    %192 = arith.mulf %191, %190 : vector<16x128xf32>
    %193 = arith.addf %188, %192 : vector<16x128xf32>
    %cst_73 = arith.constant 0.797884583 : f32
    %194 = vector.broadcast %cst_73 : f32 to vector<16x128xf32>
    %195 = arith.mulf %194, %193 : vector<16x128xf32>
    %196 = math.tanh %195 : vector<16x128xf32>
    %cst_74 = arith.constant 1.000000e+00 : f32
    %197 = vector.broadcast %cst_74 : f32 to vector<16x128xf32>
    %198 = arith.addf %197, %196 : vector<16x128xf32>
    %cst_75 = arith.constant 5.000000e-01 : f32
    %199 = vector.broadcast %cst_75 : f32 to vector<16x128xf32>
    %200 = arith.mulf %199, %198 : vector<16x128xf32>
    %201 = arith.mulf %188, %200 : vector<16x128xf32>
    %202 = arith.truncf %201 : vector<16x128xf32> to vector<16x128xbf16>
    %cst_76 = arith.constant dense<0.000000e+00> : vector<16x32xf32>
    %203 = tpu.matmul %202, %7, %cst_76 {dimension_numbers = #tpu.dot_dimension_numbers<[1], [0], [0], [1], [0, 0, 1, 1], [], []>} : vector<16x128xbf16>, vector<128x32xbf16>, vector<16x32xf32> -> vector<16x32xf32>
    %204 = arith.addf %167, %203 : vector<16x32xf32>
    %205 = arith.addf %204, %25 : vector<16x32xf32>
    %206 = vector.shape_cast %205 : vector<16x32xf32> to vector<2x8x32xf32>
    %c0_77 = arith.constant 0 : index
    %c0_78 = arith.constant 0 : index
    %c0_79 = arith.constant 0 : index
    %207 = vector.load %arg14[%c0_77, %c0_78, %c0_79] : memref<2x8x32xf32, #tpu.memory_space<vmem>>, vector<2x8x32xf32>
    tpu.vector_store %arg14[%c0_77, %c0_78, %c0_79], %206 {strides = array<i32>} : memref<2x8x32xf32, #tpu.memory_space<vmem>>, vector<2x8x32xf32>,
    return
  }
  func.func @transform_0(%arg0: i32) -> (i32, i32, i32) {
    %c0_i32 = arith.constant 0 : i32
    %c0_i32_0 = arith.constant 0 : i32
    %c0_i32_1 = arith.constant 0 : i32
    return %arg0, %c0_i32, %c0_i32_0 : i32, i32, i32
  }
  func.func @transform_1(%arg0: i32) -> (i32, i32) {
    %c0_i32 = arith.constant 0 : i32
    %c0_i32_0 = arith.constant 0 : i32
    %c0_i32_1 = arith.constant 0 : i32
    return %c0_i32, %c0_i32_0 : i32, i32
  }
  func.func @transform_2(%arg0: i32) -> (i32, i32) {
    %c0_i32 = arith.constant 0 : i32
    %c0_i32_0 = arith.constant 0 : i32
    %c0_i32_1 = arith.constant 0 : i32
    return %c0_i32, %c0_i32_0 : i32, i32
  }
  func.func @transform_3(%arg0: i32) -> (i32, i32) {
    %c0_i32 = arith.constant 0 : i32
    %c0_i32_0 = arith.constant 0 : i32
    %c0_i32_1 = arith.constant 0 : i32
    return %c0_i32, %c0_i32_0 : i32, i32
  }
  func.func @transform_4(%arg0: i32) -> (i32, i32) {
    %c0_i32 = arith.constant 0 : i32
    %c0_i32_0 = arith.constant 0 : i32
    %c0_i32_1 = arith.constant 0 : i32
    return %c0_i32, %c0_i32_0 : i32, i32
  }
  func.func @transform_5(%arg0: i32) -> (i32, i32) {
    %c0_i32 = arith.constant 0 : i32
    %c0_i32_0 = arith.constant 0 : i32
    %c0_i32_1 = arith.constant 0 : i32
    return %c0_i32, %c0_i32_0 : i32, i32
  }
  func.func @transform_6(%arg0: i32) -> (i32, i32) {
    %c0_i32 = arith.constant 0 : i32
    %c0_i32_0 = arith.constant 0 : i32
    %c0_i32_1 = arith.constant 0 : i32
    return %c0_i32, %c0_i32_0 : i32, i32
  }
  func.func @transform_7(%arg0: i32) -> (i32, i32) {
    %c0_i32 = arith.constant 0 : i32
    %c0_i32_0 = arith.constant 0 : i32
    %c0_i32_1 = arith.constant 0 : i32
    return %c0_i32, %c0_i32_0 : i32, i32
  }
  func.func @transform_8(%arg0: i32) -> (i32, i32) {
    %c0_i32 = arith.constant 0 : i32
    %c0_i32_0 = arith.constant 0 : i32
    %c0_i32_1 = arith.constant 0 : i32
    return %c0_i32, %c0_i32_0 : i32, i32
  }
  func.func @transform_9(%arg0: i32) -> (i32, i32) {
    %c0_i32 = arith.constant 0 : i32
    %c0_i32_0 = arith.constant 0 : i32
    %c0_i32_1 = arith.constant 0 : i32
    return %c0_i32, %c0_i32_0 : i32, i32
  }
  func.func @transform_10(%arg0: i32) -> (i32, i32) {
    %c0_i32 = arith.constant 0 : i32
    %c0_i32_0 = arith.constant 0 : i32
    %c0_i32_1 = arith.constant 0 : i32
    return %c0_i32, %c0_i32_0 : i32, i32
  }
  func.func @transform_11(%arg0: i32) -> (i32, i32) {
    %c0_i32 = arith.constant 0 : i32
    %c0_i32_0 = arith.constant 0 : i32
    %c0_i32_1 = arith.constant 0 : i32
    return %c0_i32, %c0_i32_0 : i32, i32
  }
  func.func @transform_12(%arg0: i32) -> (i32, i32) {
    %c0_i32 = arith.constant 0 : i32
    %c0_i32_0 = arith.constant 0 : i32
    %c0_i32_1 = arith.constant 0 : i32
    return %c0_i32, %c0_i32_0 : i32, i32
  }
  func.func @transform_13(%arg0: i32) -> (i32, i32, i32) {
    %c0_i32 = arith.constant 0 : i32
    %c0_i32_0 = arith.constant 0 : i32
    %c0_i32_1 = arith.constant 0 : i32
    return %arg0, %c0_i32, %c0_i32_0 : i32, i32, i32
  }
}

module attributes {stable_mosaic.version = 11 : i64} {
  func.func @_cycling_decoder_kernel(%arg0: i32, %arg1: memref<2x8x32xf32, #tpu.memory_space<vmem>>, %arg2: memref<1x32xf32, #tpu.memory_space<vmem>>, %arg3: memref<1x32xf32, #tpu.memory_space<vmem>>, %arg4: memref<32x32xbf16, #tpu.memory_space<vmem>>, %arg5: memref<32x32xbf16, #tpu.memory_space<vmem>>, %arg6: memref<32x32xbf16, #tpu.memory_space<vmem>>, %arg7: memref<32x32xbf16, #tpu.memory_space<vmem>>, %arg8: memref<1x32xf32, #tpu.memory_space<vmem>>, %arg9: memref<1x32xf32, #tpu.memory_space<vmem>>, %arg10: memref<32x128xbf16, #tpu.memory_space<vmem>>, %arg11: memref<1x128xf32, #tpu.memory_space<vmem>>, %arg12: memref<128x32xbf16, #tpu.memory_space<vmem>>, %arg13: memref<1x32xf32, #tpu.memory_space<vmem>>, %arg14: memref<2x8x32xf32, #tpu.memory_space<vmem>>) attributes {dimension_semantics = [#tpu.dimension_semantics<parallel>], iteration_bounds = array<i64: 1>, scalar_prefetch = 0 : i64, scratch_operands = 0 : i64, tpu.core_type = #tpu.core_type<tc>, window_params = [{transform_indices = @transform_0, window_bounds = array<i64: 2, 8, 32>}, {pipeline_mode = #tpu.pipeline_mode<synchronous>, transform_indices = @transform_1, window_bounds = array<i64: 1, 32>}, {pipeline_mode = #tpu.pipeline_mode<synchronous>, transform_indices = @transform_2, window_bounds = array<i64: 1, 32>}, {pipeline_mode = #tpu.pipeline_mode<synchronous>, transform_indices = @transform_3, window_bounds = array<i64: 32, 32>}, {pipeline_mode = #tpu.pipeline_mode<synchronous>, transform_indices = @transform_4, window_bounds = array<i64: 32, 32>}, {pipeline_mode = #tpu.pipeline_mode<synchronous>, transform_indices = @transform_5, window_bounds = array<i64: 32, 32>}, {pipeline_mode = #tpu.pipeline_mode<synchronous>, transform_indices = @transform_6, window_bounds = array<i64: 32, 32>}, {pipeline_mode = #tpu.pipeline_mode<synchronous>, transform_indices = @transform_7, window_bounds = array<i64: 1, 32>}, {pipeline_mode = #tpu.pipeline_mode<synchronous>, transform_indices = @transform_8, window_bounds = array<i64: 1, 32>}, {pipeline_mode = #tpu.pipeline_mode<synchronous>, transform_indices = @transform_9, window_bounds = array<i64: 32, 128>}, {pipeline_mode = #tpu.pipeline_mode<synchronous>, transform_indices = @transform_10, window_bounds = array<i64: 1, 128>}, {pipeline_mode = #tpu.pipeline_mode<synchronous>, transform_indices = @transform_11, window_bounds = array<i64: 128, 32>}, {pipeline_mode = #tpu.pipeline_mode<synchronous>, transform_indices = @transform_12, window_bounds = array<i64: 1, 32>}, {transform_indices = @transform_13, window_bounds = array<i64: 2, 8, 32>}]} {
    %c0 = arith.constant 0 : index
    %c0_0 = arith.constant 0 : index
    %c0_1 = arith.constant 0 : index
    %0 = vector.load %arg1[%c0, %c0_0, %c0_1] : memref<2x8x32xf32, #tpu.memory_space<vmem>>, vector<2x8x32xf32>
    %1 = vector.shape_cast %0 : vector<2x8x32xf32> to vector<16x32xf32>
    %c0_2 = arith.constant 0 : index
    %c0_3 = arith.constant 0 : index
    %2 = vector.load %arg4[%c0_2, %c0_3] : memref<32x32xbf16, #tpu.memory_space<vmem>>, vector<32x32xbf16>
    %c0_4 = arith.constant 0 : index
    %c0_5 = arith.constant 0 : index
    %3 = vector.load %arg5[%c0_4, %c0_5] : memref<32x32xbf16, #tpu.memory_space<vmem>>, vector<32x32xbf16>
    %c0_6 = arith.constant 0 : index
    %c0_7 = arith.constant 0 : index
    %4 = vector.load %arg6[%c0_6, %c0_7] : memref<32x32xbf16, #tpu.memory_space<vmem>>, vector<32x32xbf16>
    %c0_8 = arith.constant 0 : index
    %c0_9 = arith.constant 0 : index
    %5 = vector.load %arg7[%c0_8, %c0_9] : memref<32x32xbf16, #tpu.memory_space<vmem>>, vector<32x32xbf16>
    %c0_10 = arith.constant 0 : index
    %c0_11 = arith.constant 0 : index
    %6 = vector.load %arg10[%c0_10, %c0_11] : memref<32x128xbf16, #tpu.memory_space<vmem>>, vector<32x128xbf16>
    %c0_12 = arith.constant 0 : index
    %c0_13 = arith.constant 0 : index
    %7 = vector.load %arg12[%c0_12, %c0_13] : memref<128x32xbf16, #tpu.memory_space<vmem>>, vector<128x32xbf16>
    %c0_14 = arith.constant 0 : index
    %c0_15 = arith.constant 0 : index
    %8 = vector.load %arg2[%c0_14, %c0_15] : memref<1x32xf32, #tpu.memory_space<vmem>>, vector<1x32xf32>
    %9 = vector.shape_cast %8 : vector<1x32xf32> to vector<1x32xf32>
    %10 = vector.broadcast %9 : vector<1x32xf32> to vector<16x32xf32>
    %c0_16 = arith.constant 0 : index
    %c0_17 = arith.constant 0 : index
    %11 = vector.load %arg3[%c0_16, %c0_17] : memref<1x32xf32, #tpu.memory_space<vmem>>, vector<1x32xf32>
    %12 = vector.shape_cast %11 : vector<1x32xf32> to vector<1x32xf32>
    %13 = vector.broadcast %12 : vector<1x32xf32> to vector<16x32xf32>
    %c0_18 = arith.constant 0 : index
    %c0_19 = arith.constant 0 : index
    %14 = vector.load %arg8[%c0_18, %c0_19] : memref<1x32xf32, #tpu.memory_space<vmem>>, vector<1x32xf32>
    %15 = vector.shape_cast %14 : vector<1x32xf32> to vector<1x32xf32>
    %16 = vector.broadcast %15 : vector<1x32xf32> to vector<16x32xf32>
    %c0_20 = arith.constant 0 : index
    %c0_21 = arith.constant 0 : index
    %17 = vector.load %arg9[%c0_20, %c0_21] : memref<1x32xf32, #tpu.memory_space<vmem>>, vector<1x32xf32>
    %18 = vector.shape_cast %17 : vector<1x32xf32> to vector<1x32xf32>
    %19 = vector.broadcast %18 : vector<1x32xf32> to vector<16x32xf32>
    %c0_22 = arith.constant 0 : index
    %c0_23 = arith.constant 0 : index
    %20 = vector.load %arg11[%c0_22, %c0_23] : memref<1x128xf32, #tpu.memory_space<vmem>>, vector<1x128xf32>
    %21 = vector.shape_cast %20 : vector<1x128xf32> to vector<1x128xf32>
    %22 = vector.broadcast %21 : vector<1x128xf32> to vector<16x128xf32>
    %c0_24 = arith.constant 0 : index
    %c0_25 = arith.constant 0 : index
    %23 = vector.load %arg13[%c0_24, %c0_25] : memref<1x32xf32, #tpu.memory_space<vmem>>, vector<1x32xf32>
    %24 = vector.shape_cast %23 : vector<1x32xf32> to vector<1x32xf32>
    %25 = vector.broadcast %24 : vector<1x32xf32> to vector<16x32xf32>
    %26 = tpu.iota {dimensions = array<i32: 0>} : vector<8x8xi32>
    %27 = tpu.iota {dimensions = array<i32: 1>} : vector<8x8xi32>
    %28 = arith.cmpi sge, %26, %27 : vector<8x8xi32>
    %29 = vector.shape_cast %28 : vector<8x8xi1> to vector<1x8x8xi1>
    %30 = vector.shape_cast %29 : vector<1x8x8xi1> to vector<1x8x8xi1>
    %31 = vector.broadcast %30 : vector<1x8x8xi1> to vector<2x8x8xi1>
    %c0_i32 = arith.constant 0 : i32
    %cst = arith.constant dense<0.000000e+00> : vector<16xf32>
    %32 = vector.multi_reduction <add>, %1, %cst [1] : vector<16x32xf32> to vector<16xf32>
    %33 = vector.shape_cast %32 : vector<16xf32> to vector<16x1xf32>
    %cst_26 = arith.constant 3.200000e+01 : f32
    %34 = vector.broadcast %cst_26 : f32 to vector<16x1xf32>
    %35 = arith.divf %33, %34 : vector<16x1xf32>
    %36 = vector.broadcast %35 : vector<16x1xf32> to vector<16x32xf32>
    %37 = arith.subf %1, %36 : vector<16x32xf32>
    %38 = arith.mulf %37, %37 : vector<16x32xf32>
    %cst_27 = arith.constant dense<0.000000e+00> : vector<16xf32>
    %39 = vector.multi_reduction <add>, %38, %cst_27 [1] : vector<16x32xf32> to vector<16xf32>
    %40 = vector.shape_cast %39 : vector<16xf32> to vector<16x1xf32>
    %cst_28 = arith.constant 3.200000e+01 : f32
    %41 = vector.broadcast %cst_28 : f32 to vector<16x1xf32>
    %42 = arith.divf %40, %41 : vector<16x1xf32>
    %cst_29 = arith.constant 9.99999974E-6 : f32
    %43 = vector.broadcast %cst_29 : f32 to vector<16x1xf32>
    %44 = arith.addf %42, %43 : vector<16x1xf32>
    %45 = math.rsqrt %44 : vector<16x1xf32>
    %46 = vector.broadcast %45 : vector<16x1xf32> to vector<16x32xf32>
    %47 = arith.mulf %37, %46 : vector<16x32xf32>
    %48 = arith.mulf %47, %10 : vector<16x32xf32>
    %49 = arith.addf %48, %13 : vector<16x32xf32>
    %50 = arith.truncf %49 : vector<16x32xf32> to vector<16x32xbf16>
    %cst_30 = arith.constant dense<0.000000e+00> : vector<16x32xf32>
    %51 = tpu.matmul %50, %2, %cst_30 {dimension_numbers = #tpu.dot_dimension_numbers<[1], [0], [0], [1], [0, 0, 1, 1], [], []>} : vector<16x32xbf16>, vector<32x32xbf16>, vector<16x32xf32> -> vector<16x32xf32>
    %cst_31 = arith.constant dense<0.000000e+00> : vector<16x32xf32>
    %52 = tpu.matmul %50, %3, %cst_31 {dimension_numbers = #tpu.dot_dimension_numbers<[1], [0], [0], [1], [0, 0, 1, 1], [], []>} : vector<16x32xbf16>, vector<32x32xbf16>, vector<16x32xf32> -> vector<16x32xf32>
    %cst_32 = arith.constant dense<0.000000e+00> : vector<16x32xf32>
    %53 = tpu.matmul %50, %4, %cst_32 {dimension_numbers = #tpu.dot_dimension_numbers<[1], [0], [0], [1], [0, 0, 1, 1], [], []>} : vector<16x32xbf16>, vector<32x32xbf16>, vector<16x32xf32> -> vector<16x32xf32>
    %54 = vector.shape_cast %51 : vector<16x32xf32> to vector<2x8x32xf32>
    %55 = arith.truncf %54 : vector<2x8x32xf32> to vector<2x8x32xbf16>
    %56 = vector.shape_cast %52 : vector<16x32xf32> to vector<2x8x32xf32>
    %57 = arith.truncf %56 : vector<2x8x32xf32> to vector<2x8x32xbf16>
    %58 = vector.shape_cast %53 : vector<16x32xf32> to vector<2x8x32xf32>
    %59 = arith.truncf %58 : vector<2x8x32xf32> to vector<2x8x32xbf16>
    %cst_33 = arith.constant dense<0.000000e+00> : vector<2x8x8xf32>
    %60 = tpu.matmul %55, %57, %cst_33 {dimension_numbers = #tpu.dot_dimension_numbers<[2], [2], [1], [1], [0, 0, 0, 1, 1, 1], [0], [0]>} : vector<2x8x32xbf16>, vector<2x8x32xbf16>, vector<2x8x8xf32> -> vector<2x8x8xf32>
    %cst_34 = arith.constant 0.176776692 : f32
    %61 = vector.broadcast %cst_34 : f32 to vector<2x8x8xf32>
    %62 = arith.mulf %60, %61 : vector<2x8x8xf32>
    %cst_35 = arith.constant -1.000000e+30 : f32
    %63 = vector.broadcast %cst_35 : f32 to vector<2x8x8xf32>
    %64 = arith.select %31, %62, %63 : vector<2x8x8xi1>, vector<2x8x8xf32>
    %cst_36 = arith.constant dense<0xFF800000> : vector<2x8xf32>
    %65 = vector.multi_reduction <maximumf>, %64, %cst_36 [2] : vector<2x8x8xf32> to vector<2x8xf32>
    %66 = vector.shape_cast %65 : vector<2x8xf32> to vector<2x8x1xf32>
    %67 = vector.broadcast %66 : vector<2x8x1xf32> to vector<2x8x8xf32>
    %68 = arith.subf %64, %67 : vector<2x8x8xf32>
    %69 = math.exp %68 : vector<2x8x8xf32>
    %cst_37 = arith.constant dense<0.000000e+00> : vector<2x8xf32>
    %70 = vector.multi_reduction <add>, %69, %cst_37 [2] : vector<2x8x8xf32> to vector<2x8xf32>
    %71 = vector.shape_cast %70 : vector<2x8xf32> to vector<2x8x1xf32>
    %72 = tpu.reciprocal %71 {approx = true} : vector<2x8x1xf32> -> vector<2x8x1xf32>
    %73 = vector.broadcast %72 : vector<2x8x1xf32> to vector<2x8x8xf32>
    %74 = arith.mulf %69, %73 : vector<2x8x8xf32>
    %75 = arith.truncf %74 : vector<2x8x8xf32> to vector<2x8x8xbf16>
    %cst_38 = arith.constant dense<0.000000e+00> : vector<2x8x32xf32>
    %76 = tpu.matmul %75, %59, %cst_38 {dimension_numbers = #tpu.dot_dimension_numbers<[2], [1], [1], [2], [0, 0, 0, 1, 1, 2], [0], [0]>} : vector<2x8x8xbf16>, vector<2x8x32xbf16>, vector<2x8x32xf32> -> vector<2x8x32xf32>
    %77 = vector.shape_cast %76 : vector<2x8x32xf32> to vector<16x32xf32>
    %78 = arith.truncf %77 : vector<16x32xf32> to vector<16x32xbf16>
    %cst_39 = arith.constant dense<0.000000e+00> : vector<16x32xf32>
    %79 = tpu.matmul %78, %5, %cst_39 {dimension_numbers = #tpu.dot_dimension_numbers<[1], [0], [0], [1], [0, 0, 1, 1], [], []>} : vector<16x32xbf16>, vector<32x32xbf16>, vector<16x32xf32> -> vector<16x32xf32>
    %80 = arith.addf %1, %79 : vector<16x32xf32>
    %cst_40 = arith.constant dense<0.000000e+00> : vector<16xf32>
    %81 = vector.multi_reduction <add>, %80, %cst_40 [1] : vector<16x32xf32> to vector<16xf32>
    %82 = vector.shape_cast %81 : vector<16xf32> to vector<16x1xf32>
    %cst_41 = arith.constant 3.200000e+01 : f32
    %83 = vector.broadcast %cst_41 : f32 to vector<16x1xf32>
    %84 = arith.divf %82, %83 : vector<16x1xf32>
    %85 = vector.broadcast %84 : vector<16x1xf32> to vector<16x32xf32>
    %86 = arith.subf %80, %85 : vector<16x32xf32>
    %87 = arith.mulf %86, %86 : vector<16x32xf32>
    %cst_42 = arith.constant dense<0.000000e+00> : vector<16xf32>
    %88 = vector.multi_reduction <add>, %87, %cst_42 [1] : vector<16x32xf32> to vector<16xf32>
    %89 = vector.shape_cast %88 : vector<16xf32> to vector<16x1xf32>
    %cst_43 = arith.constant 3.200000e+01 : f32
    %90 = vector.broadcast %cst_43 : f32 to vector<16x1xf32>
    %91 = arith.divf %89, %90 : vector<16x1xf32>
    %cst_44 = arith.constant 9.99999974E-6 : f32
    %92 = vector.broadcast %cst_44 : f32 to vector<16x1xf32>
    %93 = arith.addf %91, %92 : vector<16x1xf32>
    %94 = math.rsqrt %93 : vector<16x1xf32>
    %95 = vector.broadcast %94 : vector<16x1xf32> to vector<16x32xf32>
    %96 = arith.mulf %86, %95 : vector<16x32xf32>
    %97 = arith.mulf %96, %16 : vector<16x32xf32>
    %98 = arith.addf %97, %19 : vector<16x32xf32>
    %99 = arith.truncf %98 : vector<16x32xf32> to vector<16x32xbf16>
    %cst_45 = arith.constant dense<0.000000e+00> : vector<16x128xf32>
    %100 = tpu.matmul %99, %6, %cst_45 {dimension_numbers = #tpu.dot_dimension_numbers<[1], [0], [0], [1], [0, 0, 1, 1], [], []>} : vector<16x32xbf16>, vector<32x128xbf16>, vector<16x128xf32> -> vector<16x128xf32>
    %101 = arith.addf %100, %22 : vector<16x128xf32>
    %102 = arith.mulf %101, %101 : vector<16x128xf32>
    %103 = arith.mulf %101, %102 : vector<16x128xf32>
    %cst_46 = arith.constant 4.471500e-02 : f32
    %104 = vector.broadcast %cst_46 : f32 to vector<16x128xf32>
    %105 = arith.mulf %104, %103 : vector<16x128xf32>
    %106 = arith.addf %101, %105 : vector<16x128xf32>
    %cst_47 = arith.constant 0.797884583 : f32
    %107 = vector.broadcast %cst_47 : f32 to vector<16x128xf32>
    %108 = arith.mulf %107, %106 : vector<16x128xf32>
    %109 = math.tanh %108 : vector<16x128xf32>
    %cst_48 = arith.constant 1.000000e+00 : f32
    %110 = vector.broadcast %cst_48 : f32 to vector<16x128xf32>
    %111 = arith.addf %110, %109 : vector<16x128xf32>
    %cst_49 = arith.constant 5.000000e-01 : f32
    %112 = vector.broadcast %cst_49 : f32 to vector<16x128xf32>
    %113 = arith.mulf %112, %111 : vector<16x128xf32>
    %114 = arith.mulf %101, %113 : vector<16x128xf32>
    %115 = arith.truncf %114 : vector<16x128xf32> to vector<16x128xbf16>
    %cst_50 = arith.constant dense<0.000000e+00> : vector<16x32xf32>
    %116 = tpu.matmul %115, %7, %cst_50 {dimension_numbers = #tpu.dot_dimension_numbers<[1], [0], [0], [1], [0, 0, 1, 1], [], []>} : vector<16x128xbf16>, vector<128x32xbf16>, vector<16x32xf32> -> vector<16x32xf32>
    %117 = arith.addf %80, %116 : vector<16x32xf32>
    %118 = arith.addf %117, %25 : vector<16x32xf32>
    %c1_i32 = arith.constant 1 : i32
    %cst_51 = arith.constant dense<0.000000e+00> : vector<16xf32>
    %119 = vector.multi_reduction <add>, %118, %cst_51 [1] : vector<16x32xf32> to vector<16xf32>
    %120 = vector.shape_cast %119 : vector<16xf32> to vector<16x1xf32>
    %cst_52 = arith.constant 3.200000e+01 : f32
    %121 = vector.broadcast %cst_52 : f32 to vector<16x1xf32>
    %122 = arith.divf %120, %121 : vector<16x1xf32>
    %123 = vector.broadcast %122 : vector<16x1xf32> to vector<16x32xf32>
    %124 = arith.subf %118, %123 : vector<16x32xf32>
    %125 = arith.mulf %124, %124 : vector<16x32xf32>
    %cst_53 = arith.constant dense<0.000000e+00> : vector<16xf32>
    %126 = vector.multi_reduction <add>, %125, %cst_53 [1] : vector<16x32xf32> to vector<16xf32>
    %127 = vector.shape_cast %126 : vector<16xf32> to vector<16x1xf32>
    %cst_54 = arith.constant 3.200000e+01 : f32
    %128 = vector.broadcast %cst_54 : f32 to vector<16x1xf32>
    %129 = arith.divf %127, %128 : vector<16x1xf32>
    %cst_55 = arith.constant 9.99999974E-6 : f32
    %130 = vector.broadcast %cst_55 : f32 to vector<16x1xf32>
    %131 = arith.addf %129, %130 : vector<16x1xf32>
    %132 = math.rsqrt %131 : vector<16x1xf32>
    %133 = vector.broadcast %132 : vector<16x1xf32> to vector<16x32xf32>
    %134 = arith.mulf %124, %133 : vector<16x32xf32>
    %135 = arith.mulf %134, %10 : vector<16x32xf32>
    %136 = arith.addf %135, %13 : vector<16x32xf32>
    %137 = arith.truncf %136 : vector<16x32xf32> to vector<16x32xbf16>
    %cst_56 = arith.constant dense<0.000000e+00> : vector<16x32xf32>
    %138 = tpu.matmul %137, %2, %cst_56 {dimension_numbers = #tpu.dot_dimension_numbers<[1], [0], [0], [1], [0, 0, 1, 1], [], []>} : vector<16x32xbf16>, vector<32x32xbf16>, vector<16x32xf32> -> vector<16x32xf32>
    %cst_57 = arith.constant dense<0.000000e+00> : vector<16x32xf32>
    %139 = tpu.matmul %137, %3, %cst_57 {dimension_numbers = #tpu.dot_dimension_numbers<[1], [0], [0], [1], [0, 0, 1, 1], [], []>} : vector<16x32xbf16>, vector<32x32xbf16>, vector<16x32xf32> -> vector<16x32xf32>
    %cst_58 = arith.constant dense<0.000000e+00> : vector<16x32xf32>
    %140 = tpu.matmul %137, %4, %cst_58 {dimension_numbers = #tpu.dot_dimension_numbers<[1], [0], [0], [1], [0, 0, 1, 1], [], []>} : vector<16x32xbf16>, vector<32x32xbf16>, vector<16x32xf32> -> vector<16x32xf32>
    %141 = vector.shape_cast %138 : vector<16x32xf32> to vector<2x8x32xf32>
    %142 = arith.truncf %141 : vector<2x8x32xf32> to vector<2x8x32xbf16>
    %143 = vector.shape_cast %139 : vector<16x32xf32> to vector<2x8x32xf32>
    %144 = arith.truncf %143 : vector<2x8x32xf32> to vector<2x8x32xbf16>
    %145 = vector.shape_cast %140 : vector<16x32xf32> to vector<2x8x32xf32>
    %146 = arith.truncf %145 : vector<2x8x32xf32> to vector<2x8x32xbf16>
    %cst_59 = arith.constant dense<0.000000e+00> : vector<2x8x8xf32>
    %147 = tpu.matmul %142, %144, %cst_59 {dimension_numbers = #tpu.dot_dimension_numbers<[2], [2], [1], [1], [0, 0, 0, 1, 1, 1], [0], [0]>} : vector<2x8x32xbf16>, vector<2x8x32xbf16>, vector<2x8x8xf32> -> vector<2x8x8xf32>
    %cst_60 = arith.constant 0.176776692 : f32
    %148 = vector.broadcast %cst_60 : f32 to vector<2x8x8xf32>
    %149 = arith.mulf %147, %148 : vector<2x8x8xf32>
    %cst_61 = arith.constant -1.000000e+30 : f32
    %150 = vector.broadcast %cst_61 : f32 to vector<2x8x8xf32>
    %151 = arith.select %31, %149, %150 : vector<2x8x8xi1>, vector<2x8x8xf32>
    %cst_62 = arith.constant dense<0xFF800000> : vector<2x8xf32>
    %152 = vector.multi_reduction <maximumf>, %151, %cst_62 [2] : vector<2x8x8xf32> to vector<2x8xf32>
    %153 = vector.shape_cast %152 : vector<2x8xf32> to vector<2x8x1xf32>
    %154 = vector.broadcast %153 : vector<2x8x1xf32> to vector<2x8x8xf32>
    %155 = arith.subf %151, %154 : vector<2x8x8xf32>
    %156 = math.exp %155 : vector<2x8x8xf32>
    %cst_63 = arith.constant dense<0.000000e+00> : vector<2x8xf32>
    %157 = vector.multi_reduction <add>, %156, %cst_63 [2] : vector<2x8x8xf32> to vector<2x8xf32>
    %158 = vector.shape_cast %157 : vector<2x8xf32> to vector<2x8x1xf32>
    %159 = tpu.reciprocal %158 {approx = true} : vector<2x8x1xf32> -> vector<2x8x1xf32>
    %160 = vector.broadcast %159 : vector<2x8x1xf32> to vector<2x8x8xf32>
    %161 = arith.mulf %156, %160 : vector<2x8x8xf32>
    %162 = arith.truncf %161 : vector<2x8x8xf32> to vector<2x8x8xbf16>
    %cst_64 = arith.constant dense<0.000000e+00> : vector<2x8x32xf32>
    %163 = tpu.matmul %162, %146, %cst_64 {dimension_numbers = #tpu.dot_dimension_numbers<[2], [1], [1], [2], [0, 0, 0, 1, 1, 2], [0], [0]>} : vector<2x8x8xbf16>, vector<2x8x32xbf16>, vector<2x8x32xf32> -> vector<2x8x32xf32>
    %164 = vector.shape_cast %163 : vector<2x8x32xf32> to vector<16x32xf32>
    %165 = arith.truncf %164 : vector<16x32xf32> to vector<16x32xbf16>
    %cst_65 = arith.constant dense<0.000000e+00> : vector<16x32xf32>
    %166 = tpu.matmul %165, %5, %cst_65 {dimension_numbers = #tpu.dot_dimension_numbers<[1], [0], [0], [1], [0, 0, 1, 1], [], []>} : vector<16x32xbf16>, vector<32x32xbf16>, vector<16x32xf32> -> vector<16x32xf32>
    %167 = arith.addf %118, %166 : vector<16x32xf32>
    %cst_66 = arith.constant dense<0.000000e+00> : vector<16xf32>
    %168 = vector.multi_reduction <add>, %167, %cst_66 [1] : vector<16x32xf32> to vector<16xf32>
    %169 = vector.shape_cast %168 : vector<16xf32> to vector<16x1xf32>
    %cst_67 = arith.constant 3.200000e+01 : f32
    %170 = vector.broadcast %cst_67 : f32 to vector<16x1xf32>
    %171 = arith.divf %169, %170 : vector<16x1xf32>
    %172 = vector.broadcast %171 : vector<16x1xf32> to vector<16x32xf32>
    %173 = arith.subf %167, %172 : vector<16x32xf32>
    %174 = arith.mulf %173, %173 : vector<16x32xf32>
    %cst_68 = arith.constant dense<0.000000e+00> : vector<16xf32>
    %175 = vector.multi_reduction <add>, %174, %cst_68 [1] : vector<16x32xf32> to vector<16xf32>
    %176 = vector.shape_cast %175 : vector<16xf32> to vector<16x1xf32>
    %cst_69 = arith.constant 3.200000e+01 : f32
    %177 = vector.broadcast %cst_69 : f32 to vector<16x1xf32>
    %178 = arith.divf %176, %177 : vector<16x1xf32>
    %cst_70 = arith.constant 9.99999974E-6 : f32
    %179 = vector.broadcast %cst_70 : f32 to vector<16x1xf32>
    %180 = arith.addf %178, %179 : vector<16x1xf32>
    %181 = math.rsqrt %180 : vector<16x1xf32>
    %182 = vector.broadcast %181 : vector<16x1xf32> to vector<16x32xf32>
    %183 = arith.mulf %173, %182 : vector<16x32xf32>
    %184 = arith.mulf %183, %16 : vector<16x32xf32>
    %185 = arith.addf %184, %19 : vector<16x32xf32>
    %186 = arith.truncf %185 : vector<16x32xf32> to vector<16x32xbf16>
    %cst_71 = arith.constant dense<0.000000e+00> : vector<16x128xf32>
    %187 = tpu.matmul %186, %6, %cst_71 {dimension_numbers = #tpu.dot_dimension_numbers<[1], [0], [0], [1], [0, 0, 1, 1], [], []>} : vector<16x32xbf16>, vector<32x128xbf16>, vector<16x128xf32> -> vector<16x128xf32>
    %188 = arith.addf %187, %22 : vector<16x128xf32>
    %189 = arith.mulf %188, %188 : vector<16x128xf32>
    %190 = arith.mulf %188, %189 : vector<16x128xf32>
    %cst_72 = arith.constant 4.471500e-02 : f32
    %191 = vector.broadcast %cst_72 : f32 to vector<16x128xf32>
    %192 = arith.mulf %191, %190 : vector<16x128xf32>
    %193 = arith.addf %188, %192 : vector<16x128xf32>
    %cst_73 = arith.constant 0.797884583 : f32
    %194 = vector.broadcast %cst_73 : f32 to vector<16x128xf32>
    %195 = arith.mulf %194, %193 : vector<16x128xf32>
    %196 = math.tanh %195 : vector<16x128xf32>
    %cst_74 = arith.constant 1.000000e+00 : f32
    %197 = vector.broadcast %cst_74 : f32 to vector<16x128xf32>
    %198 = arith.addf %197, %196 : vector<16x128xf32>
    %cst_75 = arith.constant 5.000000e-01 : f32
    %199 = vector.broadcast %cst_75 : f32 to vector<16x128xf32>
    %200 = arith.mulf %199, %198 : vector<16x128xf32>
    %201 = arith.mulf %188, %200 : vector<16x128xf32>
    %202 = arith.truncf %201 : vector<16x128xf32> to vector<16x128xbf16>
    %cst_76 = arith.constant dense<0.000000e+00> : vector<16x32xf32>
    %203 = tpu.matmul %202, %7, %cst_76 {dimension_numbers = #tpu.dot_dimension_numbers<[1], [0], [0], [1], [0, 0, 1, 1], [], []>} : vector<16x128xbf16>, vector<128x32xbf16>, vector<16x32xf32> -> vector<16x32xf32>
    %204 = arith.addf %167, %203 : vector<16x32xf32>
    %205 = arith.addf %204, %25 : vector<16x32xf32>
    %206 = vector.shape_cast %205 : vector<16x32xf32> to vector<2x8x32xf32>
    %c0_77 = arith.constant 0 : index
    %c0_78 = arith.constant 0 : index
    %c0_79 = arith.constant 0 : index
    %207 = vector.load %arg14[%c0_77, %c0_78, %c0_79] : memref<2x8x32xf32, #tpu.memory_space<vmem>>, vector<2x8x32xf32>
    tpu.vector_store %arg14[%c0_77, %c0_78, %c0_79], %206 {strides = array<i32>} : memref<2x8x32xf32, #tpu.memory_space<vmem>>, vector<2x8x32xf32>,
    return
  }
  func.func @transform_0(%arg0: i32) -> (i32, i32, i32) {
    %c0_i32 = arith.constant 0 : i32
    %c0_i32_0 = arith.constant 0 : i32
    %c0_i32_1 = arith.constant 0 : i32
    return %arg0, %c0_i32, %c0_i32_0 : i32, i32, i32
  }
  func.func @transform_1(%arg0: i32) -> (i32, i32) {
    %c0_i32 = arith.constant 0 : i32
    %c0_i32_0 = arith.constant 0 : i32
    %c0_i32_1 = arith.constant 0 : i32
    return %c0_i32, %c0_i32_0 : i32, i32
  }
  func.func @transform_2(%arg0: i32) -> (i32, i32) {
    %c0_i32 = arith.constant 0 : i32
    %c0_i32_0 = arith.constant 0 : i32
    %c0_i32_1 = arith.constant 0 : i32
    return %c0_i32, %c0_i32_0 : i32, i32
  }
  func.func @transform_3(%arg0: i32) -> (i32, i32) {
    %c0_i32 = arith.constant 0 : i32
    %c0_i32_0 = arith.constant 0 : i32
    %c0_i32_1 = arith.constant 0 : i32
    return %c0_i32, %c0_i32_0 : i32, i32
  }
  func.func @transform_4(%arg0: i32) -> (i32, i32) {
    %c0_i32 = arith.constant 0 : i32
    %c0_i32_0 = arith.constant 0 : i32
    %c0_i32_1 = arith.constant 0 : i32
    return %c0_i32, %c0_i32_0 : i32, i32
  }
  func.func @transform_5(%arg0: i32) -> (i32, i32) {
    %c0_i32 = arith.constant 0 : i32
    %c0_i32_0 = arith.constant 0 : i32
    %c0_i32_1 = arith.constant 0 : i32
    return %c0_i32, %c0_i32_0 : i32, i32
  }
  func.func @transform_6(%arg0: i32) -> (i32, i32) {
    %c0_i32 = arith.constant 0 : i32
    %c0_i32_0 = arith.constant 0 : i32
    %c0_i32_1 = arith.constant 0 : i32
    return %c0_i32, %c0_i32_0 : i32, i32
  }
  func.func @transform_7(%arg0: i32) -> (i32, i32) {
    %c0_i32 = arith.constant 0 : i32
    %c0_i32_0 = arith.constant 0 : i32
    %c0_i32_1 = arith.constant 0 : i32
    return %c0_i32, %c0_i32_0 : i32, i32
  }
  func.func @transform_8(%arg0: i32) -> (i32, i32) {
    %c0_i32 = arith.constant 0 : i32
    %c0_i32_0 = arith.constant 0 : i32
    %c0_i32_1 = arith.constant 0 : i32
    return %c0_i32, %c0_i32_0 : i32, i32
  }
  func.func @transform_9(%arg0: i32) -> (i32, i32) {
    %c0_i32 = arith.constant 0 : i32
    %c0_i32_0 = arith.constant 0 : i32
    %c0_i32_1 = arith.constant 0 : i32
    return %c0_i32, %c0_i32_0 : i32, i32
  }
  func.func @transform_10(%arg0: i32) -> (i32, i32) {
    %c0_i32 = arith.constant 0 : i32
    %c0_i32_0 = arith.constant 0 : i32
    %c0_i32_1 = arith.constant 0 : i32
    return %c0_i32, %c0_i32_0 : i32, i32
  }
  func.func @transform_11(%arg0: i32) -> (i32, i32) {
    %c0_i32 = arith.constant 0 : i32
    %c0_i32_0 = arith.constant 0 : i32
    %c0_i32_1 = arith.constant 0 : i32
    return %c0_i32, %c0_i32_0 : i32, i32
  }
  func.func @transform_12(%arg0: i32) -> (i32, i32) {
    %c0_i32 = arith.constant 0 : i32
    %c0_i32_0 = arith.constant 0 : i32
    %c0_i32_1 = arith.constant 0 : i32
    return %c0_i32, %c0_i32_0 : i32, i32
  }
  func.func @transform_13(%arg0: i32) -> (i32, i32, i32) {
    %c0_i32 = arith.constant 0 : i32
    %c0_i32_0 = arith.constant 0 : i32
    %c0_i32_1 = arith.constant 0 : i32
    return %arg0, %c0_i32, %c0_i32_0 : i32, i32, i32
  }
}

</mosaic_0001>

<llo_original>
// kernel: tpu_custom_call.1
$region0: #{tpu_custom_call.1}
  #allocation0 [shape = 'u32[]', space=smem, size = 0x4, offset = 0x4, fixed_abs, tag = 'smem constant byte address 0x4 - core index']
  #allocation1 [shape = 'u32[144,128]{1,0:T(1,128)}', space=vmem, size = 0x12000, scoped, tag = 'internal scratch']
  %s0 = inlined_call_operand.vmem [shape: f32[2,8,32], index: 0, kind: input, shape index: {}]
  %s1 = inlined_call_operand.hbm [shape: f32[1,32], index: 1, kind: input, shape index: {}]
  %s2 = inlined_call_operand.hbm [shape: f32[1,32], index: 2, kind: input, shape index: {}]
  %s3 = inlined_call_operand.vmem [shape: bf16[32,32], index: 3, kind: input, shape index: {}]
  %s4 = inlined_call_operand.vmem [shape: bf16[32,32], index: 4, kind: input, shape index: {}]
  %s5 = inlined_call_operand.vmem [shape: bf16[32,32], index: 5, kind: input, shape index: {}]
  %s6 = inlined_call_operand.vmem [shape: bf16[32,32], index: 6, kind: input, shape index: {}]
  %s7 = inlined_call_operand.hbm [shape: f32[1,32], index: 7, kind: input, shape index: {}]
  %s8 = inlined_call_operand.hbm [shape: f32[1,32], index: 8, kind: input, shape index: {}]
  %s9 = inlined_call_operand.vmem [shape: bf16[32,128], index: 9, kind: input, shape index: {}]
  %s10 = inlined_call_operand.vmem [shape: f32[1,128], index: 10, kind: input, shape index: {}]
  %s11 = inlined_call_operand.vmem [shape: bf16[128,32], index: 11, kind: input, shape index: {}]
  %s12 = inlined_call_operand.vmem [shape: f32[1,32], index: 12, kind: input, shape index: {}]
  %s13 = inlined_call_operand.hbm [shape: f32[2,8,32], index: 13, kind: output, shape index: {}]
  %s14 = sld [smem:[#allocation0]]
  $region78: #{tpu_custom_call.1} parent=0
    _
  %s16 = ssub.s32 1, %s14
  %s17 = scalar_select 0, %s16, %s14
  $region1: #{tpu_custom_call.1} parent=0
    #allocation2 [shape = 'u8[512]{0}', space=vmem, size = 0x400, scoped, tag = 'input window, operand 1, single buffered']
    #allocation3 [shape = 's32[1]{0}', space=sflag, size = 0x4, scoped, tag = 'scoped memory for tpu_custom_call.1']
    #allocation4 [shape = 's32[1]{0}', space=sflag, size = 0x4, scoped, tag = 'scoped memory for tpu_custom_call.1']
    #allocation5 [shape = 'u8[512]{0}', space=vmem, size = 0x400, scoped, tag = 'input window, operand 2, single buffered']
    #allocation6 [shape = 's32[1]{0}', space=sflag, size = 0x4, scoped, tag = 'scoped memory for tpu_custom_call.1']
    #allocation7 [shape = 'u8[512]{0}', space=vmem, size = 0x400, scoped, tag = 'input window, operand 7, single buffered']
    #allocation8 [shape = 'u8[512]{0}', space=vmem, size = 0x400, scoped, tag = 'input window, operand 8, single buffered']
    #allocation9 [shape = 's32[1]{0}', space=sflag, size = 0x4, scoped, tag = 'scoped memory for tpu_custom_call.1']
    #allocation10 [shape = 'u8[8192]{0}', space=vmem, size = 0x2000, scoped, tag = 'output window, operand 0, single buffered']
    %18 = vsyncpa [#allocation3], 0
    %19 = vsyncpa [#allocation6], 0
    %20 = vsyncpa [#allocation9], 0
    %21 = vsyncpa [#allocation4], 0
    // Predicated region
    $region2: #{tpu_custom_call.1} parent=1 // pred_check
      _
    $region3: #{tpu_custom_call.1} parent=1 // pred_check_branch
      %23 = sbr.rel (0) target = $region5
    $region4: #{tpu_custom_call.1} parent=1 // pred_region
      _
    $region5: #{tpu_custom_call.1} parent=1 // pred_fallthru
      _
    // Predicated region
    $region6: #{tpu_custom_call.1} parent=1 // pred_check
      _
    $region7: #{tpu_custom_call.1} parent=1 // pred_check_branch
      %25 = sbr.rel (0) target = $region9
    $region8: #{tpu_custom_call.1} parent=1 // pred_region
      %s27 = ssub.s32 16, 16
      %28 = vsyncadd [#allocation3], %s27
      %s30 = sshll.u32 [#allocation2], 4
      %s31 = int_to_ptr.vmem [resolvable:$true] %s30
      %33 = dma.hbm_to_vmem [thread:$0]  %s1, 16, %s31, [#allocation3]
    $region9: #{tpu_custom_call.1} parent=1 // pred_fallthru
      _
    // Predicated region
    $region10: #{tpu_custom_call.1} parent=1 // pred_check
      _
    $region11: #{tpu_custom_call.1} parent=1 // pred_check_branch
      %35 = sbr.rel (0) target = $region13
    $region12: #{tpu_custom_call.1} parent=1 // pred_region
      %s37 = ssub.s32 16, 16
      %38 = vsyncadd [#allocation6], %s37
      %s40 = sshll.u32 [#allocation5], 4
      %s41 = int_to_ptr.vmem [resolvable:$true] %s40
      %43 = dma.hbm_to_vmem [thread:$0]  %s2, 16, %s41, [#allocation6]
    $region13: #{tpu_custom_call.1} parent=1 // pred_fallthru
      _
    // Predicated region
    $region14: #{tpu_custom_call.1} parent=1 // pred_check
      _
    $region15: #{tpu_custom_call.1} parent=1 // pred_check_branch
      %45 = sbr.rel (0) target = $region17
    $region16: #{tpu_custom_call.1} parent=1 // pred_region
      _
    $region17: #{tpu_custom_call.1} parent=1 // pred_fallthru
      _
    // Predicated region
    $region18: #{tpu_custom_call.1} parent=1 // pred_check
      _
    $region19: #{tpu_custom_call.1} parent=1 // pred_check_branch
      %47 = sbr.rel (0) target = $region21
    $region20: #{tpu_custom_call.1} parent=1 // pred_region
      _
    $region21: #{tpu_custom_call.1} parent=1 // pred_fallthru
      _
    // Predicated region
    $region22: #{tpu_custom_call.1} parent=1 // pred_check
      _
    $region23: #{tpu_custom_call.1} parent=1 // pred_check_branch
      %49 = sbr.rel (0) target = $region25
    $region24: #{tpu_custom_call.1} parent=1 // pred_region
      _
    $region25: #{tpu_custom_call.1} parent=1 // pred_fallthru
      _
    // Predicated region
    $region26: #{tpu_custom_call.1} parent=1 // pred_check
      _
    $region27: #{tpu_custom_call.1} parent=1 // pred_check_branch
      %51 = sbr.rel (0) target = $region29
    $region28: #{tpu_custom_call.1} parent=1 // pred_region
      _
    $region29: #{tpu_custom_call.1} parent=1 // pred_fallthru
      _
    // Predicated region
    $region30: #{tpu_custom_call.1} parent=1 // pred_check
      _
    $region31: #{tpu_custom_call.1} parent=1 // pred_check_branch
      %53 = sbr.rel (0) target = $region33
    $region32: #{tpu_custom_call.1} parent=1 // pred_region
      %s55 = ssub.s32 16, 16
      %56 = vsyncadd [#allocation6], %s55
      %s58 = sshll.u32 [#allocation7], 4
      %s59 = int_to_ptr.vmem [resolvable:$true] %s58
      %61 = dma.hbm_to_vmem [thread:$0]  %s7, 16, %s59, [#allocation6]
    $region33: #{tpu_custom_call.1} parent=1 // pred_fallthru
      _
    // Predicated region
    $region34: #{tpu_custom_call.1} parent=1 // pred_check
      _
    $region35: #{tpu_custom_call.1} parent=1 // pred_check_branch
      %63 = sbr.rel (0) target = $region37
    $region36: #{tpu_custom_call.1} parent=1 // pred_region
      %s65 = ssub.s32 16, 16
      %66 = vsyncadd [#allocation9], %s65
      %s68 = sshll.u32 [#allocation8], 4
      %s69 = int_to_ptr.vmem [resolvable:$true] %s68
      %71 = dma.hbm_to_vmem [thread:$0]  %s8, 16, %s69, [#allocation9]
    $region37: #{tpu_custom_call.1} parent=1 // pred_fallthru
      _
    // Predicated region
    $region38: #{tpu_custom_call.1} parent=1 // pred_check
      _
    $region39: #{tpu_custom_call.1} parent=1 // pred_check_branch
      %73 = sbr.rel (0) target = $region41
    $region40: #{tpu_custom_call.1} parent=1 // pred_region
      _
    $region41: #{tpu_custom_call.1} parent=1 // pred_fallthru
      _
    // Predicated region
    $region42: #{tpu_custom_call.1} parent=1 // pred_check
      _
    $region43: #{tpu_custom_call.1} parent=1 // pred_check_branch
      %75 = sbr.rel (0) target = $region45
    $region44: #{tpu_custom_call.1} parent=1 // pred_region
      _
    $region45: #{tpu_custom_call.1} parent=1 // pred_fallthru
      _
    // Predicated region
    $region46: #{tpu_custom_call.1} parent=1 // pred_check
      _
    $region47: #{tpu_custom_call.1} parent=1 // pred_check_branch
      %77 = sbr.rel (0) target = $region49
    $region48: #{tpu_custom_call.1} parent=1 // pred_region
      _
    $region49: #{tpu_custom_call.1} parent=1 // pred_fallthru
      _
    // Predicated region
    $region50: #{tpu_custom_call.1} parent=1 // pred_check
      _
    $region51: #{tpu_custom_call.1} parent=1 // pred_check_branch
      %79 = sbr.rel (0) target = $region53
    $region52: #{tpu_custom_call.1} parent=1 // pred_region
      _
    $region53: #{tpu_custom_call.1} parent=1 // pred_fallthru
      _
    // Predicated region
    $region54: #{tpu_custom_call.1} parent=1 // pred_check
      _
    $region55: #{tpu_custom_call.1} parent=1 // pred_check_branch
      %81 = sbr.rel (0) target = $region57
    $region56: #{tpu_custom_call.1} parent=1 // pred_region
      %82 = dma.done [#allocation3], 16
    $region57: #{tpu_custom_call.1} parent=1 // pred_fallthru
      _
    // Predicated region
    $region58: #{tpu_custom_call.1} parent=1 // pred_check
      _
    $region59: #{tpu_custom_call.1} parent=1 // pred_check_branch
      %84 = sbr.rel (0) target = $region61
    $region60: #{tpu_custom_call.1} parent=1 // pred_region
      %85 = dma.done [#allocation6], 16
    $region61: #{tpu_custom_call.1} parent=1 // pred_fallthru
      _
    // Predicated region
    $region62: #{tpu_custom_call.1} parent=1 // pred_check
      _
    $region63: #{tpu_custom_call.1} parent=1 // pred_check_branch
      %87 = sbr.rel (0) target = $region65
    $region64: #{tpu_custom_call.1} parent=1 // pred_region
      %88 = dma.done [#allocation6], 16
    $region65: #{tpu_custom_call.1} parent=1 // pred_fallthru
      _
    // Predicated region
    $region66: #{tpu_custom_call.1} parent=1 // pred_check
      _
    $region67: #{tpu_custom_call.1} parent=1 // pred_check_branch
      %90 = sbr.rel (0) target = $region69
    $region68: #{tpu_custom_call.1} parent=1 // pred_region
      %91 = dma.done [#allocation9], 16
    $region69: #{tpu_custom_call.1} parent=1 // pred_fallthru
      _
    %v93 = vld [vmem:[%s0] sm:$0xff]
    %v94 = vld [vmem:[%s0 + $0x8] sm:$0xff]
    %v95 = vld [vmem:[%s3] sm:$0xf]
    %v96 = vld [vmem:[%s3 + $0x4] sm:$0xf]
    %v97 = vld [vmem:[%s3 + $0x8] sm:$0xf]
    %v98 = vld [vmem:[%s3 + $0xc] sm:$0xf]
    %v99 = vld [vmem:[%s4] sm:$0xf]
    %v100 = vld [vmem:[%s4 + $0x4] sm:$0xf]
    %v101 = vld [vmem:[%s4 + $0x8] sm:$0xf]
    %v102 = vld [vmem:[%s4 + $0xc] sm:$0xf]
    %v103 = vld [vmem:[%s5] sm:$0xf]
    %v104 = vld [vmem:[%s5 + $0x4] sm:$0xf]
    %v105 = vld [vmem:[%s5 + $0x8] sm:$0xf]
    %v106 = vld [vmem:[%s5 + $0xc] sm:$0xf]
    %v107 = vld [vmem:[%s6] sm:$0xf]
    %v108 = vld [vmem:[%s6 + $0x4] sm:$0xf]
    %v109 = vld [vmem:[%s6 + $0x8] sm:$0xf]
    %v110 = vld [vmem:[%s6 + $0xc] sm:$0xf]
    %v111 = vld [vmem:[%s9] sm:$0xf]
    %v112 = vld [vmem:[%s9 + $0x4] sm:$0xf]
    %v113 = vld [vmem:[%s9 + $0x8] sm:$0xf]
    %v114 = vld [vmem:[%s9 + $0xc] sm:$0xf]
    %v115 = vld [vmem:[%s11] sm:$0xf]
    %v116 = vld [vmem:[%s11 + $0x4] sm:$0xf]
    %v117 = vld [vmem:[%s11 + $0x8] sm:$0xf]
    %v118 = vld [vmem:[%s11 + $0xc] sm:$0xf]
    %v119 = vld [vmem:[%s11 + $0x10] sm:$0xf]
    %v120 = vld [vmem:[%s11 + $0x14] sm:$0xf]
    %v121 = vld [vmem:[%s11 + $0x18] sm:$0xf]
    %v122 = vld [vmem:[%s11 + $0x1c] sm:$0xf]
    %v123 = vld [vmem:[%s11 + $0x20] sm:$0xf]
    %v124 = vld [vmem:[%s11 + $0x24] sm:$0xf]
    %v125 = vld [vmem:[%s11 + $0x28] sm:$0xf]
    %v126 = vld [vmem:[%s11 + $0x2c] sm:$0xf]
    %v127 = vld [vmem:[%s11 + $0x30] sm:$0xf]
    %v128 = vld [vmem:[%s11 + $0x34] sm:$0xf]
    %v129 = vld [vmem:[%s11 + $0x38] sm:$0xf]
    %v130 = vld [vmem:[%s11 + $0x3c] sm:$0xf]
    %v131 = vld [vmem:[#allocation2] sm:$0x1]
    %v133 = vlaneseq
    %v134 = vshrl.u32 %v133, 7
    %v135 = vsub.s32 0, %v134
    %v136 = vrot.slane %v131, %v135
    %v138 = vld [vmem:[#allocation5] sm:$0x1]
    %v140 = vlaneseq
    %v141 = vshrl.u32 %v140, 7
    %v142 = vsub.s32 0, %v141
    %v143 = vrot.slane %v138, %v142
    %v145 = vld [vmem:[#allocation7] sm:$0x1]
    %v147 = vlaneseq
    %v148 = vshrl.u32 %v147, 7
    %v149 = vsub.s32 0, %v148
    %v150 = vrot.slane %v145, %v149
    %v152 = vld [vmem:[#allocation8] sm:$0x1]
    %v154 = vlaneseq
    %v155 = vshrl.u32 %v154, 7
    %v156 = vsub.s32 0, %v155
    %v157 = vrot.slane %v152, %v156
    %v159 = vld [vmem:[%s10] sm:$0x1]
    %v161 = vlaneseq
    %v162 = vshrl.u32 %v161, 7
    %v163 = vsub.s32 0, %v162
    %v164 = vrot.slane %v159, %v163
    %v166 = vld [vmem:[%s12] sm:$0x1]
    %v168 = vlaneseq
    %v169 = vshrl.u32 %v168, 7
    %v170 = vsub.s32 0, %v169
    %v171 = vrot.slane %v166, %v170
    %v173 = vlaneseq
    %v174 = vshrl.u32 %v173, 7
    %v175 = vlaneseq
    %v176 = vand.u32 %v175, 127
    %vm177 = vcmp.ge.s32.totalorder %v174, %v176
    %v178 = vsel %vm177, 1, 0
    %vm179 = vcmp.eq.s32.totalorder %v178, 1
    %vm180 = vcmask 261120
    %v181 = vsel %vm180, %v93, 0.0
    %182 = vadd.xlane.f32.xlu0 %v181
    %v183 = vpop.xlane.xlu0 %182
    %v184 = vsel %vm180, %v94, 0.0
    %185 = vadd.xlane.f32.xlu0 %v184
    %v186 = vpop.xlane.xlu0 %185
    %v187 = vrcp.pop 32.0
    %v188 = vmul.f32 %v183, %v187
    %v189 = vmul.f32 %v186, %v187
    %v190 = vsub.f32 %v93, %v188
    %v191 = vsub.f32 %v94, %v189
    %v192 = vmul.f32 %v190, %v190
    %v193 = vmul.f32 %v191, %v191
    %v194 = vsel %vm180, %v192, 0.0
    %195 = vadd.xlane.f32.xlu0 %v194
    %v196 = vpop.xlane.xlu0 %195
    %v197 = vsel %vm180, %v193, 0.0
    %198 = vadd.xlane.f32.xlu0 %v197
    %v199 = vpop.xlane.xlu0 %198
    %v200 = vmul.f32 %v196, %v187
    %v201 = vmul.f32 %v199, %v187
    %v202 = vadd.f32 %v200, 1e-05
    %v203 = vadd.f32 %v201, 1e-05
    %v204 = vrsqrt.pop %v202
    %v205 = vrsqrt.pop %v203
    %v206 = vmul.f32 %v190, %v204
    %v207 = vmul.f32 %v191, %v205
    %v208 = vmul.f32 %v206, %v136
    %v209 = vmul.f32 %v207, %v136
    %v210 = vadd.f32 %v208, %v143
    %v211 = vadd.f32 %v209, %v143
    %v212 = vpack.c.bf16 %v211, %v210
    %v217 = vunpack.c.l.b16 %v95
    %v218 = vunpack.c.l.b16 %v96
    %v219 = vunpack.c.l.b16 %v97
    %v220 = vunpack.c.l.b16 %v98
    %v221 = vpack.c.b16 %v218, %v217
    %v222 = vpack.c.b16 %v220, %v219
    %v226 = vsel %vm180, %v212, 0
    %228 = vmatprep.subr.bf16.mxu0 0
    %229 = vmatpush1.bf16.msra.mxu0 0
    %230 = vmatprep.subr.bf16.mxu0 0
    %231 = vmatpush1.bf16.msra.mxu0 0
    %232 = vmatprep.subr.bf16.mxu0 0
    %233 = vmatpush1.bf16.msra.mxu0 0
    %234 = vmatprep.subr.bf16.mxu0 0
    %235 = vmatpush1.bf16.msra.mxu0 0
    %236 = vmatprep.subr.bf16.mxu0 0
    %237 = vmatpush1.bf16.msra.mxu0 0
    %238 = vmatprep.subr.bf16.mxu0 0
    %239 = vmatpush1.bf16.msra.mxu0 0
    %240 = vmatprep.subr.bf16.mxu0 0
    %241 = vmatpush1.bf16.msra.mxu0 %v222
    %242 = vmatprep.subr.bf16.mxu0 0
    %243 = vmatpush1.bf16.msra.mxu0 %v221
    %244 = vmatprep.subr.bf16.mxu0 0
    %245 = vmatpush2.bf16.msra.mxu0 0
    %246 = vmatprep.subr.bf16.mxu0 0
    %247 = vmatpush2.bf16.msra.mxu0 0
    %248 = vmatprep.subr.bf16.mxu0 0
    %249 = vmatpush2.bf16.msra.mxu0 0
    %250 = vmatprep.subr.bf16.mxu0 0
    %251 = vmatpush2.bf16.msra.mxu0 0
    %252 = vmatprep.subr.bf16.mxu0 0
    %253 = vmatpush2.bf16.msra.mxu0 0
    %254 = vmatprep.subr.bf16.mxu0 0
    %255 = vmatpush2.bf16.msra.mxu0 0
    %256 = vmatprep.subr.bf16.mxu0 0
    %257 = vmatpush2.bf16.msra.mxu0 0
    %258 = vmatprep.subr.bf16.mxu0 0
    %259 = vmatpush2.bf16.msra.mxu0 0
    %260 = vmatprep.mubr.bf16.mxu0 0
    %261 = vmatmul.mubr.bf16.gmra.mxu0 %v226
    %v262 = vpop.f32.mrf.mxu0
    %v263 = vadd.f32 0.0, %v262
    %v264 = vpop.f32.mrf.mxu0
    %v265 = vpop.f32.mrf.mxu0
    %v266 = vadd.f32 0.0, %v265
    %v267 = vpop.f32.mrf.mxu0
    %268 = vdwg.mxu0
    %v273 = vunpack.c.l.b16 %v99
    %v274 = vunpack.c.l.b16 %v100
    %v275 = vunpack.c.l.b16 %v101
    %v276 = vunpack.c.l.b16 %v102
    %v277 = vpack.c.b16 %v274, %v273
    %v278 = vpack.c.b16 %v276, %v275
    %281 = vmatprep.subr.bf16.mxu0 0
    %282 = vmatpush1.bf16.msra.mxu0 0
    %283 = vmatprep.subr.bf16.mxu0 0
    %284 = vmatpush1.bf16.msra.mxu0 0
    %285 = vmatprep.subr.bf16.mxu0 0
    %286 = vmatpush1.bf16.msra.mxu0 0
    %287 = vmatprep.subr.bf16.mxu0 0
    %288 = vmatpush1.bf16.msra.mxu0 0
    %289 = vmatprep.subr.bf16.mxu0 0
    %290 = vmatpush1.bf16.msra.mxu0 0
    %291 = vmatprep.subr.bf16.mxu0 0
    %292 = vmatpush1.bf16.msra.mxu0 0
    %293 = vmatprep.subr.bf16.mxu0 0
    %294 = vmatpush1.bf16.msra.mxu0 %v278
    %295 = vmatprep.subr.bf16.mxu0 0
    %296 = vmatpush1.bf16.msra.mxu0 %v277
    %297 = vmatprep.subr.bf16.mxu0 0
    %298 = vmatpush2.bf16.msra.mxu0 0
    %299 = vmatprep.subr.bf16.mxu0 0
    %300 = vmatpush2.bf16.msra.mxu0 0
    %301 = vmatprep.subr.bf16.mxu0 0
    %302 = vmatpush2.bf16.msra.mxu0 0
    %303 = vmatprep.subr.bf16.mxu0 0
    %304 = vmatpush2.bf16.msra.mxu0 0
    %305 = vmatprep.subr.bf16.mxu0 0
    %306 = vmatpush2.bf16.msra.mxu0 0
    %307 = vmatprep.subr.bf16.mxu0 0
    %308 = vmatpush2.bf16.msra.mxu0 0
    %309 = vmatprep.subr.bf16.mxu0 0
    %310 = vmatpush2.bf16.msra.mxu0 0
    %311 = vmatprep.subr.bf16.mxu0 0
    %312 = vmatpush2.bf16.msra.mxu0 0
    %313 = vmatprep.mubr.bf16.mxu0 0
    %314 = vmatmul.mubr.bf16.gmra.mxu0 %v226
    %v315 = vpop.f32.mrf.mxu0
    %v316 = vadd.f32 0.0, %v315
    %v317 = vpop.f32.mrf.mxu0
    %v318 = vpop.f32.mrf.mxu0
    %v319 = vadd.f32 0.0, %v318
    %v320 = vpop.f32.mrf.mxu0
    %321 = vdwg.mxu0
    %v326 = vunpack.c.l.b16 %v103
    %v327 = vunpack.c.l.b16 %v104
    %v328 = vunpack.c.l.b16 %v105
    %v329 = vunpack.c.l.b16 %v106
    %v330 = vpack.c.b16 %v327, %v326
    %v331 = vpack.c.b16 %v329, %v328
    %334 = vmatprep.subr.bf16.mxu0 0
    %335 = vmatpush1.bf16.msra.mxu0 0
    %336 = vmatprep.subr.bf16.mxu0 0
    %337 = vmatpush1.bf16.msra.mxu0 0
    %338 = vmatprep.subr.bf16.mxu0 0
    %339 = vmatpush1.bf16.msra.mxu0 0
    %340 = vmatprep.subr.bf16.mxu0 0
    %341 = vmatpush1.bf16.msra.mxu0 0
    %342 = vmatprep.subr.bf16.mxu0 0
    %343 = vmatpush1.bf16.msra.mxu0 0
    %344 = vmatprep.subr.bf16.mxu0 0
    %345 = vmatpush1.bf16.msra.mxu0 0
    %346 = vmatprep.subr.bf16.mxu0 0
    %347 = vmatpush1.bf16.msra.mxu0 %v331
    %348 = vmatprep.subr.bf16.mxu0 0
    %349 = vmatpush1.bf16.msra.mxu0 %v330
    %350 = vmatprep.subr.bf16.mxu0 0
    %351 = vmatpush2.bf16.msra.mxu0 0
    %352 = vmatprep.subr.bf16.mxu0 0
    %353 = vmatpush2.bf16.msra.mxu0 0
    %354 = vmatprep.subr.bf16.mxu0 0
    %355 = vmatpush2.bf16.msra.mxu0 0
    %356 = vmatprep.subr.bf16.mxu0 0
    %357 = vmatpush2.bf16.msra.mxu0 0
    %358 = vmatprep.subr.bf16.mxu0 0
    %359 = vmatpush2.bf16.msra.mxu0 0
    %360 = vmatprep.subr.bf16.mxu0 0
    %361 = vmatpush2.bf16.msra.mxu0 0
    %362 = vmatprep.subr.bf16.mxu0 0
    %363 = vmatpush2.bf16.msra.mxu0 0
    %364 = vmatprep.subr.bf16.mxu0 0
    %365 = vmatpush2.bf16.msra.mxu0 0
    %366 = vmatprep.mubr.bf16.mxu0 0
    %367 = vmatmul.mubr.bf16.gmra.mxu0 %v226
    %v368 = vpop.f32.mrf.mxu0
    %v369 = vadd.f32 0.0, %v368
    %v370 = vpop.f32.mrf.mxu0
    %v371 = vpop.f32.mrf.mxu0
    %v372 = vadd.f32 0.0, %v371
    %v373 = vpop.f32.mrf.mxu0
    %374 = vdwg.mxu0
    %v375 = vpack.c.bf16 %v263, %v263
    %v376 = vpack.c.bf16 %v266, %v266
    %v377 = vpack.c.bf16 %v316, %v316
    %v378 = vpack.c.bf16 %v319, %v319
    %v379 = vpack.c.bf16 %v369, %v369
    %v380 = vpack.c.bf16 %v372, %v372
    %v382 = vsel %vm180, %v375, 0
    %v385 = vsel %vm180, %v377, 0
    %387 = vmatprep.subr.bf16.mxu0 0
    %388 = vmatpush1.bf16.xpose.msra.mxu0 0
    %389 = vmatprep.subr.bf16.mxu0 0
    %390 = vmatpush1.bf16.xpose.msra.mxu0 0
    %391 = vmatprep.subr.bf16.mxu0 0
    %392 = vmatpush1.bf16.xpose.msra.mxu0 0
    %393 = vmatprep.subr.bf16.mxu0 0
    %394 = vmatpush1.bf16.xpose.msra.mxu0 0
    %395 = vmatprep.subr.bf16.mxu0 0
    %396 = vmatpush1.bf16.xpose.msra.mxu0 0
    %397 = vmatprep.subr.bf16.mxu0 0
    %398 = vmatpush1.bf16.xpose.msra.mxu0 0
    %399 = vmatprep.subr.bf16.mxu0 0
    %400 = vmatpush1.bf16.xpose.msra.mxu0 0
    %401 = vmatprep.subr.bf16.mxu0 0
    %402 = vmatpush1.bf16.xpose.msra.mxu0 %v385
    %403 = vmatprep.subr.bf16.mxu0 0
    %404 = vmatpush2.bf16.xpose.msra.mxu0 0
    %405 = vmatprep.subr.bf16.mxu0 0
    %406 = vmatpush2.bf16.xpose.msra.mxu0 0
    %407 = vmatprep.subr.bf16.mxu0 0
    %408 = vmatpush2.bf16.xpose.msra.mxu0 0
    %409 = vmatprep.subr.bf16.mxu0 0
    %410 = vmatpush2.bf16.xpose.msra.mxu0 0
    %411 = vmatprep.subr.bf16.mxu0 0
    %412 = vmatpush2.bf16.xpose.msra.mxu0 0
    %413 = vmatprep.subr.bf16.mxu0 0
    %414 = vmatpush2.bf16.xpose.msra.mxu0 0
    %415 = vmatprep.subr.bf16.mxu0 0
    %416 = vmatpush2.bf16.xpose.msra.mxu0 0
    %417 = vmatprep.subr.bf16.mxu0 0
    %418 = vmatpush2.bf16.xpose.msra.mxu0 0
    %419 = vmatprep.mubr.bf16.mxu0 0
    %420 = vmatmul.mubr.bf16.gmra.mxu0 %v382
    %v421 = vpop.f32.mrf.mxu0
    %v422 = vadd.f32 0.0, %v421
    %v423 = vpop.f32.mrf.mxu0
    %v424 = vpop.f32.mrf.mxu0
    %v425 = vpop.f32.mrf.mxu0
    %426 = vdwg.mxu0
    %v428 = vsel %vm180, %v376, 0
    %v431 = vsel %vm180, %v378, 0
    %433 = vmatprep.subr.bf16.mxu0 0
    %434 = vmatpush1.bf16.xpose.msra.mxu0 0
    %435 = vmatprep.subr.bf16.mxu0 0
    %436 = vmatpush1.bf16.xpose.msra.mxu0 0
    %437 = vmatprep.subr.bf16.mxu0 0
    %438 = vmatpush1.bf16.xpose.msra.mxu0 0
    %439 = vmatprep.subr.bf16.mxu0 0
    %440 = vmatpush1.bf16.xpose.msra.mxu0 0
    %441 = vmatprep.subr.bf16.mxu0 0
    %442 = vmatpush1.bf16.xpose.msra.mxu0 0
    %443 = vmatprep.subr.bf16.mxu0 0
    %444 = vmatpush1.bf16.xpose.msra.mxu0 0
    %445 = vmatprep.subr.bf16.mxu0 0
    %446 = vmatpush1.bf16.xpose.msra.mxu0 0
    %447 = vmatprep.subr.bf16.mxu0 0
    %448 = vmatpush1.bf16.xpose.msra.mxu0 %v431
    %449 = vmatprep.subr.bf16.mxu0 0
    %450 = vmatpush2.bf16.xpose.msra.mxu0 0
    %451 = vmatprep.subr.bf16.mxu0 0
    %452 = vmatpush2.bf16.xpose.msra.mxu0 0
    %453 = vmatprep.subr.bf16.mxu0 0
    %454 = vmatpush2.bf16.xpose.msra.mxu0 0
    %455 = vmatprep.subr.bf16.mxu0 0
    %456 = vmatpush2.bf16.xpose.msra.mxu0 0
    %457 = vmatprep.subr.bf16.mxu0 0
    %458 = vmatpush2.bf16.xpose.msra.mxu0 0
    %459 = vmatprep.subr.bf16.mxu0 0
    %460 = vmatpush2.bf16.xpose.msra.mxu0 0
    %461 = vmatprep.subr.bf16.mxu0 0
    %462 = vmatpush2.bf16.xpose.msra.mxu0 0
    %463 = vmatprep.subr.bf16.mxu0 0
    %464 = vmatpush2.bf16.xpose.msra.mxu0 0
    %465 = vmatprep.mubr.bf16.mxu0 0
    %466 = vmatmul.mubr.bf16.gmra.mxu0 %v428
    %v467 = vpop.f32.mrf.mxu0
    %v468 = vadd.f32 0.0, %v467
    %v469 = vpop.f32.mrf.mxu0
    %v470 = vpop.f32.mrf.mxu0
    %v471 = vpop.f32.mrf.mxu0
    %472 = vdwg.mxu0
    %v473 = vmul.f32 %v422, 0.17677669
    %v474 = vmul.f32 %v468, 0.17677669
    %v475 = vsel %vm179, %v473, -1e+30
    %v476 = vsel %vm179, %v474, -1e+30
    %vm477 = vcmask 64512
    %v478 = vsel %vm477, %v475, -inf
    %479 = vmax.xlane.f32.xlu0 %v478
    %v480 = vpop.xlane.xlu0 %479
    %v481 = vsel %vm477, %v476, -inf
    %482 = vmax.xlane.f32.xlu0 %v481
    %v483 = vpop.xlane.xlu0 %482
    %v484 = vsub.f32 %v475, %v480
    %v485 = vsub.f32 %v476, %v483
    %v486 = vmul.f32 %v484, 1.442695
    %v487 = vpow.pop %v486
    %v488 = vmul.f32 %v485, 1.442695
    %v489 = vpow.pop %v488
    %v490 = vsel %vm477, %v487, 0.0
    %491 = vadd.xlane.f32.xlu0 %v490
    %v492 = vpop.xlane.xlu0 %491
    %v493 = vsel %vm477, %v489, 0.0
    %494 = vadd.xlane.f32.xlu0 %v493
    %v495 = vpop.xlane.xlu0 %494
    %v496 = vrcp.pop %v492
    %v497 = vrcp.pop %v495
    %v498 = vmul.f32 %v487, %v496
    %v499 = vmul.f32 %v489, %v497
    %v500 = vpack.c.bf16 %v498, %v498
    %v501 = vpack.c.bf16 %v499, %v499
    %v503 = vsel %vm477, %v500, 0
    %vm505 = vcmask 1043456
    %v507 = vsel %vm505, %v379, 0
    %509 = vmatprep.subr.bf16.mxu0 0
    %510 = vmatpush1.bf16.msra.mxu0 0
    %511 = vmatprep.subr.bf16.mxu0 0
    %512 = vmatpush1.bf16.msra.mxu0 0
    %513 = vmatprep.subr.bf16.mxu0 0
    %514 = vmatpush1.bf16.msra.mxu0 0
    %515 = vmatprep.subr.bf16.mxu0 0
    %516 = vmatpush1.bf16.msra.mxu0 0
    %517 = vmatprep.subr.bf16.mxu0 0
    %518 = vmatpush1.bf16.msra.mxu0 0
    %519 = vmatprep.subr.bf16.mxu0 0
    %520 = vmatpush1.bf16.msra.mxu0 0
    %521 = vmatprep.subr.bf16.mxu0 0
    %522 = vmatpush1.bf16.msra.mxu0 0
    %523 = vmatprep.subr.bf16.mxu0 0
    %524 = vmatpush1.bf16.msra.mxu0 %v507
    %525 = vmatprep.subr.bf16.mxu0 0
    %526 = vmatpush2.bf16.msra.mxu0 0
    %527 = vmatprep.subr.bf16.mxu0 0
    %528 = vmatpush2.bf16.msra.mxu0 0
    %529 = vmatprep.subr.bf16.mxu0 0
    %530 = vmatpush2.bf16.msra.mxu0 0
    %531 = vmatprep.subr.bf16.mxu0 0
    %532 = vmatpush2.bf16.msra.mxu0 0
    %533 = vmatprep.subr.bf16.mxu0 0
    %534 = vmatpush2.bf16.msra.mxu0 0
    %535 = vmatprep.subr.bf16.mxu0 0
    %536 = vmatpush2.bf16.msra.mxu0 0
    %537 = vmatprep.subr.bf16.mxu0 0
    %538 = vmatpush2.bf16.msra.mxu0 0
    %539 = vmatprep.subr.bf16.mxu0 0
    %540 = vmatpush2.bf16.msra.mxu0 0
    %541 = vmatprep.mubr.bf16.mxu0 0
    %542 = vmatmul.mubr.bf16.gmra.mxu0 %v503
    %v543 = vpop.f32.mrf.mxu0
    %v544 = vadd.f32 0.0, %v543
    %v545 = vpop.f32.mrf.mxu0
    %v546 = vpop.f32.mrf.mxu0
    %v547 = vpop.f32.mrf.mxu0
    %548 = vdwg.mxu0
    %v550 = vsel %vm477, %v501, 0
    %v553 = vsel %vm505, %v380, 0
    %555 = vmatprep.subr.bf16.mxu0 0
    %556 = vmatpush1.bf16.msra.mxu0 0
    %557 = vmatprep.subr.bf16.mxu0 0
    %558 = vmatpush1.bf16.msra.mxu0 0
    %559 = vmatprep.subr.bf16.mxu0 0
    %560 = vmatpush1.bf16.msra.mxu0 0
    %561 = vmatprep.subr.bf16.mxu0 0
    %562 = vmatpush1.bf16.msra.mxu0 0
    %563 = vmatprep.subr.bf16.mxu0 0
    %564 = vmatpush1.bf16.msra.mxu0 0
    %565 = vmatprep.subr.bf16.mxu0 0
    %566 = vmatpush1.bf16.msra.mxu0 0
    %567 = vmatprep.subr.bf16.mxu0 0
    %568 = vmatpush1.bf16.msra.mxu0 0
    %569 = vmatprep.subr.bf16.mxu0 0
    %570 = vmatpush1.bf16.msra.mxu0 %v553
    %571 = vmatprep.subr.bf16.mxu0 0
    %572 = vmatpush2.bf16.msra.mxu0 0
    %573 = vmatprep.subr.bf16.mxu0 0
    %574 = vmatpush2.bf16.msra.mxu0 0
    %575 = vmatprep.subr.bf16.mxu0 0
    %576 = vmatpush2.bf16.msra.mxu0 0
    %577 = vmatprep.subr.bf16.mxu0 0
    %578 = vmatpush2.bf16.msra.mxu0 0
    %579 = vmatprep.subr.bf16.mxu0 0
    %580 = vmatpush2.bf16.msra.mxu0 0
    %581 = vmatprep.subr.bf16.mxu0 0
    %582 = vmatpush2.bf16.msra.mxu0 0
    %583 = vmatprep.subr.bf16.mxu0 0
    %584 = vmatpush2.bf16.msra.mxu0 0
    %585 = vmatprep.subr.bf16.mxu0 0
    %586 = vmatpush2.bf16.msra.mxu0 0
    %587 = vmatprep.mubr.bf16.mxu0 0
    %588 = vmatmul.mubr.bf16.gmra.mxu0 %v550
    %v589 = vpop.f32.mrf.mxu0
    %v590 = vadd.f32 0.0, %v589
    %v591 = vpop.f32.mrf.mxu0
    %v592 = vpop.f32.mrf.mxu0
    %v593 = vpop.f32.mrf.mxu0
    %594 = vdwg.mxu0
    %v595 = vpack.c.bf16 %v590, %v544
    %v600 = vunpack.c.l.b16 %v107
    %v601 = vunpack.c.l.b16 %v108
    %v602 = vunpack.c.l.b16 %v109
    %v603 = vunpack.c.l.b16 %v110
    %v604 = vpack.c.b16 %v601, %v600
    %v605 = vpack.c.b16 %v603, %v602
    %v609 = vsel %vm180, %v595, 0
    %611 = vmatprep.subr.bf16.mxu0 0
    %612 = vmatpush1.bf16.msra.mxu0 0
    %613 = vmatprep.subr.bf16.mxu0 0
    %614 = vmatpush1.bf16.msra.mxu0 0
    %615 = vmatprep.subr.bf16.mxu0 0
    %616 = vmatpush1.bf16.msra.mxu0 0
    %617 = vmatprep.subr.bf16.mxu0 0
    %618 = vmatpush1.bf16.msra.mxu0 0
    %619 = vmatprep.subr.bf16.mxu0 0
    %620 = vmatpush1.bf16.msra.mxu0 0
    %621 = vmatprep.subr.bf16.mxu0 0
    %622 = vmatpush1.bf16.msra.mxu0 0
    %623 = vmatprep.subr.bf16.mxu0 0
    %624 = vmatpush1.bf16.msra.mxu0 %v605
    %625 = vmatprep.subr.bf16.mxu0 0
    %626 = vmatpush1.bf16.msra.mxu0 %v604
    %627 = vmatprep.subr.bf16.mxu0 0
    %628 = vmatpush2.bf16.msra.mxu0 0
    %629 = vmatprep.subr.bf16.mxu0 0
    %630 = vmatpush2.bf16.msra.mxu0 0
    %631 = vmatprep.subr.bf16.mxu0 0
    %632 = vmatpush2.bf16.msra.mxu0 0
    %633 = vmatprep.subr.bf16.mxu0 0
    %634 = vmatpush2.bf16.msra.mxu0 0
    %635 = vmatprep.subr.bf16.mxu0 0
    %636 = vmatpush2.bf16.msra.mxu0 0
    %637 = vmatprep.subr.bf16.mxu0 0
    %638 = vmatpush2.bf16.msra.mxu0 0
    %639 = vmatprep.subr.bf16.mxu0 0
    %640 = vmatpush2.bf16.msra.mxu0 0
    %641 = vmatprep.subr.bf16.mxu0 0
    %642 = vmatpush2.bf16.msra.mxu0 0
    %643 = vmatprep.mubr.bf16.mxu0 0
    %644 = vmatmul.mubr.bf16.gmra.mxu0 %v609
    %v645 = vpop.f32.mrf.mxu0
    %v646 = vadd.f32 0.0, %v645
    %v647 = vpop.f32.mrf.mxu0
    %v648 = vpop.f32.mrf.mxu0
    %v649 = vadd.f32 0.0, %v648
    %v650 = vpop.f32.mrf.mxu0
    %651 = vdwg.mxu0
    %v652 = vadd.f32 %v93, %v646
    %v653 = vadd.f32 %v94, %v649
    %v654 = vsel %vm180, %v652, 0.0
    %655 = vadd.xlane.f32.xlu0 %v654
    %v656 = vpop.xlane.xlu0 %655
    %v657 = vsel %vm180, %v653, 0.0
    %658 = vadd.xlane.f32.xlu0 %v657
    %v659 = vpop.xlane.xlu0 %658
    %v660 = vmul.f32 %v656, %v187
    %v661 = vmul.f32 %v659, %v187
    %v662 = vsub.f32 %v652, %v660
    %v663 = vsub.f32 %v653, %v661
    %v664 = vmul.f32 %v662, %v662
    %v665 = vmul.f32 %v663, %v663
    %v666 = vsel %vm180, %v664, 0.0
    %667 = vadd.xlane.f32.xlu0 %v666
    %v668 = vpop.xlane.xlu0 %667
    %v669 = vsel %vm180, %v665, 0.0
    %670 = vadd.xlane.f32.xlu0 %v669
    %v671 = vpop.xlane.xlu0 %670
    %v672 = vmul.f32 %v668, %v187
    %v673 = vmul.f32 %v671, %v187
    %v674 = vadd.f32 %v672, 1e-05
    %v675 = vadd.f32 %v673, 1e-05
    %v676 = vrsqrt.pop %v674
    %v677 = vrsqrt.pop %v675
    %v678 = vmul.f32 %v662, %v676
    %v679 = vmul.f32 %v663, %v677
    %v680 = vmul.f32 %v678, %v150
    %v681 = vmul.f32 %v679, %v150
    %v682 = vadd.f32 %v680, %v157
    %v683 = vadd.f32 %v681, %v157
    %v684 = vpack.c.bf16 %v683, %v682
    %v689 = vunpack.c.l.b16 %v111
    %v690 = vunpack.c.l.b16 %v112
    %v691 = vunpack.c.l.b16 %v113
    %v692 = vunpack.c.l.b16 %v114
    %v693 = vpack.c.b16 %v690, %v689
    %v694 = vpack.c.b16 %v692, %v691
    %v698 = vsel %vm180, %v684, 0
    %700 = vmatprep.subr.bf16.mxu0 0
    %701 = vmatpush1.bf16.msra.mxu0 0
    %702 = vmatprep.subr.bf16.mxu0 0
    %703 = vmatpush1.bf16.msra.mxu0 0
    %704 = vmatprep.subr.bf16.mxu0 0
    %705 = vmatpush1.bf16.msra.mxu0 0
    %706 = vmatprep.subr.bf16.mxu0 0
    %707 = vmatpush1.bf16.msra.mxu0 0
    %708 = vmatprep.subr.bf16.mxu0 0
    %709 = vmatpush1.bf16.msra.mxu0 0
    %710 = vmatprep.subr.bf16.mxu0 0
    %711 = vmatpush1.bf16.msra.mxu0 0
    %712 = vmatprep.subr.bf16.mxu0 0
    %713 = vmatpush1.bf16.msra.mxu0 %v694
    %714 = vmatprep.subr.bf16.mxu0 0
    %715 = vmatpush1.bf16.msra.mxu0 %v693
    %716 = vmatprep.subr.bf16.mxu0 0
    %717 = vmatpush2.bf16.msra.mxu0 0
    %718 = vmatprep.subr.bf16.mxu0 0
    %719 = vmatpush2.bf16.msra.mxu0 0
    %720 = vmatprep.subr.bf16.mxu0 0
    %721 = vmatpush2.bf16.msra.mxu0 0
    %722 = vmatprep.subr.bf16.mxu0 0
    %723 = vmatpush2.bf16.msra.mxu0 0
    %724 = vmatprep.subr.bf16.mxu0 0
    %725 = vmatpush2.bf16.msra.mxu0 0
    %726 = vmatprep.subr.bf16.mxu0 0
    %727 = vmatpush2.bf16.msra.mxu0 0
    %728 = vmatprep.subr.bf16.mxu0 0
    %729 = vmatpush2.bf16.msra.mxu0 0
    %730 = vmatprep.subr.bf16.mxu0 0
    %731 = vmatpush2.bf16.msra.mxu0 0
    %732 = vmatprep.mubr.bf16.mxu0 0
    %733 = vmatmul.mubr.bf16.gmra.mxu0 %v698
    %v734 = vpop.f32.mrf.mxu0
    %v735 = vadd.f32 %v164, %v734
    %v736 = vpop.f32.mrf.mxu0
    %v737 = vpop.f32.mrf.mxu0
    %v738 = vadd.f32 %v164, %v737
    %v739 = vpop.f32.mrf.mxu0
    %740 = vdwg.mxu0
    %v741 = vmul.f32 %v735, %v735
    %v742 = vmul.f32 %v738, %v738
    %v743 = vmul.f32 %v735, %v741
    %v744 = vmul.f32 %v738, %v742
    %v745 = vmul.f32 %v743, 0.044715
    %v746 = vmul.f32 %v744, 0.044715
    %v747 = vadd.f32 %v735, %v745
    %v748 = vadd.f32 %v738, %v746
    %v749 = vmul.f32 %v747, 0.7978846
    %v750 = vmul.f32 %v748, 0.7978846
    %v751 = vtanh.pop %v749
    %v752 = vtanh.pop %v750
    %v753 = vadd.f32 %v751, 1.0
    %v754 = vadd.f32 %v752, 1.0
    %v755 = vmul.f32 %v753, 0.5
    %v756 = vmul.f32 %v754, 0.5
    %v757 = vmul.f32 %v735, %v755
    %v758 = vmul.f32 %v738, %v756
    %v759 = vpack.c.bf16 %v758, %v757
    %v776 = vunpack.c.l.b16 %v115
    %v777 = vunpack.c.l.b16 %v116
    %v778 = vunpack.c.l.b16 %v117
    %v779 = vunpack.c.l.b16 %v118
    %v780 = vunpack.c.l.b16 %v119
    %v781 = vunpack.c.l.b16 %v120
    %v782 = vunpack.c.l.b16 %v121
    %v783 = vunpack.c.l.b16 %v122
    %v784 = vunpack.c.l.b16 %v123
    %v785 = vunpack.c.l.b16 %v124
    %v786 = vunpack.c.l.b16 %v125
    %v787 = vunpack.c.l.b16 %v126
    %v788 = vunpack.c.l.b16 %v127
    %v789 = vunpack.c.l.b16 %v128
    %v790 = vunpack.c.l.b16 %v129
    %v791 = vunpack.c.l.b16 %v130
    %v792 = vpack.c.b16 %v777, %v776
    %v793 = vpack.c.b16 %v779, %v778
    %v794 = vpack.c.b16 %v781, %v780
    %v795 = vpack.c.b16 %v783, %v782
    %v796 = vpack.c.b16 %v785, %v784
    %v797 = vpack.c.b16 %v787, %v786
    %v798 = vpack.c.b16 %v789, %v788
    %v799 = vpack.c.b16 %v791, %v790
    %808 = vmatprep.subr.bf16.mxu0 0
    %809 = vmatpush1.bf16.msra.mxu0 %v799
    %810 = vmatprep.subr.bf16.mxu0 0
    %811 = vmatpush1.bf16.msra.mxu0 %v798
    %812 = vmatprep.subr.bf16.mxu0 0
    %813 = vmatpush1.bf16.msra.mxu0 %v797
    %814 = vmatprep.subr.bf16.mxu0 0
    %815 = vmatpush1.bf16.msra.mxu0 %v796
    %816 = vmatprep.subr.bf16.mxu0 0
    %817 = vmatpush1.bf16.msra.mxu0 %v795
    %818 = vmatprep.subr.bf16.mxu0 0
    %819 = vmatpush1.bf16.msra.mxu0 %v794
    %820 = vmatprep.subr.bf16.mxu0 0
    %821 = vmatpush1.bf16.msra.mxu0 %v793
    %822 = vmatprep.subr.bf16.mxu0 0
    %823 = vmatpush1.bf16.msra.mxu0 %v792
    %824 = vmatprep.subr.bf16.mxu0 0
    %825 = vmatpush2.bf16.msra.mxu0 0
    %826 = vmatprep.subr.bf16.mxu0 0
    %827 = vmatpush2.bf16.msra.mxu0 0
    %828 = vmatprep.subr.bf16.mxu0 0
    %829 = vmatpush2.bf16.msra.mxu0 0
    %830 = vmatprep.subr.bf16.mxu0 0
    %831 = vmatpush2.bf16.msra.mxu0 0
    %832 = vmatprep.subr.bf16.mxu0 0
    %833 = vmatpush2.bf16.msra.mxu0 0
    %834 = vmatprep.subr.bf16.mxu0 0
    %835 = vmatpush2.bf16.msra.mxu0 0
    %836 = vmatprep.subr.bf16.mxu0 0
    %837 = vmatpush2.bf16.msra.mxu0 0
    %838 = vmatprep.subr.bf16.mxu0 0
    %839 = vmatpush2.bf16.msra.mxu0 0
    %840 = vmatprep.mubr.bf16.mxu0 0
    %841 = vmatmul.mubr.bf16.gmra.mxu0 %v759
    %v842 = vpop.f32.mrf.mxu0
    %v843 = vadd.f32 0.0, %v842
    %v844 = vpop.f32.mrf.mxu0
    %v845 = vpop.f32.mrf.mxu0
    %v846 = vadd.f32 0.0, %v845
    %v847 = vpop.f32.mrf.mxu0
    %848 = vdwg.mxu0
    %v849 = vadd.f32 %v652, %v843
    %v850 = vadd.f32 %v653, %v846
    %v851 = vadd.f32 %v849, %v171
    %v852 = vadd.f32 %v850, %v171
    %v853 = vsel %vm180, %v851, 0.0
    %854 = vadd.xlane.f32.xlu0 %v853
    %v855 = vpop.xlane.xlu0 %854
    %v856 = vsel %vm180, %v852, 0.0
    %857 = vadd.xlane.f32.xlu0 %v856
    %v858 = vpop.xlane.xlu0 %857
    %v859 = vmul.f32 %v855, %v187
    %v860 = vmul.f32 %v858, %v187
    %v861 = vsub.f32 %v851, %v859
    %v862 = vsub.f32 %v852, %v860
    %v863 = vmul.f32 %v861, %v861
    %v864 = vmul.f32 %v862, %v862
    %v865 = vsel %vm180, %v863, 0.0
    %866 = vadd.xlane.f32.xlu0 %v865
    %v867 = vpop.xlane.xlu0 %866
    %v868 = vsel %vm180, %v864, 0.0
    %869 = vadd.xlane.f32.xlu0 %v868
    %v870 = vpop.xlane.xlu0 %869
    %v871 = vmul.f32 %v867, %v187
    %v872 = vmul.f32 %v870, %v187
    %v873 = vadd.f32 %v871, 1e-05
    %v874 = vadd.f32 %v872, 1e-05
    %v875 = vrsqrt.pop %v873
    %v876 = vrsqrt.pop %v874
    %v877 = vmul.f32 %v861, %v875
    %v878 = vmul.f32 %v862, %v876
    %v879 = vmul.f32 %v877, %v136
    %v880 = vmul.f32 %v878, %v136
    %v881 = vadd.f32 %v879, %v143
    %v882 = vadd.f32 %v880, %v143
    %v883 = vpack.c.bf16 %v882, %v881
    %v885 = vsel %vm180, %v883, 0
    %887 = vmatprep.subr.bf16.mxu0 0
    %888 = vmatpush1.bf16.msra.mxu0 0
    %889 = vmatprep.subr.bf16.mxu0 0
    %890 = vmatpush1.bf16.msra.mxu0 0
    %891 = vmatprep.subr.bf16.mxu0 0
    %892 = vmatpush1.bf16.msra.mxu0 0
    %893 = vmatprep.subr.bf16.mxu0 0
    %894 = vmatpush1.bf16.msra.mxu0 0
    %895 = vmatprep.subr.bf16.mxu0 0
    %896 = vmatpush1.bf16.msra.mxu0 0
    %897 = vmatprep.subr.bf16.mxu0 0
    %898 = vmatpush1.bf16.msra.mxu0 0
    %899 = vmatprep.subr.bf16.mxu0 0
    %900 = vmatpush1.bf16.msra.mxu0 %v222
    %901 = vmatprep.subr.bf16.mxu0 0
    %902 = vmatpush1.bf16.msra.mxu0 %v221
    %903 = vmatprep.subr.bf16.mxu0 0
    %904 = vmatpush2.bf16.msra.mxu0 0
    %905 = vmatprep.subr.bf16.mxu0 0
    %906 = vmatpush2.bf16.msra.mxu0 0
    %907 = vmatprep.subr.bf16.mxu0 0
    %908 = vmatpush2.bf16.msra.mxu0 0
    %909 = vmatprep.subr.bf16.mxu0 0
    %910 = vmatpush2.bf16.msra.mxu0 0
    %911 = vmatprep.subr.bf16.mxu0 0
    %912 = vmatpush2.bf16.msra.mxu0 0
    %913 = vmatprep.subr.bf16.mxu0 0
    %914 = vmatpush2.bf16.msra.mxu0 0
    %915 = vmatprep.subr.bf16.mxu0 0
    %916 = vmatpush2.bf16.msra.mxu0 0
    %917 = vmatprep.subr.bf16.mxu0 0
    %918 = vmatpush2.bf16.msra.mxu0 0
    %919 = vmatprep.mubr.bf16.mxu0 0
    %920 = vmatmul.mubr.bf16.gmra.mxu0 %v885
    %v921 = vpop.f32.mrf.mxu0
    %v922 = vadd.f32 0.0, %v921
    %v923 = vpop.f32.mrf.mxu0
    %v924 = vpop.f32.mrf.mxu0
    %v925 = vadd.f32 0.0, %v924
    %v926 = vpop.f32.mrf.mxu0
    %927 = vdwg.mxu0
    %928 = vmatprep.subr.bf16.mxu0 0
    %929 = vmatpush1.bf16.msra.mxu0 0
    %930 = vmatprep.subr.bf16.mxu0 0
    %931 = vmatpush1.bf16.msra.mxu0 0
    %932 = vmatprep.subr.bf16.mxu0 0
    %933 = vmatpush1.bf16.msra.mxu0 0
    %934 = vmatprep.subr.bf16.mxu0 0
    %935 = vmatpush1.bf16.msra.mxu0 0
    %936 = vmatprep.subr.bf16.mxu0 0
    %937 = vmatpush1.bf16.msra.mxu0 0
    %938 = vmatprep.subr.bf16.mxu0 0
    %939 = vmatpush1.bf16.msra.mxu0 0
    %940 = vmatprep.subr.bf16.mxu0 0
    %941 = vmatpush1.bf16.msra.mxu0 %v278
    %942 = vmatprep.subr.bf16.mxu0 0
    %943 = vmatpush1.bf16.msra.mxu0 %v277
    %944 = vmatprep.subr.bf16.mxu0 0
    %945 = vmatpush2.bf16.msra.mxu0 0
    %946 = vmatprep.subr.bf16.mxu0 0
    %947 = vmatpush2.bf16.msra.mxu0 0
    %948 = vmatprep.subr.bf16.mxu0 0
    %949 = vmatpush2.bf16.msra.mxu0 0
    %950 = vmatprep.subr.bf16.mxu0 0
    %951 = vmatpush2.bf16.msra.mxu0 0
    %952 = vmatprep.subr.bf16.mxu0 0
    %953 = vmatpush2.bf16.msra.mxu0 0
    %954 = vmatprep.subr.bf16.mxu0 0
    %955 = vmatpush2.bf16.msra.mxu0 0
    %956 = vmatprep.subr.bf16.mxu0 0
    %957 = vmatpush2.bf16.msra.mxu0 0
    %958 = vmatprep.subr.bf16.mxu0 0
    %959 = vmatpush2.bf16.msra.mxu0 0
    %960 = vmatprep.mubr.bf16.mxu0 0
    %961 = vmatmul.mubr.bf16.gmra.mxu0 %v885
    %v962 = vpop.f32.mrf.mxu0
    %v963 = vadd.f32 0.0, %v962
    %v964 = vpop.f32.mrf.mxu0
    %v965 = vpop.f32.mrf.mxu0
    %v966 = vadd.f32 0.0, %v965
    %v967 = vpop.f32.mrf.mxu0
    %968 = vdwg.mxu0
    %969 = vmatprep.subr.bf16.mxu0 0
    %970 = vmatpush1.bf16.msra.mxu0 0
    %971 = vmatprep.subr.bf16.mxu0 0
    %972 = vmatpush1.bf16.msra.mxu0 0
    %973 = vmatprep.subr.bf16.mxu0 0
    %974 = vmatpush1.bf16.msra.mxu0 0
    %975 = vmatprep.subr.bf16.mxu0 0
    %976 = vmatpush1.bf16.msra.mxu0 0
    %977 = vmatprep.subr.bf16.mxu0 0
    %978 = vmatpush1.bf16.msra.mxu0 0
    %979 = vmatprep.subr.bf16.mxu0 0
    %980 = vmatpush1.bf16.msra.mxu0 0
    %981 = vmatprep.subr.bf16.mxu0 0
    %982 = vmatpush1.bf16.msra.mxu0 %v331
    %983 = vmatprep.subr.bf16.mxu0 0
    %984 = vmatpush1.bf16.msra.mxu0 %v330
    %985 = vmatprep.subr.bf16.mxu0 0
    %986 = vmatpush2.bf16.msra.mxu0 0
    %987 = vmatprep.subr.bf16.mxu0 0
    %988 = vmatpush2.bf16.msra.mxu0 0
    %989 = vmatprep.subr.bf16.mxu0 0
    %990 = vmatpush2.bf16.msra.mxu0 0
    %991 = vmatprep.subr.bf16.mxu0 0
    %992 = vmatpush2.bf16.msra.mxu0 0
    %993 = vmatprep.subr.bf16.mxu0 0
    %994 = vmatpush2.bf16.msra.mxu0 0
    %995 = vmatprep.subr.bf16.mxu0 0
    %996 = vmatpush2.bf16.msra.mxu0 0
    %997 = vmatprep.subr.bf16.mxu0 0
    %998 = vmatpush2.bf16.msra.mxu0 0
    %999 = vmatprep.subr.bf16.mxu0 0
    %1000 = vmatpush2.bf16.msra.mxu0 0
    %1001 = vmatprep.mubr.bf16.mxu0 0
    %1002 = vmatmul.mubr.bf16.gmra.mxu0 %v885
    %v1003 = vpop.f32.mrf.mxu0
    %v1004 = vadd.f32 0.0, %v1003
    %v1005 = vpop.f32.mrf.mxu0
    %v1006 = vpop.f32.mrf.mxu0
    %v1007 = vadd.f32 0.0, %v1006
    %v1008 = vpop.f32.mrf.mxu0
    %1009 = vdwg.mxu0
    %v1010 = vpack.c.bf16 %v922, %v922
    %v1011 = vpack.c.bf16 %v925, %v925
    %v1012 = vpack.c.bf16 %v963, %v963
    %v1013 = vpack.c.bf16 %v966, %v966
    %v1014 = vpack.c.bf16 %v1004, %v1004
    %v1015 = vpack.c.bf16 %v1007, %v1007
    %v1017 = vsel %vm180, %v1010, 0
    %v1020 = vsel %vm180, %v1012, 0
    %1022 = vmatprep.subr.bf16.mxu0 0
    %1023 = vmatpush1.bf16.xpose.msra.mxu0 0
    %1024 = vmatprep.subr.bf16.mxu0 0
    %1025 = vmatpush1.bf16.xpose.msra.mxu0 0
    %1026 = vmatprep.subr.bf16.mxu0 0
    %1027 = vmatpush1.bf16.xpose.msra.mxu0 0
    %1028 = vmatprep.subr.bf16.mxu0 0
    %1029 = vmatpush1.bf16.xpose.msra.mxu0 0
    %1030 = vmatprep.subr.bf16.mxu0 0
    %1031 = vmatpush1.bf16.xpose.msra.mxu0 0
    %1032 = vmatprep.subr.bf16.mxu0 0
    %1033 = vmatpush1.bf16.xpose.msra.mxu0 0
    %1034 = vmatprep.subr.bf16.mxu0 0
    %1035 = vmatpush1.bf16.xpose.msra.mxu0 0
    %1036 = vmatprep.subr.bf16.mxu0 0
    %1037 = vmatpush1.bf16.xpose.msra.mxu0 %v1020
    %1038 = vmatprep.subr.bf16.mxu0 0
    %1039 = vmatpush2.bf16.xpose.msra.mxu0 0
    %1040 = vmatprep.subr.bf16.mxu0 0
    %1041 = vmatpush2.bf16.xpose.msra.mxu0 0
    %1042 = vmatprep.subr.bf16.mxu0 0
    %1043 = vmatpush2.bf16.xpose.msra.mxu0 0
    %1044 = vmatprep.subr.bf16.mxu0 0
    %1045 = vmatpush2.bf16.xpose.msra.mxu0 0
    %1046 = vmatprep.subr.bf16.mxu0 0
    %1047 = vmatpush2.bf16.xpose.msra.mxu0 0
    %1048 = vmatprep.subr.bf16.mxu0 0
    %1049 = vmatpush2.bf16.xpose.msra.mxu0 0
    %1050 = vmatprep.subr.bf16.mxu0 0
    %1051 = vmatpush2.bf16.xpose.msra.mxu0 0
    %1052 = vmatprep.subr.bf16.mxu0 0
    %1053 = vmatpush2.bf16.xpose.msra.mxu0 0
    %1054 = vmatprep.mubr.bf16.mxu0 0
    %1055 = vmatmul.mubr.bf16.gmra.mxu0 %v1017
    %v1056 = vpop.f32.mrf.mxu0
    %v1057 = vadd.f32 0.0, %v1056
    %v1058 = vpop.f32.mrf.mxu0
    %v1059 = vpop.f32.mrf.mxu0
    %v1060 = vpop.f32.mrf.mxu0
    %1061 = vdwg.mxu0
    %v1063 = vsel %vm180, %v1011, 0
    %v1066 = vsel %vm180, %v1013, 0
    %1068 = vmatprep.subr.bf16.mxu0 0
    %1069 = vmatpush1.bf16.xpose.msra.mxu0 0
    %1070 = vmatprep.subr.bf16.mxu0 0
    %1071 = vmatpush1.bf16.xpose.msra.mxu0 0
    %1072 = vmatprep.subr.bf16.mxu0 0
    %1073 = vmatpush1.bf16.xpose.msra.mxu0 0
    %1074 = vmatprep.subr.bf16.mxu0 0
    %1075 = vmatpush1.bf16.xpose.msra.mxu0 0
    %1076 = vmatprep.subr.bf16.mxu0 0
    %1077 = vmatpush1.bf16.xpose.msra.mxu0 0
    %1078 = vmatprep.subr.bf16.mxu0 0
    %1079 = vmatpush1.bf16.xpose.msra.mxu0 0
    %1080 = vmatprep.subr.bf16.mxu0 0
    %1081 = vmatpush1.bf16.xpose.msra.mxu0 0
    %1082 = vmatprep.subr.bf16.mxu0 0
    %1083 = vmatpush1.bf16.xpose.msra.mxu0 %v1066
    %1084 = vmatprep.subr.bf16.mxu0 0
    %1085 = vmatpush2.bf16.xpose.msra.mxu0 0
    %1086 = vmatprep.subr.bf16.mxu0 0
    %1087 = vmatpush2.bf16.xpose.msra.mxu0 0
    %1088 = vmatprep.subr.bf16.mxu0 0
    %1089 = vmatpush2.bf16.xpose.msra.mxu0 0
    %1090 = vmatprep.subr.bf16.mxu0 0
    %1091 = vmatpush2.bf16.xpose.msra.mxu0 0
    %1092 = vmatprep.subr.bf16.mxu0 0
    %1093 = vmatpush2.bf16.xpose.msra.mxu0 0
    %1094 = vmatprep.subr.bf16.mxu0 0
    %1095 = vmatpush2.bf16.xpose.msra.mxu0 0
    %1096 = vmatprep.subr.bf16.mxu0 0
    %1097 = vmatpush2.bf16.xpose.msra.mxu0 0
    %1098 = vmatprep.subr.bf16.mxu0 0
    %1099 = vmatpush2.bf16.xpose.msra.mxu0 0
    %1100 = vmatprep.mubr.bf16.mxu0 0
    %1101 = vmatmul.mubr.bf16.gmra.mxu0 %v1063
    %v1102 = vpop.f32.mrf.mxu0
    %v1103 = vadd.f32 0.0, %v1102
    %v1104 = vpop.f32.mrf.mxu0
    %v1105 = vpop.f32.mrf.mxu0
    %v1106 = vpop.f32.mrf.mxu0
    %1107 = vdwg.mxu0
    %v1108 = vmul.f32 %v1057, 0.17677669
    %v1109 = vmul.f32 %v1103, 0.17677669
    %v1110 = vsel %vm179, %v1108, -1e+30
    %v1111 = vsel %vm179, %v1109, -1e+30
    %v1112 = vsel %vm477, %v1110, -inf
    %1113 = vmax.xlane.f32.xlu0 %v1112
    %v1114 = vpop.xlane.xlu0 %1113
    %v1115 = vsel %vm477, %v1111, -inf
    %1116 = vmax.xlane.f32.xlu0 %v1115
    %v1117 = vpop.xlane.xlu0 %1116
    %v1118 = vsub.f32 %v1110, %v1114
    %v1119 = vsub.f32 %v1111, %v1117
    %v1120 = vmul.f32 %v1118, 1.442695
    %v1121 = vpow.pop %v1120
    %v1122 = vmul.f32 %v1119, 1.442695
    %v1123 = vpow.pop %v1122
    %v1124 = vsel %vm477, %v1121, 0.0
    %1125 = vadd.xlane.f32.xlu0 %v1124
    %v1126 = vpop.xlane.xlu0 %1125
    %v1127 = vsel %vm477, %v1123, 0.0
    %1128 = vadd.xlane.f32.xlu0 %v1127
    %v1129 = vpop.xlane.xlu0 %1128
    %v1130 = vrcp.pop %v1126
    %v1131 = vrcp.pop %v1129
    %v1132 = vmul.f32 %v1121, %v1130
    %v1133 = vmul.f32 %v1123, %v1131
    %v1134 = vpack.c.bf16 %v1132, %v1132
    %v1135 = vpack.c.bf16 %v1133, %v1133
    %v1137 = vsel %vm477, %v1134, 0
    %v1140 = vsel %vm505, %v1014, 0
    %1142 = vmatprep.subr.bf16.mxu0 0
    %1143 = vmatpush1.bf16.msra.mxu0 0
    %1144 = vmatprep.subr.bf16.mxu0 0
    %1145 = vmatpush1.bf16.msra.mxu0 0
    %1146 = vmatprep.subr.bf16.mxu0 0
    %1147 = vmatpush1.bf16.msra.mxu0 0
    %1148 = vmatprep.subr.bf16.mxu0 0
    %1149 = vmatpush1.bf16.msra.mxu0 0
    %1150 = vmatprep.subr.bf16.mxu0 0
    %1151 = vmatpush1.bf16.msra.mxu0 0
    %1152 = vmatprep.subr.bf16.mxu0 0
    %1153 = vmatpush1.bf16.msra.mxu0 0
    %1154 = vmatprep.subr.bf16.mxu0 0
    %1155 = vmatpush1.bf16.msra.mxu0 0
    %1156 = vmatprep.subr.bf16.mxu0 0
    %1157 = vmatpush1.bf16.msra.mxu0 %v1140
    %1158 = vmatprep.subr.bf16.mxu0 0
    %1159 = vmatpush2.bf16.msra.mxu0 0
    %1160 = vmatprep.subr.bf16.mxu0 0
    %1161 = vmatpush2.bf16.msra.mxu0 0
    %1162 = vmatprep.subr.bf16.mxu0 0
    %1163 = vmatpush2.bf16.msra.mxu0 0
    %1164 = vmatprep.subr.bf16.mxu0 0
    %1165 = vmatpush2.bf16.msra.mxu0 0
    %1166 = vmatprep.subr.bf16.mxu0 0
    %1167 = vmatpush2.bf16.msra.mxu0 0
    %1168 = vmatprep.subr.bf16.mxu0 0
    %1169 = vmatpush2.bf16.msra.mxu0 0
    %1170 = vmatprep.subr.bf16.mxu0 0
    %1171 = vmatpush2.bf16.msra.mxu0 0
    %1172 = vmatprep.subr.bf16.mxu0 0
    %1173 = vmatpush2.bf16.msra.mxu0 0
    %1174 = vmatprep.mubr.bf16.mxu0 0
    %1175 = vmatmul.mubr.bf16.gmra.mxu0 %v1137
    %v1176 = vpop.f32.mrf.mxu0
    %v1177 = vadd.f32 0.0, %v1176
    %v1178 = vpop.f32.mrf.mxu0
    %v1179 = vpop.f32.mrf.mxu0
    %v1180 = vpop.f32.mrf.mxu0
    %1181 = vdwg.mxu0
    %v1183 = vsel %vm477, %v1135, 0
    %v1186 = vsel %vm505, %v1015, 0
    %1188 = vmatprep.subr.bf16.mxu0 0
    %1189 = vmatpush1.bf16.msra.mxu0 0
    %1190 = vmatprep.subr.bf16.mxu0 0
    %1191 = vmatpush1.bf16.msra.mxu0 0
    %1192 = vmatprep.subr.bf16.mxu0 0
    %1193 = vmatpush1.bf16.msra.mxu0 0
    %1194 = vmatprep.subr.bf16.mxu0 0
    %1195 = vmatpush1.bf16.msra.mxu0 0
    %1196 = vmatprep.subr.bf16.mxu0 0
    %1197 = vmatpush1.bf16.msra.mxu0 0
    %1198 = vmatprep.subr.bf16.mxu0 0
    %1199 = vmatpush1.bf16.msra.mxu0 0
    %1200 = vmatprep.subr.bf16.mxu0 0
    %1201 = vmatpush1.bf16.msra.mxu0 0
    %1202 = vmatprep.subr.bf16.mxu0 0
    %1203 = vmatpush1.bf16.msra.mxu0 %v1186
    %1204 = vmatprep.subr.bf16.mxu0 0
    %1205 = vmatpush2.bf16.msra.mxu0 0
    %1206 = vmatprep.subr.bf16.mxu0 0
    %1207 = vmatpush2.bf16.msra.mxu0 0
    %1208 = vmatprep.subr.bf16.mxu0 0
    %1209 = vmatpush2.bf16.msra.mxu0 0
    %1210 = vmatprep.subr.bf16.mxu0 0
    %1211 = vmatpush2.bf16.msra.mxu0 0
    %1212 = vmatprep.subr.bf16.mxu0 0
    %1213 = vmatpush2.bf16.msra.mxu0 0
    %1214 = vmatprep.subr.bf16.mxu0 0
    %1215 = vmatpush2.bf16.msra.mxu0 0
    %1216 = vmatprep.subr.bf16.mxu0 0
    %1217 = vmatpush2.bf16.msra.mxu0 0
    %1218 = vmatprep.subr.bf16.mxu0 0
    %1219 = vmatpush2.bf16.msra.mxu0 0
    %1220 = vmatprep.mubr.bf16.mxu0 0
    %1221 = vmatmul.mubr.bf16.gmra.mxu0 %v1183
    %v1222 = vpop.f32.mrf.mxu0
    %v1223 = vadd.f32 0.0, %v1222
    %v1224 = vpop.f32.mrf.mxu0
    %v1225 = vpop.f32.mrf.mxu0
    %v1226 = vpop.f32.mrf.mxu0
    %1227 = vdwg.mxu0
    %v1228 = vpack.c.bf16 %v1223, %v1177
    %v1230 = vsel %vm180, %v1228, 0
    %1232 = vmatprep.subr.bf16.mxu0 0
    %1233 = vmatpush1.bf16.msra.mxu0 0
    %1234 = vmatprep.subr.bf16.mxu0 0
    %1235 = vmatpush1.bf16.msra.mxu0 0
    %1236 = vmatprep.subr.bf16.mxu0 0
    %1237 = vmatpush1.bf16.msra.mxu0 0
    %1238 = vmatprep.subr.bf16.mxu0 0
    %1239 = vmatpush1.bf16.msra.mxu0 0
    %1240 = vmatprep.subr.bf16.mxu0 0
    %1241 = vmatpush1.bf16.msra.mxu0 0
    %1242 = vmatprep.subr.bf16.mxu0 0
    %1243 = vmatpush1.bf16.msra.mxu0 0
    %1244 = vmatprep.subr.bf16.mxu0 0
    %1245 = vmatpush1.bf16.msra.mxu0 %v605
    %1246 = vmatprep.subr.bf16.mxu0 0
    %1247 = vmatpush1.bf16.msra.mxu0 %v604
    %1248 = vmatprep.subr.bf16.mxu0 0
    %1249 = vmatpush2.bf16.msra.mxu0 0
    %1250 = vmatprep.subr.bf16.mxu0 0
    %1251 = vmatpush2.bf16.msra.mxu0 0
    %1252 = vmatprep.subr.bf16.mxu0 0
    %1253 = vmatpush2.bf16.msra.mxu0 0
    %1254 = vmatprep.subr.bf16.mxu0 0
    %1255 = vmatpush2.bf16.msra.mxu0 0
    %1256 = vmatprep.subr.bf16.mxu0 0
    %1257 = vmatpush2.bf16.msra.mxu0 0
    %1258 = vmatprep.subr.bf16.mxu0 0
    %1259 = vmatpush2.bf16.msra.mxu0 0
    %1260 = vmatprep.subr.bf16.mxu0 0
    %1261 = vmatpush2.bf16.msra.mxu0 0
    %1262 = vmatprep.subr.bf16.mxu0 0
    %1263 = vmatpush2.bf16.msra.mxu0 0
    %1264 = vmatprep.mubr.bf16.mxu0 0
    %1265 = vmatmul.mubr.bf16.gmra.mxu0 %v1230
    %v1266 = vpop.f32.mrf.mxu0
    %v1267 = vadd.f32 0.0, %v1266
    %v1268 = vpop.f32.mrf.mxu0
    %v1269 = vpop.f32.mrf.mxu0
    %v1270 = vadd.f32 0.0, %v1269
    %v1271 = vpop.f32.mrf.mxu0
    %1272 = vdwg.mxu0
    %v1273 = vadd.f32 %v851, %v1267
    %v1274 = vadd.f32 %v852, %v1270
    %v1275 = vsel %vm180, %v1273, 0.0
    %1276 = vadd.xlane.f32.xlu0 %v1275
    %v1277 = vpop.xlane.xlu0 %1276
    %v1278 = vsel %vm180, %v1274, 0.0
    %1279 = vadd.xlane.f32.xlu0 %v1278
    %v1280 = vpop.xlane.xlu0 %1279
    %v1281 = vmul.f32 %v1277, %v187
    %v1282 = vmul.f32 %v1280, %v187
    %v1283 = vsub.f32 %v1273, %v1281
    %v1284 = vsub.f32 %v1274, %v1282
    %v1285 = vmul.f32 %v1283, %v1283
    %v1286 = vmul.f32 %v1284, %v1284
    %v1287 = vsel %vm180, %v1285, 0.0
    %1288 = vadd.xlane.f32.xlu0 %v1287
    %v1289 = vpop.xlane.xlu0 %1288
    %v1290 = vsel %vm180, %v1286, 0.0
    %1291 = vadd.xlane.f32.xlu0 %v1290
    %v1292 = vpop.xlane.xlu0 %1291
    %v1293 = vmul.f32 %v1289, %v187
    %v1294 = vmul.f32 %v1292, %v187
    %v1295 = vadd.f32 %v1293, 1e-05
    %v1296 = vadd.f32 %v1294, 1e-05
    %v1297 = vrsqrt.pop %v1295
    %v1298 = vrsqrt.pop %v1296
    %v1299 = vmul.f32 %v1283, %v1297
    %v1300 = vmul.f32 %v1284, %v1298
    %v1301 = vmul.f32 %v1299, %v150
    %v1302 = vmul.f32 %v1300, %v150
    %v1303 = vadd.f32 %v1301, %v157
    %v1304 = vadd.f32 %v1302, %v157
    %v1305 = vpack.c.bf16 %v1304, %v1303
    %v1307 = vsel %vm180, %v1305, 0
    %1309 = vmatprep.subr.bf16.mxu0 0
    %1310 = vmatpush1.bf16.msra.mxu0 0
    %1311 = vmatprep.subr.bf16.mxu0 0
    %1312 = vmatpush1.bf16.msra.mxu0 0
    %1313 = vmatprep.subr.bf16.mxu0 0
    %1314 = vmatpush1.bf16.msra.mxu0 0
    %1315 = vmatprep.subr.bf16.mxu0 0
    %1316 = vmatpush1.bf16.msra.mxu0 0
    %1317 = vmatprep.subr.bf16.mxu0 0
    %1318 = vmatpush1.bf16.msra.mxu0 0
    %1319 = vmatprep.subr.bf16.mxu0 0
    %1320 = vmatpush1.bf16.msra.mxu0 0
    %1321 = vmatprep.subr.bf16.mxu0 0
    %1322 = vmatpush1.bf16.msra.mxu0 %v694
    %1323 = vmatprep.subr.bf16.mxu0 0
    %1324 = vmatpush1.bf16.msra.mxu0 %v693
    %1325 = vmatprep.subr.bf16.mxu0 0
    %1326 = vmatpush2.bf16.msra.mxu0 0
    %1327 = vmatprep.subr.bf16.mxu0 0
    %1328 = vmatpush2.bf16.msra.mxu0 0
    %1329 = vmatprep.subr.bf16.mxu0 0
    %1330 = vmatpush2.bf16.msra.mxu0 0
    %1331 = vmatprep.subr.bf16.mxu0 0
    %1332 = vmatpush2.bf16.msra.mxu0 0
    %1333 = vmatprep.subr.bf16.mxu0 0
    %1334 = vmatpush2.bf16.msra.mxu0 0
    %1335 = vmatprep.subr.bf16.mxu0 0
    %1336 = vmatpush2.bf16.msra.mxu0 0
    %1337 = vmatprep.subr.bf16.mxu0 0
    %1338 = vmatpush2.bf16.msra.mxu0 0
    %1339 = vmatprep.subr.bf16.mxu0 0
    %1340 = vmatpush2.bf16.msra.mxu0 0
    %1341 = vmatprep.mubr.bf16.mxu0 0
    %1342 = vmatmul.mubr.bf16.gmra.mxu0 %v1307
    %v1343 = vpop.f32.mrf.mxu0
    %v1344 = vadd.f32 %v164, %v1343
    %v1345 = vpop.f32.mrf.mxu0
    %v1346 = vpop.f32.mrf.mxu0
    %v1347 = vadd.f32 %v164, %v1346
    %v1348 = vpop.f32.mrf.mxu0
    %1349 = vdwg.mxu0
    %v1350 = vmul.f32 %v1344, %v1344
    %v1351 = vmul.f32 %v1347, %v1347
    %v1352 = vmul.f32 %v1344, %v1350
    %v1353 = vmul.f32 %v1347, %v1351
    %v1354 = vmul.f32 %v1352, 0.044715
    %v1355 = vmul.f32 %v1353, 0.044715
    %v1356 = vadd.f32 %v1344, %v1354
    %v1357 = vadd.f32 %v1347, %v1355
    %v1358 = vmul.f32 %v1356, 0.7978846
    %v1359 = vmul.f32 %v1357, 0.7978846
    %v1360 = vtanh.pop %v1358
    %v1361 = vtanh.pop %v1359
    %v1362 = vadd.f32 %v1360, 1.0
    %v1363 = vadd.f32 %v1361, 1.0
    %v1364 = vmul.f32 %v1362, 0.5
    %v1365 = vmul.f32 %v1363, 0.5
    %v1366 = vmul.f32 %v1344, %v1364
    %v1367 = vmul.f32 %v1347, %v1365
    %v1368 = vpack.c.bf16 %v1367, %v1366
    %1369 = vmatprep.subr.bf16.mxu0 0
    %1370 = vmatpush1.bf16.msra.mxu0 %v799
    %1371 = vmatprep.subr.bf16.mxu0 0
    %1372 = vmatpush1.bf16.msra.mxu0 %v798
    %1373 = vmatprep.subr.bf16.mxu0 0
    %1374 = vmatpush1.bf16.msra.mxu0 %v797
    %1375 = vmatprep.subr.bf16.mxu0 0
    %1376 = vmatpush1.bf16.msra.mxu0 %v796
    %1377 = vmatprep.subr.bf16.mxu0 0
    %1378 = vmatpush1.bf16.msra.mxu0 %v795
    %1379 = vmatprep.subr.bf16.mxu0 0
    %1380 = vmatpush1.bf16.msra.mxu0 %v794
    %1381 = vmatprep.subr.bf16.mxu0 0
    %1382 = vmatpush1.bf16.msra.mxu0 %v793
    %1383 = vmatprep.subr.bf16.mxu0 0
    %1384 = vmatpush1.bf16.msra.mxu0 %v792
    %1385 = vmatprep.subr.bf16.mxu0 0
    %1386 = vmatpush2.bf16.msra.mxu0 0
    %1387 = vmatprep.subr.bf16.mxu0 0
    %1388 = vmatpush2.bf16.msra.mxu0 0
    %1389 = vmatprep.subr.bf16.mxu0 0
    %1390 = vmatpush2.bf16.msra.mxu0 0
    %1391 = vmatprep.subr.bf16.mxu0 0
    %1392 = vmatpush2.bf16.msra.mxu0 0
    %1393 = vmatprep.subr.bf16.mxu0 0
    %1394 = vmatpush2.bf16.msra.mxu0 0
    %1395 = vmatprep.subr.bf16.mxu0 0
    %1396 = vmatpush2.bf16.msra.mxu0 0
    %1397 = vmatprep.subr.bf16.mxu0 0
    %1398 = vmatpush2.bf16.msra.mxu0 0
    %1399 = vmatprep.subr.bf16.mxu0 0
    %1400 = vmatpush2.bf16.msra.mxu0 0
    %1401 = vmatprep.mubr.bf16.mxu0 0
    %1402 = vmatmul.mubr.bf16.gmra.mxu0 %v1368
    %v1403 = vpop.f32.mrf.mxu0
    %v1404 = vadd.f32 0.0, %v1403
    %v1405 = vpop.f32.mrf.mxu0
    %v1406 = vpop.f32.mrf.mxu0
    %v1407 = vadd.f32 0.0, %v1406
    %v1408 = vpop.f32.mrf.mxu0
    %1409 = vdwg.mxu0
    %v1410 = vadd.f32 %v1273, %v1404
    %v1411 = vadd.f32 %v1274, %v1407
    %v1412 = vadd.f32 %v1410, %v171
    %v1413 = vadd.f32 %v1411, %v171
    %1414 = vst.msk [vmem:[#allocation10] sm:$0xff] %vm180, %v1412
    %1415 = vst.msk [vmem:[#allocation10 + $0x8] sm:$0xff] %vm180, %v1413
    // Predicated region
    $region70: #{tpu_custom_call.1} parent=1 // pred_check
      _
    $region71: #{tpu_custom_call.1} parent=1 // pred_check_branch
      %1417 = sbr.rel (0) target = $region73
    $region72: #{tpu_custom_call.1} parent=1 // pred_region
      %s1419 = ssub.s32 256, 256
      %1420 = vsyncadd [#allocation4], %s1419
      %s1421 = sshll.u32 [#allocation10], 4
      %s1422 = int_to_ptr.vmem [resolvable:$true] %s1421
      %1427 = dma.vmem_to_hbm [thread:$0]  %s1422, 256, %s13, [#allocation4], 128, 128, 8
    $region73: #{tpu_custom_call.1} parent=1 // pred_fallthru
      _
    // Predicated region
    $region74: #{tpu_custom_call.1} parent=1 // pred_check
      _
    $region75: #{tpu_custom_call.1} parent=1 // pred_check_branch
      %1429 = sbr.rel (0) target = $region77
    $region76: #{tpu_custom_call.1} parent=1 // pred_region
      %1430 = dma.done [#allocation4], 256
    $region77: #{tpu_custom_call.1} parent=1 // pred_fallthru
      _
    %1431 = vsyncpa [#allocation3], 1
    %1432 = vsyncpa [#allocation6], 1
    %1433 = vsyncpa [#allocation9], 1
    %1434 = vsyncpa [#allocation4], 1

// kernel: tpu_custom_call.1
$region0: #{tpu_custom_call.1}
  #allocation0 [shape = 'u32[]', space=smem, size = 0x4, offset = 0x4, fixed_abs, tag = 'smem constant byte address 0x4 - core index']
  #allocation1 [shape = 'u32[144,128]{1,0:T(1,128)}', space=vmem, size = 0x12000, scoped, tag = 'internal scratch']
  %s0 = inlined_call_operand.vmem [shape: f32[2,8,32], index: 0, kind: input, shape index: {}]
  %s1 = inlined_call_operand.hbm [shape: f32[1,32], index: 1, kind: input, shape index: {}]
  %s2 = inlined_call_operand.hbm [shape: f32[1,32], index: 2, kind: input, shape index: {}]
  %s3 = inlined_call_operand.vmem [shape: bf16[32,32], index: 3, kind: input, shape index: {}]
  %s4 = inlined_call_operand.vmem [shape: bf16[32,32], index: 4, kind: input, shape index: {}]
  %s5 = inlined_call_operand.vmem [shape: bf16[32,32], index: 5, kind: input, shape index: {}]
  %s6 = inlined_call_operand.vmem [shape: bf16[32,32], index: 6, kind: input, shape index: {}]
  %s7 = inlined_call_operand.hbm [shape: f32[1,32], index: 7, kind: input, shape index: {}]
  %s8 = inlined_call_operand.hbm [shape: f32[1,32], index: 8, kind: input, shape index: {}]
  %s9 = inlined_call_operand.vmem [shape: bf16[32,128], index: 9, kind: input, shape index: {}]
  %s10 = inlined_call_operand.vmem [shape: f32[1,128], index: 10, kind: input, shape index: {}]
  %s11 = inlined_call_operand.vmem [shape: bf16[128,32], index: 11, kind: input, shape index: {}]
  %s12 = inlined_call_operand.vmem [shape: f32[1,32], index: 12, kind: input, shape index: {}]
  %s13 = inlined_call_operand.hbm [shape: f32[2,8,32], index: 13, kind: output, shape index: {}]
  %s14 = sld [smem:[#allocation0]]
  $region78: #{tpu_custom_call.1} parent=0
    _
  %s16 = ssub.s32 1, %s14
  %s17 = scalar_select 0, %s16, %s14
  $region1: #{tpu_custom_call.1} parent=0
    #allocation2 [shape = 'u8[512]{0}', space=vmem, size = 0x400, scoped, tag = 'input window, operand 1, single buffered']
    #allocation3 [shape = 's32[1]{0}', space=sflag, size = 0x4, scoped, tag = 'scoped memory for tpu_custom_call.1']
    #allocation4 [shape = 's32[1]{0}', space=sflag, size = 0x4, scoped, tag = 'scoped memory for tpu_custom_call.1']
    #allocation5 [shape = 'u8[512]{0}', space=vmem, size = 0x400, scoped, tag = 'input window, operand 2, single buffered']
    #allocation6 [shape = 's32[1]{0}', space=sflag, size = 0x4, scoped, tag = 'scoped memory for tpu_custom_call.1']
    #allocation7 [shape = 'u8[512]{0}', space=vmem, size = 0x400, scoped, tag = 'input window, operand 7, single buffered']
    #allocation8 [shape = 'u8[512]{0}', space=vmem, size = 0x400, scoped, tag = 'input window, operand 8, single buffered']
    #allocation9 [shape = 's32[1]{0}', space=sflag, size = 0x4, scoped, tag = 'scoped memory for tpu_custom_call.1']
    #allocation10 [shape = 'u8[8192]{0}', space=vmem, size = 0x2000, scoped, tag = 'output window, operand 0, single buffered']
    %18 = vsyncpa [#allocation3], 0
    %19 = vsyncpa [#allocation6], 0
    %20 = vsyncpa [#allocation9], 0
    %21 = vsyncpa [#allocation4], 0
    // Predicated region
    $region2: #{tpu_custom_call.1} parent=1 // pred_check
      _
    $region3: #{tpu_custom_call.1} parent=1 // pred_check_branch
      %23 = sbr.rel (0) target = $region5
    $region4: #{tpu_custom_call.1} parent=1 // pred_region
      _
    $region5: #{tpu_custom_call.1} parent=1 // pred_fallthru
      _
    // Predicated region
    $region6: #{tpu_custom_call.1} parent=1 // pred_check
      _
    $region7: #{tpu_custom_call.1} parent=1 // pred_check_branch
      %25 = sbr.rel (0) target = $region9
    $region8: #{tpu_custom_call.1} parent=1 // pred_region
      %s27 = ssub.s32 16, 16
      %28 = vsyncadd [#allocation3], %s27
      %s30 = sshll.u32 [#allocation2], 4
      %s31 = int_to_ptr.vmem [resolvable:$true] %s30
      %33 = dma.hbm_to_vmem [thread:$0]  %s1, 16, %s31, [#allocation3]
    $region9: #{tpu_custom_call.1} parent=1 // pred_fallthru
      _
    // Predicated region
    $region10: #{tpu_custom_call.1} parent=1 // pred_check
      _
    $region11: #{tpu_custom_call.1} parent=1 // pred_check_branch
      %35 = sbr.rel (0) target = $region13
    $region12: #{tpu_custom_call.1} parent=1 // pred_region
      %s37 = ssub.s32 16, 16
      %38 = vsyncadd [#allocation6], %s37
      %s40 = sshll.u32 [#allocation5], 4
      %s41 = int_to_ptr.vmem [resolvable:$true] %s40
      %43 = dma.hbm_to_vmem [thread:$0]  %s2, 16, %s41, [#allocation6]
    $region13: #{tpu_custom_call.1} parent=1 // pred_fallthru
      _
    // Predicated region
    $region14: #{tpu_custom_call.1} parent=1 // pred_check
      _
    $region15: #{tpu_custom_call.1} parent=1 // pred_check_branch
      %45 = sbr.rel (0) target = $region17
    $region16: #{tpu_custom_call.1} parent=1 // pred_region
      _
    $region17: #{tpu_custom_call.1} parent=1 // pred_fallthru
      _
    // Predicated region
    $region18: #{tpu_custom_call.1} parent=1 // pred_check
      _
    $region19: #{tpu_custom_call.1} parent=1 // pred_check_branch
      %47 = sbr.rel (0) target = $region21
    $region20: #{tpu_custom_call.1} parent=1 // pred_region
      _
    $region21: #{tpu_custom_call.1} parent=1 // pred_fallthru
      _
    // Predicated region
    $region22: #{tpu_custom_call.1} parent=1 // pred_check
      _
    $region23: #{tpu_custom_call.1} parent=1 // pred_check_branch
      %49 = sbr.rel (0) target = $region25
    $region24: #{tpu_custom_call.1} parent=1 // pred_region
      _
    $region25: #{tpu_custom_call.1} parent=1 // pred_fallthru
      _
    // Predicated region
    $region26: #{tpu_custom_call.1} parent=1 // pred_check
      _
    $region27: #{tpu_custom_call.1} parent=1 // pred_check_branch
      %51 = sbr.rel (0) target = $region29
    $region28: #{tpu_custom_call.1} parent=1 // pred_region
      _
    $region29: #{tpu_custom_call.1} parent=1 // pred_fallthru
      _
    // Predicated region
    $region30: #{tpu_custom_call.1} parent=1 // pred_check
      _
    $region31: #{tpu_custom_call.1} parent=1 // pred_check_branch
      %53 = sbr.rel (0) target = $region33
    $region32: #{tpu_custom_call.1} parent=1 // pred_region
      %s55 = ssub.s32 16, 16
      %56 = vsyncadd [#allocation6], %s55
      %s58 = sshll.u32 [#allocation7], 4
      %s59 = int_to_ptr.vmem [resolvable:$true] %s58
      %61 = dma.hbm_to_vmem [thread:$0]  %s7, 16, %s59, [#allocation6]
    $region33: #{tpu_custom_call.1} parent=1 // pred_fallthru
      _
    // Predicated region
    $region34: #{tpu_custom_call.1} parent=1 // pred_check
      _
    $region35: #{tpu_custom_call.1} parent=1 // pred_check_branch
      %63 = sbr.rel (0) target = $region37
    $region36: #{tpu_custom_call.1} parent=1 // pred_region
      %s65 = ssub.s32 16, 16
      %66 = vsyncadd [#allocation9], %s65
      %s68 = sshll.u32 [#allocation8], 4
      %s69 = int_to_ptr.vmem [resolvable:$true] %s68
      %71 = dma.hbm_to_vmem [thread:$0]  %s8, 16, %s69, [#allocation9]
    $region37: #{tpu_custom_call.1} parent=1 // pred_fallthru
      _
    // Predicated region
    $region38: #{tpu_custom_call.1} parent=1 // pred_check
      _
    $region39: #{tpu_custom_call.1} parent=1 // pred_check_branch
      %73 = sbr.rel (0) target = $region41
    $region40: #{tpu_custom_call.1} parent=1 // pred_region
      _
    $region41: #{tpu_custom_call.1} parent=1 // pred_fallthru
      _
    // Predicated region
    $region42: #{tpu_custom_call.1} parent=1 // pred_check
      _
    $region43: #{tpu_custom_call.1} parent=1 // pred_check_branch
      %75 = sbr.rel (0) target = $region45
    $region44: #{tpu_custom_call.1} parent=1 // pred_region
      _
    $region45: #{tpu_custom_call.1} parent=1 // pred_fallthru
      _
    // Predicated region
    $region46: #{tpu_custom_call.1} parent=1 // pred_check
      _
    $region47: #{tpu_custom_call.1} parent=1 // pred_check_branch
      %77 = sbr.rel (0) target = $region49
    $region48: #{tpu_custom_call.1} parent=1 // pred_region
      _
    $region49: #{tpu_custom_call.1} parent=1 // pred_fallthru
      _
    // Predicated region
    $region50: #{tpu_custom_call.1} parent=1 // pred_check
      _
    $region51: #{tpu_custom_call.1} parent=1 // pred_check_branch
      %79 = sbr.rel (0) target = $region53
    $region52: #{tpu_custom_call.1} parent=1 // pred_region
      _
    $region53: #{tpu_custom_call.1} parent=1 // pred_fallthru
      _
    // Predicated region
    $region54: #{tpu_custom_call.1} parent=1 // pred_check
      _
    $region55: #{tpu_custom_call.1} parent=1 // pred_check_branch
      %81 = sbr.rel (0) target = $region57
    $region56: #{tpu_custom_call.1} parent=1 // pred_region
      %82 = dma.done [#allocation3], 16
    $region57: #{tpu_custom_call.1} parent=1 // pred_fallthru
      _
    // Predicated region
    $region58: #{tpu_custom_call.1} parent=1 // pred_check
      _
    $region59: #{tpu_custom_call.1} parent=1 // pred_check_branch
      %84 = sbr.rel (0) target = $region61
    $region60: #{tpu_custom_call.1} parent=1 // pred_region
      %85 = dma.done [#allocation6], 16
    $region61: #{tpu_custom_call.1} parent=1 // pred_fallthru
      _
    // Predicated region
    $region62: #{tpu_custom_call.1} parent=1 // pred_check
      _
    $region63: #{tpu_custom_call.1} parent=1 // pred_check_branch
      %87 = sbr.rel (0) target = $region65
    $region64: #{tpu_custom_call.1} parent=1 // pred_region
      %88 = dma.done [#allocation6], 16
    $region65: #{tpu_custom_call.1} parent=1 // pred_fallthru
      _
    // Predicated region
    $region66: #{tpu_custom_call.1} parent=1 // pred_check
      _
    $region67: #{tpu_custom_call.1} parent=1 // pred_check_branch
      %90 = sbr.rel (0) target = $region69
    $region68: #{tpu_custom_call.1} parent=1 // pred_region
      %91 = dma.done [#allocation9], 16
    $region69: #{tpu_custom_call.1} parent=1 // pred_fallthru
      _
    %v93 = vld [vmem:[%s0] sm:$0xff]
    %v94 = vld [vmem:[%s0 + $0x8] sm:$0xff]
    %v95 = vld [vmem:[%s3] sm:$0xf]
    %v96 = vld [vmem:[%s3 + $0x4] sm:$0xf]
    %v97 = vld [vmem:[%s3 + $0x8] sm:$0xf]
    %v98 = vld [vmem:[%s3 + $0xc] sm:$0xf]
    %v99 = vld [vmem:[%s4] sm:$0xf]
    %v100 = vld [vmem:[%s4 + $0x4] sm:$0xf]
    %v101 = vld [vmem:[%s4 + $0x8] sm:$0xf]
    %v102 = vld [vmem:[%s4 + $0xc] sm:$0xf]
    %v103 = vld [vmem:[%s5] sm:$0xf]
    %v104 = vld [vmem:[%s5 + $0x4] sm:$0xf]
    %v105 = vld [vmem:[%s5 + $0x8] sm:$0xf]
    %v106 = vld [vmem:[%s5 + $0xc] sm:$0xf]
    %v107 = vld [vmem:[%s6] sm:$0xf]
    %v108 = vld [vmem:[%s6 + $0x4] sm:$0xf]
    %v109 = vld [vmem:[%s6 + $0x8] sm:$0xf]
    %v110 = vld [vmem:[%s6 + $0xc] sm:$0xf]
    %v111 = vld [vmem:[%s9] sm:$0xf]
    %v112 = vld [vmem:[%s9 + $0x4] sm:$0xf]
    %v113 = vld [vmem:[%s9 + $0x8] sm:$0xf]
    %v114 = vld [vmem:[%s9 + $0xc] sm:$0xf]
    %v115 = vld [vmem:[%s11] sm:$0xf]
    %v116 = vld [vmem:[%s11 + $0x4] sm:$0xf]
    %v117 = vld [vmem:[%s11 + $0x8] sm:$0xf]
    %v118 = vld [vmem:[%s11 + $0xc] sm:$0xf]
    %v119 = vld [vmem:[%s11 + $0x10] sm:$0xf]
    %v120 = vld [vmem:[%s11 + $0x14] sm:$0xf]
    %v121 = vld [vmem:[%s11 + $0x18] sm:$0xf]
    %v122 = vld [vmem:[%s11 + $0x1c] sm:$0xf]
    %v123 = vld [vmem:[%s11 + $0x20] sm:$0xf]
    %v124 = vld [vmem:[%s11 + $0x24] sm:$0xf]
    %v125 = vld [vmem:[%s11 + $0x28] sm:$0xf]
    %v126 = vld [vmem:[%s11 + $0x2c] sm:$0xf]
    %v127 = vld [vmem:[%s11 + $0x30] sm:$0xf]
    %v128 = vld [vmem:[%s11 + $0x34] sm:$0xf]
    %v129 = vld [vmem:[%s11 + $0x38] sm:$0xf]
    %v130 = vld [vmem:[%s11 + $0x3c] sm:$0xf]
    %v131 = vld [vmem:[#allocation2] sm:$0x1]
    %v133 = vlaneseq
    %v134 = vshrl.u32 %v133, 7
    %v135 = vsub.s32 0, %v134
    %v136 = vrot.slane %v131, %v135
    %v138 = vld [vmem:[#allocation5] sm:$0x1]
    %v140 = vlaneseq
    %v141 = vshrl.u32 %v140, 7
    %v142 = vsub.s32 0, %v141
    %v143 = vrot.slane %v138, %v142
    %v145 = vld [vmem:[#allocation7] sm:$0x1]
    %v147 = vlaneseq
    %v148 = vshrl.u32 %v147, 7
    %v149 = vsub.s32 0, %v148
    %v150 = vrot.slane %v145, %v149
    %v152 = vld [vmem:[#allocation8] sm:$0x1]
    %v154 = vlaneseq
    %v155 = vshrl.u32 %v154, 7
    %v156 = vsub.s32 0, %v155
    %v157 = vrot.slane %v152, %v156
    %v159 = vld [vmem:[%s10] sm:$0x1]
    %v161 = vlaneseq
    %v162 = vshrl.u32 %v161, 7
    %v163 = vsub.s32 0, %v162
    %v164 = vrot.slane %v159, %v163
    %v166 = vld [vmem:[%s12] sm:$0x1]
    %v168 = vlaneseq
    %v169 = vshrl.u32 %v168, 7
    %v170 = vsub.s32 0, %v169
    %v171 = vrot.slane %v166, %v170
    %v173 = vlaneseq
    %v174 = vshrl.u32 %v173, 7
    %v175 = vlaneseq
    %v176 = vand.u32 %v175, 127
    %vm177 = vcmp.ge.s32.totalorder %v174, %v176
    %v178 = vsel %vm177, 1, 0
    %vm179 = vcmp.eq.s32.totalorder %v178, 1
    %vm180 = vcmask 261120
    %v181 = vsel %vm180, %v93, 0.0
    %182 = vadd.xlane.f32.xlu0 %v181
    %v183 = vpop.xlane.xlu0 %182
    %v184 = vsel %vm180, %v94, 0.0
    %185 = vadd.xlane.f32.xlu0 %v184
    %v186 = vpop.xlane.xlu0 %185
    %v187 = vrcp.pop 32.0
    %v188 = vmul.f32 %v183, %v187
    %v189 = vmul.f32 %v186, %v187
    %v190 = vsub.f32 %v93, %v188
    %v191 = vsub.f32 %v94, %v189
    %v192 = vmul.f32 %v190, %v190
    %v193 = vmul.f32 %v191, %v191
    %v194 = vsel %vm180, %v192, 0.0
    %195 = vadd.xlane.f32.xlu0 %v194
    %v196 = vpop.xlane.xlu0 %195
    %v197 = vsel %vm180, %v193, 0.0
    %198 = vadd.xlane.f32.xlu0 %v197
    %v199 = vpop.xlane.xlu0 %198
    %v200 = vmul.f32 %v196, %v187
    %v201 = vmul.f32 %v199, %v187
    %v202 = vadd.f32 %v200, 1e-05
    %v203 = vadd.f32 %v201, 1e-05
    %v204 = vrsqrt.pop %v202
    %v205 = vrsqrt.pop %v203
    %v206 = vmul.f32 %v190, %v204
    %v207 = vmul.f32 %v191, %v205
    %v208 = vmul.f32 %v206, %v136
    %v209 = vmul.f32 %v207, %v136
    %v210 = vadd.f32 %v208, %v143
    %v211 = vadd.f32 %v209, %v143
    %v212 = vpack.c.bf16 %v211, %v210
    %v217 = vunpack.c.l.b16 %v95
    %v218 = vunpack.c.l.b16 %v96
    %v219 = vunpack.c.l.b16 %v97
    %v220 = vunpack.c.l.b16 %v98
    %v221 = vpack.c.b16 %v218, %v217
    %v222 = vpack.c.b16 %v220, %v219
    %v226 = vsel %vm180, %v212, 0
    %228 = vmatprep.subr.bf16.mxu0 0
    %229 = vmatpush1.bf16.msra.mxu0 0
    %230 = vmatprep.subr.bf16.mxu0 0
    %231 = vmatpush1.bf16.msra.mxu0 0
    %232 = vmatprep.subr.bf16.mxu0 0
    %233 = vmatpush1.bf16.msra.mxu0 0
    %234 = vmatprep.subr.bf16.mxu0 0
    %235 = vmatpush1.bf16.msra.mxu0 0
    %236 = vmatprep.subr.bf16.mxu0 0
    %237 = vmatpush1.bf16.msra.mxu0 0
    %238 = vmatprep.subr.bf16.mxu0 0
    %239 = vmatpush1.bf16.msra.mxu0 0
    %240 = vmatprep.subr.bf16.mxu0 0
    %241 = vmatpush1.bf16.msra.mxu0 %v222
    %242 = vmatprep.subr.bf16.mxu0 0
    %243 = vmatpush1.bf16.msra.mxu0 %v221
    %244 = vmatprep.subr.bf16.mxu0 0
    %245 = vmatpush2.bf16.msra.mxu0 0
    %246 = vmatprep.subr.bf16.mxu0 0
    %247 = vmatpush2.bf16.msra.mxu0 0
    %248 = vmatprep.subr.bf16.mxu0 0
    %249 = vmatpush2.bf16.msra.mxu0 0
    %250 = vmatprep.subr.bf16.mxu0 0
    %251 = vmatpush2.bf16.msra.mxu0 0
    %252 = vmatprep.subr.bf16.mxu0 0
    %253 = vmatpush2.bf16.msra.mxu0 0
    %254 = vmatprep.subr.bf16.mxu0 0
    %255 = vmatpush2.bf16.msra.mxu0 0
    %256 = vmatprep.subr.bf16.mxu0 0
    %257 = vmatpush2.bf16.msra.mxu0 0
    %258 = vmatprep.subr.bf16.mxu0 0
    %259 = vmatpush2.bf16.msra.mxu0 0
    %260 = vmatprep.mubr.bf16.mxu0 0
    %261 = vmatmul.mubr.bf16.gmra.mxu0 %v226
    %v262 = vpop.f32.mrf.mxu0
    %v263 = vadd.f32 0.0, %v262
    %v264 = vpop.f32.mrf.mxu0
    %v265 = vpop.f32.mrf.mxu0
    %v266 = vadd.f32 0.0, %v265
    %v267 = vpop.f32.mrf.mxu0
    %268 = vdwg.mxu0
    %v273 = vunpack.c.l.b16 %v99
    %v274 = vunpack.c.l.b16 %v100
    %v275 = vunpack.c.l.b16 %v101
    %v276 = vunpack.c.l.b16 %v102
    %v277 = vpack.c.b16 %v274, %v273
    %v278 = vpack.c.b16 %v276, %v275
    %281 = vmatprep.subr.bf16.mxu0 0
    %282 = vmatpush1.bf16.msra.mxu0 0
    %283 = vmatprep.subr.bf16.mxu0 0
    %284 = vmatpush1.bf16.msra.mxu0 0
    %285 = vmatprep.subr.bf16.mxu0 0
    %286 = vmatpush1.bf16.msra.mxu0 0
    %287 = vmatprep.subr.bf16.mxu0 0
    %288 = vmatpush1.bf16.msra.mxu0 0
    %289 = vmatprep.subr.bf16.mxu0 0
    %290 = vmatpush1.bf16.msra.mxu0 0
    %291 = vmatprep.subr.bf16.mxu0 0
    %292 = vmatpush1.bf16.msra.mxu0 0
    %293 = vmatprep.subr.bf16.mxu0 0
    %294 = vmatpush1.bf16.msra.mxu0 %v278
    %295 = vmatprep.subr.bf16.mxu0 0
    %296 = vmatpush1.bf16.msra.mxu0 %v277
    %297 = vmatprep.subr.bf16.mxu0 0
    %298 = vmatpush2.bf16.msra.mxu0 0
    %299 = vmatprep.subr.bf16.mxu0 0
    %300 = vmatpush2.bf16.msra.mxu0 0
    %301 = vmatprep.subr.bf16.mxu0 0
    %302 = vmatpush2.bf16.msra.mxu0 0
    %303 = vmatprep.subr.bf16.mxu0 0
    %304 = vmatpush2.bf16.msra.mxu0 0
    %305 = vmatprep.subr.bf16.mxu0 0
    %306 = vmatpush2.bf16.msra.mxu0 0
    %307 = vmatprep.subr.bf16.mxu0 0
    %308 = vmatpush2.bf16.msra.mxu0 0
    %309 = vmatprep.subr.bf16.mxu0 0
    %310 = vmatpush2.bf16.msra.mxu0 0
    %311 = vmatprep.subr.bf16.mxu0 0
    %312 = vmatpush2.bf16.msra.mxu0 0
    %313 = vmatprep.mubr.bf16.mxu0 0
    %314 = vmatmul.mubr.bf16.gmra.mxu0 %v226
    %v315 = vpop.f32.mrf.mxu0
    %v316 = vadd.f32 0.0, %v315
    %v317 = vpop.f32.mrf.mxu0
    %v318 = vpop.f32.mrf.mxu0
    %v319 = vadd.f32 0.0, %v318
    %v320 = vpop.f32.mrf.mxu0
    %321 = vdwg.mxu0
    %v326 = vunpack.c.l.b16 %v103
    %v327 = vunpack.c.l.b16 %v104
    %v328 = vunpack.c.l.b16 %v105
    %v329 = vunpack.c.l.b16 %v106
    %v330 = vpack.c.b16 %v327, %v326
    %v331 = vpack.c.b16 %v329, %v328
    %334 = vmatprep.subr.bf16.mxu0 0
    %335 = vmatpush1.bf16.msra.mxu0 0
    %336 = vmatprep.subr.bf16.mxu0 0
    %337 = vmatpush1.bf16.msra.mxu0 0
    %338 = vmatprep.subr.bf16.mxu0 0
    %339 = vmatpush1.bf16.msra.mxu0 0
    %340 = vmatprep.subr.bf16.mxu0 0
    %341 = vmatpush1.bf16.msra.mxu0 0
    %342 = vmatprep.subr.bf16.mxu0 0
    %343 = vmatpush1.bf16.msra.mxu0 0
    %344 = vmatprep.subr.bf16.mxu0 0
    %345 = vmatpush1.bf16.msra.mxu0 0
    %346 = vmatprep.subr.bf16.mxu0 0
    %347 = vmatpush1.bf16.msra.mxu0 %v331
    %348 = vmatprep.subr.bf16.mxu0 0
    %349 = vmatpush1.bf16.msra.mxu0 %v330
    %350 = vmatprep.subr.bf16.mxu0 0
    %351 = vmatpush2.bf16.msra.mxu0 0
    %352 = vmatprep.subr.bf16.mxu0 0
    %353 = vmatpush2.bf16.msra.mxu0 0
    %354 = vmatprep.subr.bf16.mxu0 0
    %355 = vmatpush2.bf16.msra.mxu0 0
    %356 = vmatprep.subr.bf16.mxu0 0
    %357 = vmatpush2.bf16.msra.mxu0 0
    %358 = vmatprep.subr.bf16.mxu0 0
    %359 = vmatpush2.bf16.msra.mxu0 0
    %360 = vmatprep.subr.bf16.mxu0 0
    %361 = vmatpush2.bf16.msra.mxu0 0
    %362 = vmatprep.subr.bf16.mxu0 0
    %363 = vmatpush2.bf16.msra.mxu0 0
    %364 = vmatprep.subr.bf16.mxu0 0
    %365 = vmatpush2.bf16.msra.mxu0 0
    %366 = vmatprep.mubr.bf16.mxu0 0
    %367 = vmatmul.mubr.bf16.gmra.mxu0 %v226
    %v368 = vpop.f32.mrf.mxu0
    %v369 = vadd.f32 0.0, %v368
    %v370 = vpop.f32.mrf.mxu0
    %v371 = vpop.f32.mrf.mxu0
    %v372 = vadd.f32 0.0, %v371
    %v373 = vpop.f32.mrf.mxu0
    %374 = vdwg.mxu0
    %v375 = vpack.c.bf16 %v263, %v263
    %v376 = vpack.c.bf16 %v266, %v266
    %v377 = vpack.c.bf16 %v316, %v316
    %v378 = vpack.c.bf16 %v319, %v319
    %v379 = vpack.c.bf16 %v369, %v369
    %v380 = vpack.c.bf16 %v372, %v372
    %v382 = vsel %vm180, %v375, 0
    %v385 = vsel %vm180, %v377, 0
    %387 = vmatprep.subr.bf16.mxu0 0
    %388 = vmatpush1.bf16.xpose.msra.mxu0 0
    %389 = vmatprep.subr.bf16.mxu0 0
    %390 = vmatpush1.bf16.xpose.msra.mxu0 0
    %391 = vmatprep.subr.bf16.mxu0 0
    %392 = vmatpush1.bf16.xpose.msra.mxu0 0
    %393 = vmatprep.subr.bf16.mxu0 0
    %394 = vmatpush1.bf16.xpose.msra.mxu0 0
    %395 = vmatprep.subr.bf16.mxu0 0
    %396 = vmatpush1.bf16.xpose.msra.mxu0 0
    %397 = vmatprep.subr.bf16.mxu0 0
    %398 = vmatpush1.bf16.xpose.msra.mxu0 0
    %399 = vmatprep.subr.bf16.mxu0 0
    %400 = vmatpush1.bf16.xpose.msra.mxu0 0
    %401 = vmatprep.subr.bf16.mxu0 0
    %402 = vmatpush1.bf16.xpose.msra.mxu0 %v385
    %403 = vmatprep.subr.bf16.mxu0 0
    %404 = vmatpush2.bf16.xpose.msra.mxu0 0
    %405 = vmatprep.subr.bf16.mxu0 0
    %406 = vmatpush2.bf16.xpose.msra.mxu0 0
    %407 = vmatprep.subr.bf16.mxu0 0
    %408 = vmatpush2.bf16.xpose.msra.mxu0 0
    %409 = vmatprep.subr.bf16.mxu0 0
    %410 = vmatpush2.bf16.xpose.msra.mxu0 0
    %411 = vmatprep.subr.bf16.mxu0 0
    %412 = vmatpush2.bf16.xpose.msra.mxu0 0
    %413 = vmatprep.subr.bf16.mxu0 0
    %414 = vmatpush2.bf16.xpose.msra.mxu0 0
    %415 = vmatprep.subr.bf16.mxu0 0
    %416 = vmatpush2.bf16.xpose.msra.mxu0 0
    %417 = vmatprep.subr.bf16.mxu0 0
    %418 = vmatpush2.bf16.xpose.msra.mxu0 0
    %419 = vmatprep.mubr.bf16.mxu0 0
    %420 = vmatmul.mubr.bf16.gmra.mxu0 %v382
    %v421 = vpop.f32.mrf.mxu0
    %v422 = vadd.f32 0.0, %v421
    %v423 = vpop.f32.mrf.mxu0
    %v424 = vpop.f32.mrf.mxu0
    %v425 = vpop.f32.mrf.mxu0
    %426 = vdwg.mxu0
    %v428 = vsel %vm180, %v376, 0
    %v431 = vsel %vm180, %v378, 0
    %433 = vmatprep.subr.bf16.mxu0 0
    %434 = vmatpush1.bf16.xpose.msra.mxu0 0
    %435 = vmatprep.subr.bf16.mxu0 0
    %436 = vmatpush1.bf16.xpose.msra.mxu0 0
    %437 = vmatprep.subr.bf16.mxu0 0
    %438 = vmatpush1.bf16.xpose.msra.mxu0 0
    %439 = vmatprep.subr.bf16.mxu0 0
    %440 = vmatpush1.bf16.xpose.msra.mxu0 0
    %441 = vmatprep.subr.bf16.mxu0 0
    %442 = vmatpush1.bf16.xpose.msra.mxu0 0
    %443 = vmatprep.subr.bf16.mxu0 0
    %444 = vmatpush1.bf16.xpose.msra.mxu0 0
    %445 = vmatprep.subr.bf16.mxu0 0
    %446 = vmatpush1.bf16.xpose.msra.mxu0 0
    %447 = vmatprep.subr.bf16.mxu0 0
    %448 = vmatpush1.bf16.xpose.msra.mxu0 %v431
    %449 = vmatprep.subr.bf16.mxu0 0
    %450 = vmatpush2.bf16.xpose.msra.mxu0 0
    %451 = vmatprep.subr.bf16.mxu0 0
    %452 = vmatpush2.bf16.xpose.msra.mxu0 0
    %453 = vmatprep.subr.bf16.mxu0 0
    %454 = vmatpush2.bf16.xpose.msra.mxu0 0
    %455 = vmatprep.subr.bf16.mxu0 0
    %456 = vmatpush2.bf16.xpose.msra.mxu0 0
    %457 = vmatprep.subr.bf16.mxu0 0
    %458 = vmatpush2.bf16.xpose.msra.mxu0 0
    %459 = vmatprep.subr.bf16.mxu0 0
    %460 = vmatpush2.bf16.xpose.msra.mxu0 0
    %461 = vmatprep.subr.bf16.mxu0 0
    %462 = vmatpush2.bf16.xpose.msra.mxu0 0
    %463 = vmatprep.subr.bf16.mxu0 0
    %464 = vmatpush2.bf16.xpose.msra.mxu0 0
    %465 = vmatprep.mubr.bf16.mxu0 0
    %466 = vmatmul.mubr.bf16.gmra.mxu0 %v428
    %v467 = vpop.f32.mrf.mxu0
    %v468 = vadd.f32 0.0, %v467
    %v469 = vpop.f32.mrf.mxu0
    %v470 = vpop.f32.mrf.mxu0
    %v471 = vpop.f32.mrf.mxu0
    %472 = vdwg.mxu0
    %v473 = vmul.f32 %v422, 0.17677669
    %v474 = vmul.f32 %v468, 0.17677669
    %v475 = vsel %vm179, %v473, -1e+30
    %v476 = vsel %vm179, %v474, -1e+30
    %vm477 = vcmask 64512
    %v478 = vsel %vm477, %v475, -inf
    %479 = vmax.xlane.f32.xlu0 %v478
    %v480 = vpop.xlane.xlu0 %479
    %v481 = vsel %vm477, %v476, -inf
    %482 = vmax.xlane.f32.xlu0 %v481
    %v483 = vpop.xlane.xlu0 %482
    %v484 = vsub.f32 %v475, %v480
    %v485 = vsub.f32 %v476, %v483
    %v486 = vmul.f32 %v484, 1.442695
    %v487 = vpow.pop %v486
    %v488 = vmul.f32 %v485, 1.442695
    %v489 = vpow.pop %v488
    %v490 = vsel %vm477, %v487, 0.0
    %491 = vadd.xlane.f32.xlu0 %v490
    %v492 = vpop.xlane.xlu0 %491
    %v493 = vsel %vm477, %v489, 0.0
    %494 = vadd.xlane.f32.xlu0 %v493
    %v495 = vpop.xlane.xlu0 %494
    %v496 = vrcp.pop %v492
    %v497 = vrcp.pop %v495
    %v498 = vmul.f32 %v487, %v496
    %v499 = vmul.f32 %v489, %v497
    %v500 = vpack.c.bf16 %v498, %v498
    %v501 = vpack.c.bf16 %v499, %v499
    %v503 = vsel %vm477, %v500, 0
    %vm505 = vcmask 1043456
    %v507 = vsel %vm505, %v379, 0
    %509 = vmatprep.subr.bf16.mxu0 0
    %510 = vmatpush1.bf16.msra.mxu0 0
    %511 = vmatprep.subr.bf16.mxu0 0
    %512 = vmatpush1.bf16.msra.mxu0 0
    %513 = vmatprep.subr.bf16.mxu0 0
    %514 = vmatpush1.bf16.msra.mxu0 0
    %515 = vmatprep.subr.bf16.mxu0 0
    %516 = vmatpush1.bf16.msra.mxu0 0
    %517 = vmatprep.subr.bf16.mxu0 0
    %518 = vmatpush1.bf16.msra.mxu0 0
    %519 = vmatprep.subr.bf16.mxu0 0
    %520 = vmatpush1.bf16.msra.mxu0 0
    %521 = vmatprep.subr.bf16.mxu0 0
    %522 = vmatpush1.bf16.msra.mxu0 0
    %523 = vmatprep.subr.bf16.mxu0 0
    %524 = vmatpush1.bf16.msra.mxu0 %v507
    %525 = vmatprep.subr.bf16.mxu0 0
    %526 = vmatpush2.bf16.msra.mxu0 0
    %527 = vmatprep.subr.bf16.mxu0 0
    %528 = vmatpush2.bf16.msra.mxu0 0
    %529 = vmatprep.subr.bf16.mxu0 0
    %530 = vmatpush2.bf16.msra.mxu0 0
    %531 = vmatprep.subr.bf16.mxu0 0
    %532 = vmatpush2.bf16.msra.mxu0 0
    %533 = vmatprep.subr.bf16.mxu0 0
    %534 = vmatpush2.bf16.msra.mxu0 0
    %535 = vmatprep.subr.bf16.mxu0 0
    %536 = vmatpush2.bf16.msra.mxu0 0
    %537 = vmatprep.subr.bf16.mxu0 0
    %538 = vmatpush2.bf16.msra.mxu0 0
    %539 = vmatprep.subr.bf16.mxu0 0
    %540 = vmatpush2.bf16.msra.mxu0 0
    %541 = vmatprep.mubr.bf16.mxu0 0
    %542 = vmatmul.mubr.bf16.gmra.mxu0 %v503
    %v543 = vpop.f32.mrf.mxu0
    %v544 = vadd.f32 0.0, %v543
    %v545 = vpop.f32.mrf.mxu0
    %v546 = vpop.f32.mrf.mxu0
    %v547 = vpop.f32.mrf.mxu0
    %548 = vdwg.mxu0
    %v550 = vsel %vm477, %v501, 0
    %v553 = vsel %vm505, %v380, 0
    %555 = vmatprep.subr.bf16.mxu0 0
    %556 = vmatpush1.bf16.msra.mxu0 0
    %557 = vmatprep.subr.bf16.mxu0 0
    %558 = vmatpush1.bf16.msra.mxu0 0
    %559 = vmatprep.subr.bf16.mxu0 0
    %560 = vmatpush1.bf16.msra.mxu0 0
    %561 = vmatprep.subr.bf16.mxu0 0
    %562 = vmatpush1.bf16.msra.mxu0 0
    %563 = vmatprep.subr.bf16.mxu0 0
    %564 = vmatpush1.bf16.msra.mxu0 0
    %565 = vmatprep.subr.bf16.mxu0 0
    %566 = vmatpush1.bf16.msra.mxu0 0
    %567 = vmatprep.subr.bf16.mxu0 0
    %568 = vmatpush1.bf16.msra.mxu0 0
    %569 = vmatprep.subr.bf16.mxu0 0
    %570 = vmatpush1.bf16.msra.mxu0 %v553
    %571 = vmatprep.subr.bf16.mxu0 0
    %572 = vmatpush2.bf16.msra.mxu0 0
    %573 = vmatprep.subr.bf16.mxu0 0
    %574 = vmatpush2.bf16.msra.mxu0 0
    %575 = vmatprep.subr.bf16.mxu0 0
    %576 = vmatpush2.bf16.msra.mxu0 0
    %577 = vmatprep.subr.bf16.mxu0 0
    %578 = vmatpush2.bf16.msra.mxu0 0
    %579 = vmatprep.subr.bf16.mxu0 0
    %580 = vmatpush2.bf16.msra.mxu0 0
    %581 = vmatprep.subr.bf16.mxu0 0
    %582 = vmatpush2.bf16.msra.mxu0 0
    %583 = vmatprep.subr.bf16.mxu0 0
    %584 = vmatpush2.bf16.msra.mxu0 0
    %585 = vmatprep.subr.bf16.mxu0 0
    %586 = vmatpush2.bf16.msra.mxu0 0
    %587 = vmatprep.mubr.bf16.mxu0 0
    %588 = vmatmul.mubr.bf16.gmra.mxu0 %v550
    %v589 = vpop.f32.mrf.mxu0
    %v590 = vadd.f32 0.0, %v589
    %v591 = vpop.f32.mrf.mxu0
    %v592 = vpop.f32.mrf.mxu0
    %v593 = vpop.f32.mrf.mxu0
    %594 = vdwg.mxu0
    %v595 = vpack.c.bf16 %v590, %v544
    %v600 = vunpack.c.l.b16 %v107
    %v601 = vunpack.c.l.b16 %v108
    %v602 = vunpack.c.l.b16 %v109
    %v603 = vunpack.c.l.b16 %v110
    %v604 = vpack.c.b16 %v601, %v600
    %v605 = vpack.c.b16 %v603, %v602
    %v609 = vsel %vm180, %v595, 0
    %611 = vmatprep.subr.bf16.mxu0 0
    %612 = vmatpush1.bf16.msra.mxu0 0
    %613 = vmatprep.subr.bf16.mxu0 0
    %614 = vmatpush1.bf16.msra.mxu0 0
    %615 = vmatprep.subr.bf16.mxu0 0
    %616 = vmatpush1.bf16.msra.mxu0 0
    %617 = vmatprep.subr.bf16.mxu0 0
    %618 = vmatpush1.bf16.msra.mxu0 0
    %619 = vmatprep.subr.bf16.mxu0 0
    %620 = vmatpush1.bf16.msra.mxu0 0
    %621 = vmatprep.subr.bf16.mxu0 0
    %622 = vmatpush1.bf16.msra.mxu0 0
    %623 = vmatprep.subr.bf16.mxu0 0
    %624 = vmatpush1.bf16.msra.mxu0 %v605
    %625 = vmatprep.subr.bf16.mxu0 0
    %626 = vmatpush1.bf16.msra.mxu0 %v604
    %627 = vmatprep.subr.bf16.mxu0 0
    %628 = vmatpush2.bf16.msra.mxu0 0
    %629 = vmatprep.subr.bf16.mxu0 0
    %630 = vmatpush2.bf16.msra.mxu0 0
    %631 = vmatprep.subr.bf16.mxu0 0
    %632 = vmatpush2.bf16.msra.mxu0 0
    %633 = vmatprep.subr.bf16.mxu0 0
    %634 = vmatpush2.bf16.msra.mxu0 0
    %635 = vmatprep.subr.bf16.mxu0 0
    %636 = vmatpush2.bf16.msra.mxu0 0
    %637 = vmatprep.subr.bf16.mxu0 0
    %638 = vmatpush2.bf16.msra.mxu0 0
    %639 = vmatprep.subr.bf16.mxu0 0
    %640 = vmatpush2.bf16.msra.mxu0 0
    %641 = vmatprep.subr.bf16.mxu0 0
    %642 = vmatpush2.bf16.msra.mxu0 0
    %643 = vmatprep.mubr.bf16.mxu0 0
    %644 = vmatmul.mubr.bf16.gmra.mxu0 %v609
    %v645 = vpop.f32.mrf.mxu0
    %v646 = vadd.f32 0.0, %v645
    %v647 = vpop.f32.mrf.mxu0
    %v648 = vpop.f32.mrf.mxu0
    %v649 = vadd.f32 0.0, %v648
    %v650 = vpop.f32.mrf.mxu0
    %651 = vdwg.mxu0
    %v652 = vadd.f32 %v93, %v646
    %v653 = vadd.f32 %v94, %v649
    %v654 = vsel %vm180, %v652, 0.0
    %655 = vadd.xlane.f32.xlu0 %v654
    %v656 = vpop.xlane.xlu0 %655
    %v657 = vsel %vm180, %v653, 0.0
    %658 = vadd.xlane.f32.xlu0 %v657
    %v659 = vpop.xlane.xlu0 %658
    %v660 = vmul.f32 %v656, %v187
    %v661 = vmul.f32 %v659, %v187
    %v662 = vsub.f32 %v652, %v660
    %v663 = vsub.f32 %v653, %v661
    %v664 = vmul.f32 %v662, %v662
    %v665 = vmul.f32 %v663, %v663
    %v666 = vsel %vm180, %v664, 0.0
    %667 = vadd.xlane.f32.xlu0 %v666
    %v668 = vpop.xlane.xlu0 %667
    %v669 = vsel %vm180, %v665, 0.0
    %670 = vadd.xlane.f32.xlu0 %v669
    %v671 = vpop.xlane.xlu0 %670
    %v672 = vmul.f32 %v668, %v187
    %v673 = vmul.f32 %v671, %v187
    %v674 = vadd.f32 %v672, 1e-05
    %v675 = vadd.f32 %v673, 1e-05
    %v676 = vrsqrt.pop %v674
    %v677 = vrsqrt.pop %v675
    %v678 = vmul.f32 %v662, %v676
    %v679 = vmul.f32 %v663, %v677
    %v680 = vmul.f32 %v678, %v150
    %v681 = vmul.f32 %v679, %v150
    %v682 = vadd.f32 %v680, %v157
    %v683 = vadd.f32 %v681, %v157
    %v684 = vpack.c.bf16 %v683, %v682
    %v689 = vunpack.c.l.b16 %v111
    %v690 = vunpack.c.l.b16 %v112
    %v691 = vunpack.c.l.b16 %v113
    %v692 = vunpack.c.l.b16 %v114
    %v693 = vpack.c.b16 %v690, %v689
    %v694 = vpack.c.b16 %v692, %v691
    %v698 = vsel %vm180, %v684, 0
    %700 = vmatprep.subr.bf16.mxu0 0
    %701 = vmatpush1.bf16.msra.mxu0 0
    %702 = vmatprep.subr.bf16.mxu0 0
    %703 = vmatpush1.bf16.msra.mxu0 0
    %704 = vmatprep.subr.bf16.mxu0 0
    %705 = vmatpush1.bf16.msra.mxu0 0
    %706 = vmatprep.subr.bf16.mxu0 0
    %707 = vmatpush1.bf16.msra.mxu0 0
    %708 = vmatprep.subr.bf16.mxu0 0
    %709 = vmatpush1.bf16.msra.mxu0 0
    %710 = vmatprep.subr.bf16.mxu0 0
    %711 = vmatpush1.bf16.msra.mxu0 0
    %712 = vmatprep.subr.bf16.mxu0 0
    %713 = vmatpush1.bf16.msra.mxu0 %v694
    %714 = vmatprep.subr.bf16.mxu0 0
    %715 = vmatpush1.bf16.msra.mxu0 %v693
    %716 = vmatprep.subr.bf16.mxu0 0
    %717 = vmatpush2.bf16.msra.mxu0 0
    %718 = vmatprep.subr.bf16.mxu0 0
    %719 = vmatpush2.bf16.msra.mxu0 0
    %720 = vmatprep.subr.bf16.mxu0 0
    %721 = vmatpush2.bf16.msra.mxu0 0
    %722 = vmatprep.subr.bf16.mxu0 0
    %723 = vmatpush2.bf16.msra.mxu0 0
    %724 = vmatprep.subr.bf16.mxu0 0
    %725 = vmatpush2.bf16.msra.mxu0 0
    %726 = vmatprep.subr.bf16.mxu0 0
    %727 = vmatpush2.bf16.msra.mxu0 0
    %728 = vmatprep.subr.bf16.mxu0 0
    %729 = vmatpush2.bf16.msra.mxu0 0
    %730 = vmatprep.subr.bf16.mxu0 0
    %731 = vmatpush2.bf16.msra.mxu0 0
    %732 = vmatprep.mubr.bf16.mxu0 0
    %733 = vmatmul.mubr.bf16.gmra.mxu0 %v698
    %v734 = vpop.f32.mrf.mxu0
    %v735 = vadd.f32 %v164, %v734
    %v736 = vpop.f32.mrf.mxu0
    %v737 = vpop.f32.mrf.mxu0
    %v738 = vadd.f32 %v164, %v737
    %v739 = vpop.f32.mrf.mxu0
    %740 = vdwg.mxu0
    %v741 = vmul.f32 %v735, %v735
    %v742 = vmul.f32 %v738, %v738
    %v743 = vmul.f32 %v735, %v741
    %v744 = vmul.f32 %v738, %v742
    %v745 = vmul.f32 %v743, 0.044715
    %v746 = vmul.f32 %v744, 0.044715
    %v747 = vadd.f32 %v735, %v745
    %v748 = vadd.f32 %v738, %v746
    %v749 = vmul.f32 %v747, 0.7978846
    %v750 = vmul.f32 %v748, 0.7978846
    %v751 = vtanh.pop %v749
    %v752 = vtanh.pop %v750
    %v753 = vadd.f32 %v751, 1.0
    %v754 = vadd.f32 %v752, 1.0
    %v755 = vmul.f32 %v753, 0.5
    %v756 = vmul.f32 %v754, 0.5
    %v757 = vmul.f32 %v735, %v755
    %v758 = vmul.f32 %v738, %v756
    %v759 = vpack.c.bf16 %v758, %v757
    %v776 = vunpack.c.l.b16 %v115
    %v777 = vunpack.c.l.b16 %v116
    %v778 = vunpack.c.l.b16 %v117
    %v779 = vunpack.c.l.b16 %v118
    %v780 = vunpack.c.l.b16 %v119
    %v781 = vunpack.c.l.b16 %v120
    %v782 = vunpack.c.l.b16 %v121
    %v783 = vunpack.c.l.b16 %v122
    %v784 = vunpack.c.l.b16 %v123
    %v785 = vunpack.c.l.b16 %v124
    %v786 = vunpack.c.l.b16 %v125
    %v787 = vunpack.c.l.b16 %v126
    %v788 = vunpack.c.l.b16 %v127
    %v789 = vunpack.c.l.b16 %v128
    %v790 = vunpack.c.l.b16 %v129
    %v791 = vunpack.c.l.b16 %v130
    %v792 = vpack.c.b16 %v777, %v776
    %v793 = vpack.c.b16 %v779, %v778
    %v794 = vpack.c.b16 %v781, %v780
    %v795 = vpack.c.b16 %v783, %v782
    %v796 = vpack.c.b16 %v785, %v784
    %v797 = vpack.c.b16 %v787, %v786
    %v798 = vpack.c.b16 %v789, %v788
    %v799 = vpack.c.b16 %v791, %v790
    %808 = vmatprep.subr.bf16.mxu0 0
    %809 = vmatpush1.bf16.msra.mxu0 %v799
    %810 = vmatprep.subr.bf16.mxu0 0
    %811 = vmatpush1.bf16.msra.mxu0 %v798
    %812 = vmatprep.subr.bf16.mxu0 0
    %813 = vmatpush1.bf16.msra.mxu0 %v797
    %814 = vmatprep.subr.bf16.mxu0 0
    %815 = vmatpush1.bf16.msra.mxu0 %v796
    %816 = vmatprep.subr.bf16.mxu0 0
    %817 = vmatpush1.bf16.msra.mxu0 %v795
    %818 = vmatprep.subr.bf16.mxu0 0
    %819 = vmatpush1.bf16.msra.mxu0 %v794
    %820 = vmatprep.subr.bf16.mxu0 0
    %821 = vmatpush1.bf16.msra.mxu0 %v793
    %822 = vmatprep.subr.bf16.mxu0 0
    %823 = vmatpush1.bf16.msra.mxu0 %v792
    %824 = vmatprep.subr.bf16.mxu0 0
    %825 = vmatpush2.bf16.msra.mxu0 0
    %826 = vmatprep.subr.bf16.mxu0 0
    %827 = vmatpush2.bf16.msra.mxu0 0
    %828 = vmatprep.subr.bf16.mxu0 0
    %829 = vmatpush2.bf16.msra.mxu0 0
    %830 = vmatprep.subr.bf16.mxu0 0
    %831 = vmatpush2.bf16.msra.mxu0 0
    %832 = vmatprep.subr.bf16.mxu0 0
    %833 = vmatpush2.bf16.msra.mxu0 0
    %834 = vmatprep.subr.bf16.mxu0 0
    %835 = vmatpush2.bf16.msra.mxu0 0
    %836 = vmatprep.subr.bf16.mxu0 0
    %837 = vmatpush2.bf16.msra.mxu0 0
    %838 = vmatprep.subr.bf16.mxu0 0
    %839 = vmatpush2.bf16.msra.mxu0 0
    %840 = vmatprep.mubr.bf16.mxu0 0
    %841 = vmatmul.mubr.bf16.gmra.mxu0 %v759
    %v842 = vpop.f32.mrf.mxu0
    %v843 = vadd.f32 0.0, %v842
    %v844 = vpop.f32.mrf.mxu0
    %v845 = vpop.f32.mrf.mxu0
    %v846 = vadd.f32 0.0, %v845
    %v847 = vpop.f32.mrf.mxu0
    %848 = vdwg.mxu0
    %v849 = vadd.f32 %v652, %v843
    %v850 = vadd.f32 %v653, %v846
    %v851 = vadd.f32 %v849, %v171
    %v852 = vadd.f32 %v850, %v171
    %v853 = vsel %vm180, %v851, 0.0
    %854 = vadd.xlane.f32.xlu0 %v853
    %v855 = vpop.xlane.xlu0 %854
    %v856 = vsel %vm180, %v852, 0.0
    %857 = vadd.xlane.f32.xlu0 %v856
    %v858 = vpop.xlane.xlu0 %857
    %v859 = vmul.f32 %v855, %v187
    %v860 = vmul.f32 %v858, %v187
    %v861 = vsub.f32 %v851, %v859
    %v862 = vsub.f32 %v852, %v860
    %v863 = vmul.f32 %v861, %v861
    %v864 = vmul.f32 %v862, %v862
    %v865 = vsel %vm180, %v863, 0.0
    %866 = vadd.xlane.f32.xlu0 %v865
    %v867 = vpop.xlane.xlu0 %866
    %v868 = vsel %vm180, %v864, 0.0
    %869 = vadd.xlane.f32.xlu0 %v868
    %v870 = vpop.xlane.xlu0 %869
    %v871 = vmul.f32 %v867, %v187
    %v872 = vmul.f32 %v870, %v187
    %v873 = vadd.f32 %v871, 1e-05
    %v874 = vadd.f32 %v872, 1e-05
    %v875 = vrsqrt.pop %v873
    %v876 = vrsqrt.pop %v874
    %v877 = vmul.f32 %v861, %v875
    %v878 = vmul.f32 %v862, %v876
    %v879 = vmul.f32 %v877, %v136
    %v880 = vmul.f32 %v878, %v136
    %v881 = vadd.f32 %v879, %v143
    %v882 = vadd.f32 %v880, %v143
    %v883 = vpack.c.bf16 %v882, %v881
    %v885 = vsel %vm180, %v883, 0
    %887 = vmatprep.subr.bf16.mxu0 0
    %888 = vmatpush1.bf16.msra.mxu0 0
    %889 = vmatprep.subr.bf16.mxu0 0
    %890 = vmatpush1.bf16.msra.mxu0 0
    %891 = vmatprep.subr.bf16.mxu0 0
    %892 = vmatpush1.bf16.msra.mxu0 0
    %893 = vmatprep.subr.bf16.mxu0 0
    %894 = vmatpush1.bf16.msra.mxu0 0
    %895 = vmatprep.subr.bf16.mxu0 0
    %896 = vmatpush1.bf16.msra.mxu0 0
    %897 = vmatprep.subr.bf16.mxu0 0
    %898 = vmatpush1.bf16.msra.mxu0 0
    %899 = vmatprep.subr.bf16.mxu0 0
    %900 = vmatpush1.bf16.msra.mxu0 %v222
    %901 = vmatprep.subr.bf16.mxu0 0
    %902 = vmatpush1.bf16.msra.mxu0 %v221
    %903 = vmatprep.subr.bf16.mxu0 0
    %904 = vmatpush2.bf16.msra.mxu0 0
    %905 = vmatprep.subr.bf16.mxu0 0
    %906 = vmatpush2.bf16.msra.mxu0 0
    %907 = vmatprep.subr.bf16.mxu0 0
    %908 = vmatpush2.bf16.msra.mxu0 0
    %909 = vmatprep.subr.bf16.mxu0 0
    %910 = vmatpush2.bf16.msra.mxu0 0
    %911 = vmatprep.subr.bf16.mxu0 0
    %912 = vmatpush2.bf16.msra.mxu0 0
    %913 = vmatprep.subr.bf16.mxu0 0
    %914 = vmatpush2.bf16.msra.mxu0 0
    %915 = vmatprep.subr.bf16.mxu0 0
    %916 = vmatpush2.bf16.msra.mxu0 0
    %917 = vmatprep.subr.bf16.mxu0 0
    %918 = vmatpush2.bf16.msra.mxu0 0
    %919 = vmatprep.mubr.bf16.mxu0 0
    %920 = vmatmul.mubr.bf16.gmra.mxu0 %v885
    %v921 = vpop.f32.mrf.mxu0
    %v922 = vadd.f32 0.0, %v921
    %v923 = vpop.f32.mrf.mxu0
    %v924 = vpop.f32.mrf.mxu0
    %v925 = vadd.f32 0.0, %v924
    %v926 = vpop.f32.mrf.mxu0
    %927 = vdwg.mxu0
    %928 = vmatprep.subr.bf16.mxu0 0
    %929 = vmatpush1.bf16.msra.mxu0 0
    %930 = vmatprep.subr.bf16.mxu0 0
    %931 = vmatpush1.bf16.msra.mxu0 0
    %932 = vmatprep.subr.bf16.mxu0 0
    %933 = vmatpush1.bf16.msra.mxu0 0
    %934 = vmatprep.subr.bf16.mxu0 0
    %935 = vmatpush1.bf16.msra.mxu0 0
    %936 = vmatprep.subr.bf16.mxu0 0
    %937 = vmatpush1.bf16.msra.mxu0 0
    %938 = vmatprep.subr.bf16.mxu0 0
    %939 = vmatpush1.bf16.msra.mxu0 0
    %940 = vmatprep.subr.bf16.mxu0 0
    %941 = vmatpush1.bf16.msra.mxu0 %v278
    %942 = vmatprep.subr.bf16.mxu0 0
    %943 = vmatpush1.bf16.msra.mxu0 %v277
    %944 = vmatprep.subr.bf16.mxu0 0
    %945 = vmatpush2.bf16.msra.mxu0 0
    %946 = vmatprep.subr.bf16.mxu0 0
    %947 = vmatpush2.bf16.msra.mxu0 0
    %948 = vmatprep.subr.bf16.mxu0 0
    %949 = vmatpush2.bf16.msra.mxu0 0
    %950 = vmatprep.subr.bf16.mxu0 0
    %951 = vmatpush2.bf16.msra.mxu0 0
    %952 = vmatprep.subr.bf16.mxu0 0
    %953 = vmatpush2.bf16.msra.mxu0 0
    %954 = vmatprep.subr.bf16.mxu0 0
    %955 = vmatpush2.bf16.msra.mxu0 0
    %956 = vmatprep.subr.bf16.mxu0 0
    %957 = vmatpush2.bf16.msra.mxu0 0
    %958 = vmatprep.subr.bf16.mxu0 0
    %959 = vmatpush2.bf16.msra.mxu0 0
    %960 = vmatprep.mubr.bf16.mxu0 0
    %961 = vmatmul.mubr.bf16.gmra.mxu0 %v885
    %v962 = vpop.f32.mrf.mxu0
    %v963 = vadd.f32 0.0, %v962
    %v964 = vpop.f32.mrf.mxu0
    %v965 = vpop.f32.mrf.mxu0
    %v966 = vadd.f32 0.0, %v965
    %v967 = vpop.f32.mrf.mxu0
    %968 = vdwg.mxu0
    %969 = vmatprep.subr.bf16.mxu0 0
    %970 = vmatpush1.bf16.msra.mxu0 0
    %971 = vmatprep.subr.bf16.mxu0 0
    %972 = vmatpush1.bf16.msra.mxu0 0
    %973 = vmatprep.subr.bf16.mxu0 0
    %974 = vmatpush1.bf16.msra.mxu0 0
    %975 = vmatprep.subr.bf16.mxu0 0
    %976 = vmatpush1.bf16.msra.mxu0 0
    %977 = vmatprep.subr.bf16.mxu0 0
    %978 = vmatpush1.bf16.msra.mxu0 0
    %979 = vmatprep.subr.bf16.mxu0 0
    %980 = vmatpush1.bf16.msra.mxu0 0
    %981 = vmatprep.subr.bf16.mxu0 0
    %982 = vmatpush1.bf16.msra.mxu0 %v331
    %983 = vmatprep.subr.bf16.mxu0 0
    %984 = vmatpush1.bf16.msra.mxu0 %v330
    %985 = vmatprep.subr.bf16.mxu0 0
    %986 = vmatpush2.bf16.msra.mxu0 0
    %987 = vmatprep.subr.bf16.mxu0 0
    %988 = vmatpush2.bf16.msra.mxu0 0
    %989 = vmatprep.subr.bf16.mxu0 0
    %990 = vmatpush2.bf16.msra.mxu0 0
    %991 = vmatprep.subr.bf16.mxu0 0
    %992 = vmatpush2.bf16.msra.mxu0 0
    %993 = vmatprep.subr.bf16.mxu0 0
    %994 = vmatpush2.bf16.msra.mxu0 0
    %995 = vmatprep.subr.bf16.mxu0 0
    %996 = vmatpush2.bf16.msra.mxu0 0
    %997 = vmatprep.subr.bf16.mxu0 0
    %998 = vmatpush2.bf16.msra.mxu0 0
    %999 = vmatprep.subr.bf16.mxu0 0
    %1000 = vmatpush2.bf16.msra.mxu0 0
    %1001 = vmatprep.mubr.bf16.mxu0 0
    %1002 = vmatmul.mubr.bf16.gmra.mxu0 %v885
    %v1003 = vpop.f32.mrf.mxu0
    %v1004 = vadd.f32 0.0, %v1003
    %v1005 = vpop.f32.mrf.mxu0
    %v1006 = vpop.f32.mrf.mxu0
    %v1007 = vadd.f32 0.0, %v1006
    %v1008 = vpop.f32.mrf.mxu0
    %1009 = vdwg.mxu0
    %v1010 = vpack.c.bf16 %v922, %v922
    %v1011 = vpack.c.bf16 %v925, %v925
    %v1012 = vpack.c.bf16 %v963, %v963
    %v1013 = vpack.c.bf16 %v966, %v966
    %v1014 = vpack.c.bf16 %v1004, %v1004
    %v1015 = vpack.c.bf16 %v1007, %v1007
    %v1017 = vsel %vm180, %v1010, 0
    %v1020 = vsel %vm180, %v1012, 0
    %1022 = vmatprep.subr.bf16.mxu0 0
    %1023 = vmatpush1.bf16.xpose.msra.mxu0 0
    %1024 = vmatprep.subr.bf16.mxu0 0
    %1025 = vmatpush1.bf16.xpose.msra.mxu0 0
    %1026 = vmatprep.subr.bf16.mxu0 0
    %1027 = vmatpush1.bf16.xpose.msra.mxu0 0
    %1028 = vmatprep.subr.bf16.mxu0 0
    %1029 = vmatpush1.bf16.xpose.msra.mxu0 0
    %1030 = vmatprep.subr.bf16.mxu0 0
    %1031 = vmatpush1.bf16.xpose.msra.mxu0 0
    %1032 = vmatprep.subr.bf16.mxu0 0
    %1033 = vmatpush1.bf16.xpose.msra.mxu0 0
    %1034 = vmatprep.subr.bf16.mxu0 0
    %1035 = vmatpush1.bf16.xpose.msra.mxu0 0
    %1036 = vmatprep.subr.bf16.mxu0 0
    %1037 = vmatpush1.bf16.xpose.msra.mxu0 %v1020
    %1038 = vmatprep.subr.bf16.mxu0 0
    %1039 = vmatpush2.bf16.xpose.msra.mxu0 0
    %1040 = vmatprep.subr.bf16.mxu0 0
    %1041 = vmatpush2.bf16.xpose.msra.mxu0 0
    %1042 = vmatprep.subr.bf16.mxu0 0
    %1043 = vmatpush2.bf16.xpose.msra.mxu0 0
    %1044 = vmatprep.subr.bf16.mxu0 0
    %1045 = vmatpush2.bf16.xpose.msra.mxu0 0
    %1046 = vmatprep.subr.bf16.mxu0 0
    %1047 = vmatpush2.bf16.xpose.msra.mxu0 0
    %1048 = vmatprep.subr.bf16.mxu0 0
    %1049 = vmatpush2.bf16.xpose.msra.mxu0 0
    %1050 = vmatprep.subr.bf16.mxu0 0
    %1051 = vmatpush2.bf16.xpose.msra.mxu0 0
    %1052 = vmatprep.subr.bf16.mxu0 0
    %1053 = vmatpush2.bf16.xpose.msra.mxu0 0
    %1054 = vmatprep.mubr.bf16.mxu0 0
    %1055 = vmatmul.mubr.bf16.gmra.mxu0 %v1017
    %v1056 = vpop.f32.mrf.mxu0
    %v1057 = vadd.f32 0.0, %v1056
    %v1058 = vpop.f32.mrf.mxu0
    %v1059 = vpop.f32.mrf.mxu0
    %v1060 = vpop.f32.mrf.mxu0
    %1061 = vdwg.mxu0
    %v1063 = vsel %vm180, %v1011, 0
    %v1066 = vsel %vm180, %v1013, 0
    %1068 = vmatprep.subr.bf16.mxu0 0
    %1069 = vmatpush1.bf16.xpose.msra.mxu0 0
    %1070 = vmatprep.subr.bf16.mxu0 0
    %1071 = vmatpush1.bf16.xpose.msra.mxu0 0
    %1072 = vmatprep.subr.bf16.mxu0 0
    %1073 = vmatpush1.bf16.xpose.msra.mxu0 0
    %1074 = vmatprep.subr.bf16.mxu0 0
    %1075 = vmatpush1.bf16.xpose.msra.mxu0 0
    %1076 = vmatprep.subr.bf16.mxu0 0
    %1077 = vmatpush1.bf16.xpose.msra.mxu0 0
    %1078 = vmatprep.subr.bf16.mxu0 0
    %1079 = vmatpush1.bf16.xpose.msra.mxu0 0
    %1080 = vmatprep.subr.bf16.mxu0 0
    %1081 = vmatpush1.bf16.xpose.msra.mxu0 0
    %1082 = vmatprep.subr.bf16.mxu0 0
    %1083 = vmatpush1.bf16.xpose.msra.mxu0 %v1066
    %1084 = vmatprep.subr.bf16.mxu0 0
    %1085 = vmatpush2.bf16.xpose.msra.mxu0 0
    %1086 = vmatprep.subr.bf16.mxu0 0
    %1087 = vmatpush2.bf16.xpose.msra.mxu0 0
    %1088 = vmatprep.subr.bf16.mxu0 0
    %1089 = vmatpush2.bf16.xpose.msra.mxu0 0
    %1090 = vmatprep.subr.bf16.mxu0 0
    %1091 = vmatpush2.bf16.xpose.msra.mxu0 0
    %1092 = vmatprep.subr.bf16.mxu0 0
    %1093 = vmatpush2.bf16.xpose.msra.mxu0 0
    %1094 = vmatprep.subr.bf16.mxu0 0
    %1095 = vmatpush2.bf16.xpose.msra.mxu0 0
    %1096 = vmatprep.subr.bf16.mxu0 0
    %1097 = vmatpush2.bf16.xpose.msra.mxu0 0
    %1098 = vmatprep.subr.bf16.mxu0 0
    %1099 = vmatpush2.bf16.xpose.msra.mxu0 0
    %1100 = vmatprep.mubr.bf16.mxu0 0
    %1101 = vmatmul.mubr.bf16.gmra.mxu0 %v1063
    %v1102 = vpop.f32.mrf.mxu0
    %v1103 = vadd.f32 0.0, %v1102
    %v1104 = vpop.f32.mrf.mxu0
    %v1105 = vpop.f32.mrf.mxu0
    %v1106 = vpop.f32.mrf.mxu0
    %1107 = vdwg.mxu0
    %v1108 = vmul.f32 %v1057, 0.17677669
    %v1109 = vmul.f32 %v1103, 0.17677669
    %v1110 = vsel %vm179, %v1108, -1e+30
    %v1111 = vsel %vm179, %v1109, -1e+30
    %v1112 = vsel %vm477, %v1110, -inf
    %1113 = vmax.xlane.f32.xlu0 %v1112
    %v1114 = vpop.xlane.xlu0 %1113
    %v1115 = vsel %vm477, %v1111, -inf
    %1116 = vmax.xlane.f32.xlu0 %v1115
    %v1117 = vpop.xlane.xlu0 %1116
    %v1118 = vsub.f32 %v1110, %v1114
    %v1119 = vsub.f32 %v1111, %v1117
    %v1120 = vmul.f32 %v1118, 1.442695
    %v1121 = vpow.pop %v1120
    %v1122 = vmul.f32 %v1119, 1.442695
    %v1123 = vpow.pop %v1122
    %v1124 = vsel %vm477, %v1121, 0.0
    %1125 = vadd.xlane.f32.xlu0 %v1124
    %v1126 = vpop.xlane.xlu0 %1125
    %v1127 = vsel %vm477, %v1123, 0.0
    %1128 = vadd.xlane.f32.xlu0 %v1127
    %v1129 = vpop.xlane.xlu0 %1128
    %v1130 = vrcp.pop %v1126
    %v1131 = vrcp.pop %v1129
    %v1132 = vmul.f32 %v1121, %v1130
    %v1133 = vmul.f32 %v1123, %v1131
    %v1134 = vpack.c.bf16 %v1132, %v1132
    %v1135 = vpack.c.bf16 %v1133, %v1133
    %v1137 = vsel %vm477, %v1134, 0
    %v1140 = vsel %vm505, %v1014, 0
    %1142 = vmatprep.subr.bf16.mxu0 0
    %1143 = vmatpush1.bf16.msra.mxu0 0
    %1144 = vmatprep.subr.bf16.mxu0 0
    %1145 = vmatpush1.bf16.msra.mxu0 0
    %1146 = vmatprep.subr.bf16.mxu0 0
    %1147 = vmatpush1.bf16.msra.mxu0 0
    %1148 = vmatprep.subr.bf16.mxu0 0
    %1149 = vmatpush1.bf16.msra.mxu0 0
    %1150 = vmatprep.subr.bf16.mxu0 0
    %1151 = vmatpush1.bf16.msra.mxu0 0
    %1152 = vmatprep.subr.bf16.mxu0 0
    %1153 = vmatpush1.bf16.msra.mxu0 0
    %1154 = vmatprep.subr.bf16.mxu0 0
    %1155 = vmatpush1.bf16.msra.mxu0 0
    %1156 = vmatprep.subr.bf16.mxu0 0
    %1157 = vmatpush1.bf16.msra.mxu0 %v1140
    %1158 = vmatprep.subr.bf16.mxu0 0
    %1159 = vmatpush2.bf16.msra.mxu0 0
    %1160 = vmatprep.subr.bf16.mxu0 0
    %1161 = vmatpush2.bf16.msra.mxu0 0
    %1162 = vmatprep.subr.bf16.mxu0 0
    %1163 = vmatpush2.bf16.msra.mxu0 0
    %1164 = vmatprep.subr.bf16.mxu0 0
    %1165 = vmatpush2.bf16.msra.mxu0 0
    %1166 = vmatprep.subr.bf16.mxu0 0
    %1167 = vmatpush2.bf16.msra.mxu0 0
    %1168 = vmatprep.subr.bf16.mxu0 0
    %1169 = vmatpush2.bf16.msra.mxu0 0
    %1170 = vmatprep.subr.bf16.mxu0 0
    %1171 = vmatpush2.bf16.msra.mxu0 0
    %1172 = vmatprep.subr.bf16.mxu0 0
    %1173 = vmatpush2.bf16.msra.mxu0 0
    %1174 = vmatprep.mubr.bf16.mxu0 0
    %1175 = vmatmul.mubr.bf16.gmra.mxu0 %v1137
    %v1176 = vpop.f32.mrf.mxu0
    %v1177 = vadd.f32 0.0, %v1176
    %v1178 = vpop.f32.mrf.mxu0
    %v1179 = vpop.f32.mrf.mxu0
    %v1180 = vpop.f32.mrf.mxu0
    %1181 = vdwg.mxu0
    %v1183 = vsel %vm477, %v1135, 0
    %v1186 = vsel %vm505, %v1015, 0
    %1188 = vmatprep.subr.bf16.mxu0 0
    %1189 = vmatpush1.bf16.msra.mxu0 0
    %1190 = vmatprep.subr.bf16.mxu0 0
    %1191 = vmatpush1.bf16.msra.mxu0 0
    %1192 = vmatprep.subr.bf16.mxu0 0
    %1193 = vmatpush1.bf16.msra.mxu0 0
    %1194 = vmatprep.subr.bf16.mxu0 0
    %1195 = vmatpush1.bf16.msra.mxu0 0
    %1196 = vmatprep.subr.bf16.mxu0 0
    %1197 = vmatpush1.bf16.msra.mxu0 0
    %1198 = vmatprep.subr.bf16.mxu0 0
    %1199 = vmatpush1.bf16.msra.mxu0 0
    %1200 = vmatprep.subr.bf16.mxu0 0
    %1201 = vmatpush1.bf16.msra.mxu0 0
    %1202 = vmatprep.subr.bf16.mxu0 0
    %1203 = vmatpush1.bf16.msra.mxu0 %v1186
    %1204 = vmatprep.subr.bf16.mxu0 0
    %1205 = vmatpush2.bf16.msra.mxu0 0
    %1206 = vmatprep.subr.bf16.mxu0 0
    %1207 = vmatpush2.bf16.msra.mxu0 0
    %1208 = vmatprep.subr.bf16.mxu0 0
    %1209 = vmatpush2.bf16.msra.mxu0 0
    %1210 = vmatprep.subr.bf16.mxu0 0
    %1211 = vmatpush2.bf16.msra.mxu0 0
    %1212 = vmatprep.subr.bf16.mxu0 0
    %1213 = vmatpush2.bf16.msra.mxu0 0
    %1214 = vmatprep.subr.bf16.mxu0 0
    %1215 = vmatpush2.bf16.msra.mxu0 0
    %1216 = vmatprep.subr.bf16.mxu0 0
    %1217 = vmatpush2.bf16.msra.mxu0 0
    %1218 = vmatprep.subr.bf16.mxu0 0
    %1219 = vmatpush2.bf16.msra.mxu0 0
    %1220 = vmatprep.mubr.bf16.mxu0 0
    %1221 = vmatmul.mubr.bf16.gmra.mxu0 %v1183
    %v1222 = vpop.f32.mrf.mxu0
    %v1223 = vadd.f32 0.0, %v1222
    %v1224 = vpop.f32.mrf.mxu0
    %v1225 = vpop.f32.mrf.mxu0
    %v1226 = vpop.f32.mrf.mxu0
    %1227 = vdwg.mxu0
    %v1228 = vpack.c.bf16 %v1223, %v1177
    %v1230 = vsel %vm180, %v1228, 0
    %1232 = vmatprep.subr.bf16.mxu0 0
    %1233 = vmatpush1.bf16.msra.mxu0 0
    %1234 = vmatprep.subr.bf16.mxu0 0
    %1235 = vmatpush1.bf16.msra.mxu0 0
    %1236 = vmatprep.subr.bf16.mxu0 0
    %1237 = vmatpush1.bf16.msra.mxu0 0
    %1238 = vmatprep.subr.bf16.mxu0 0
    %1239 = vmatpush1.bf16.msra.mxu0 0
    %1240 = vmatprep.subr.bf16.mxu0 0
    %1241 = vmatpush1.bf16.msra.mxu0 0
    %1242 = vmatprep.subr.bf16.mxu0 0
    %1243 = vmatpush1.bf16.msra.mxu0 0
    %1244 = vmatprep.subr.bf16.mxu0 0
    %1245 = vmatpush1.bf16.msra.mxu0 %v605
    %1246 = vmatprep.subr.bf16.mxu0 0
    %1247 = vmatpush1.bf16.msra.mxu0 %v604
    %1248 = vmatprep.subr.bf16.mxu0 0
    %1249 = vmatpush2.bf16.msra.mxu0 0
    %1250 = vmatprep.subr.bf16.mxu0 0
    %1251 = vmatpush2.bf16.msra.mxu0 0
    %1252 = vmatprep.subr.bf16.mxu0 0
    %1253 = vmatpush2.bf16.msra.mxu0 0
    %1254 = vmatprep.subr.bf16.mxu0 0
    %1255 = vmatpush2.bf16.msra.mxu0 0
    %1256 = vmatprep.subr.bf16.mxu0 0
    %1257 = vmatpush2.bf16.msra.mxu0 0
    %1258 = vmatprep.subr.bf16.mxu0 0
    %1259 = vmatpush2.bf16.msra.mxu0 0
    %1260 = vmatprep.subr.bf16.mxu0 0
    %1261 = vmatpush2.bf16.msra.mxu0 0
    %1262 = vmatprep.subr.bf16.mxu0 0
    %1263 = vmatpush2.bf16.msra.mxu0 0
    %1264 = vmatprep.mubr.bf16.mxu0 0
    %1265 = vmatmul.mubr.bf16.gmra.mxu0 %v1230
    %v1266 = vpop.f32.mrf.mxu0
    %v1267 = vadd.f32 0.0, %v1266
    %v1268 = vpop.f32.mrf.mxu0
    %v1269 = vpop.f32.mrf.mxu0
    %v1270 = vadd.f32 0.0, %v1269
    %v1271 = vpop.f32.mrf.mxu0
    %1272 = vdwg.mxu0
    %v1273 = vadd.f32 %v851, %v1267
    %v1274 = vadd.f32 %v852, %v1270
    %v1275 = vsel %vm180, %v1273, 0.0
    %1276 = vadd.xlane.f32.xlu0 %v1275
    %v1277 = vpop.xlane.xlu0 %1276
    %v1278 = vsel %vm180, %v1274, 0.0
    %1279 = vadd.xlane.f32.xlu0 %v1278
    %v1280 = vpop.xlane.xlu0 %1279
    %v1281 = vmul.f32 %v1277, %v187
    %v1282 = vmul.f32 %v1280, %v187
    %v1283 = vsub.f32 %v1273, %v1281
    %v1284 = vsub.f32 %v1274, %v1282
    %v1285 = vmul.f32 %v1283, %v1283
    %v1286 = vmul.f32 %v1284, %v1284
    %v1287 = vsel %vm180, %v1285, 0.0
    %1288 = vadd.xlane.f32.xlu0 %v1287
    %v1289 = vpop.xlane.xlu0 %1288
    %v1290 = vsel %vm180, %v1286, 0.0
    %1291 = vadd.xlane.f32.xlu0 %v1290
    %v1292 = vpop.xlane.xlu0 %1291
    %v1293 = vmul.f32 %v1289, %v187
    %v1294 = vmul.f32 %v1292, %v187
    %v1295 = vadd.f32 %v1293, 1e-05
    %v1296 = vadd.f32 %v1294, 1e-05
    %v1297 = vrsqrt.pop %v1295
    %v1298 = vrsqrt.pop %v1296
    %v1299 = vmul.f32 %v1283, %v1297
    %v1300 = vmul.f32 %v1284, %v1298
    %v1301 = vmul.f32 %v1299, %v150
    %v1302 = vmul.f32 %v1300, %v150
    %v1303 = vadd.f32 %v1301, %v157
    %v1304 = vadd.f32 %v1302, %v157
    %v1305 = vpack.c.bf16 %v1304, %v1303
    %v1307 = vsel %vm180, %v1305, 0
    %1309 = vmatprep.subr.bf16.mxu0 0
    %1310 = vmatpush1.bf16.msra.mxu0 0
    %1311 = vmatprep.subr.bf16.mxu0 0
    %1312 = vmatpush1.bf16.msra.mxu0 0
    %1313 = vmatprep.subr.bf16.mxu0 0
    %1314 = vmatpush1.bf16.msra.mxu0 0
    %1315 = vmatprep.subr.bf16.mxu0 0
    %1316 = vmatpush1.bf16.msra.mxu0 0
    %1317 = vmatprep.subr.bf16.mxu0 0
    %1318 = vmatpush1.bf16.msra.mxu0 0
    %1319 = vmatprep.subr.bf16.mxu0 0
    %1320 = vmatpush1.bf16.msra.mxu0 0
    %1321 = vmatprep.subr.bf16.mxu0 0
    %1322 = vmatpush1.bf16.msra.mxu0 %v694
    %1323 = vmatprep.subr.bf16.mxu0 0
    %1324 = vmatpush1.bf16.msra.mxu0 %v693
    %1325 = vmatprep.subr.bf16.mxu0 0
    %1326 = vmatpush2.bf16.msra.mxu0 0
    %1327 = vmatprep.subr.bf16.mxu0 0
    %1328 = vmatpush2.bf16.msra.mxu0 0
    %1329 = vmatprep.subr.bf16.mxu0 0
    %1330 = vmatpush2.bf16.msra.mxu0 0
    %1331 = vmatprep.subr.bf16.mxu0 0
    %1332 = vmatpush2.bf16.msra.mxu0 0
    %1333 = vmatprep.subr.bf16.mxu0 0
    %1334 = vmatpush2.bf16.msra.mxu0 0
    %1335 = vmatprep.subr.bf16.mxu0 0
    %1336 = vmatpush2.bf16.msra.mxu0 0
    %1337 = vmatprep.subr.bf16.mxu0 0
    %1338 = vmatpush2.bf16.msra.mxu0 0
    %1339 = vmatprep.subr.bf16.mxu0 0
    %1340 = vmatpush2.bf16.msra.mxu0 0
    %1341 = vmatprep.mubr.bf16.mxu0 0
    %1342 = vmatmul.mubr.bf16.gmra.mxu0 %v1307
    %v1343 = vpop.f32.mrf.mxu0
    %v1344 = vadd.f32 %v164, %v1343
    %v1345 = vpop.f32.mrf.mxu0
    %v1346 = vpop.f32.mrf.mxu0
    %v1347 = vadd.f32 %v164, %v1346
    %v1348 = vpop.f32.mrf.mxu0
    %1349 = vdwg.mxu0
    %v1350 = vmul.f32 %v1344, %v1344
    %v1351 = vmul.f32 %v1347, %v1347
    %v1352 = vmul.f32 %v1344, %v1350
    %v1353 = vmul.f32 %v1347, %v1351
    %v1354 = vmul.f32 %v1352, 0.044715
    %v1355 = vmul.f32 %v1353, 0.044715
    %v1356 = vadd.f32 %v1344, %v1354
    %v1357 = vadd.f32 %v1347, %v1355
    %v1358 = vmul.f32 %v1356, 0.7978846
    %v1359 = vmul.f32 %v1357, 0.7978846
    %v1360 = vtanh.pop %v1358
    %v1361 = vtanh.pop %v1359
    %v1362 = vadd.f32 %v1360, 1.0
    %v1363 = vadd.f32 %v1361, 1.0
    %v1364 = vmul.f32 %v1362, 0.5
    %v1365 = vmul.f32 %v1363, 0.5
    %v1366 = vmul.f32 %v1344, %v1364
    %v1367 = vmul.f32 %v1347, %v1365
    %v1368 = vpack.c.bf16 %v1367, %v1366
    %1369 = vmatprep.subr.bf16.mxu0 0
    %1370 = vmatpush1.bf16.msra.mxu0 %v799
    %1371 = vmatprep.subr.bf16.mxu0 0
    %1372 = vmatpush1.bf16.msra.mxu0 %v798
    %1373 = vmatprep.subr.bf16.mxu0 0
    %1374 = vmatpush1.bf16.msra.mxu0 %v797
    %1375 = vmatprep.subr.bf16.mxu0 0
    %1376 = vmatpush1.bf16.msra.mxu0 %v796
    %1377 = vmatprep.subr.bf16.mxu0 0
    %1378 = vmatpush1.bf16.msra.mxu0 %v795
    %1379 = vmatprep.subr.bf16.mxu0 0
    %1380 = vmatpush1.bf16.msra.mxu0 %v794
    %1381 = vmatprep.subr.bf16.mxu0 0
    %1382 = vmatpush1.bf16.msra.mxu0 %v793
    %1383 = vmatprep.subr.bf16.mxu0 0
    %1384 = vmatpush1.bf16.msra.mxu0 %v792
    %1385 = vmatprep.subr.bf16.mxu0 0
    %1386 = vmatpush2.bf16.msra.mxu0 0
    %1387 = vmatprep.subr.bf16.mxu0 0
    %1388 = vmatpush2.bf16.msra.mxu0 0
    %1389 = vmatprep.subr.bf16.mxu0 0
    %1390 = vmatpush2.bf16.msra.mxu0 0
    %1391 = vmatprep.subr.bf16.mxu0 0
    %1392 = vmatpush2.bf16.msra.mxu0 0
    %1393 = vmatprep.subr.bf16.mxu0 0
    %1394 = vmatpush2.bf16.msra.mxu0 0
    %1395 = vmatprep.subr.bf16.mxu0 0
    %1396 = vmatpush2.bf16.msra.mxu0 0
    %1397 = vmatprep.subr.bf16.mxu0 0
    %1398 = vmatpush2.bf16.msra.mxu0 0
    %1399 = vmatprep.subr.bf16.mxu0 0
    %1400 = vmatpush2.bf16.msra.mxu0 0
    %1401 = vmatprep.mubr.bf16.mxu0 0
    %1402 = vmatmul.mubr.bf16.gmra.mxu0 %v1368
    %v1403 = vpop.f32.mrf.mxu0
    %v1404 = vadd.f32 0.0, %v1403
    %v1405 = vpop.f32.mrf.mxu0
    %v1406 = vpop.f32.mrf.mxu0
    %v1407 = vadd.f32 0.0, %v1406
    %v1408 = vpop.f32.mrf.mxu0
    %1409 = vdwg.mxu0
    %v1410 = vadd.f32 %v1273, %v1404
    %v1411 = vadd.f32 %v1274, %v1407
    %v1412 = vadd.f32 %v1410, %v171
    %v1413 = vadd.f32 %v1411, %v171
    %1414 = vst.msk [vmem:[#allocation10] sm:$0xff] %vm180, %v1412
    %1415 = vst.msk [vmem:[#allocation10 + $0x8] sm:$0xff] %vm180, %v1413
    // Predicated region
    $region70: #{tpu_custom_call.1} parent=1 // pred_check
      _
    $region71: #{tpu_custom_call.1} parent=1 // pred_check_branch
      %1417 = sbr.rel (0) target = $region73
    $region72: #{tpu_custom_call.1} parent=1 // pred_region
      %s1419 = ssub.s32 256, 256
      %1420 = vsyncadd [#allocation4], %s1419
      %s1421 = sshll.u32 [#allocation10], 4
      %s1422 = int_to_ptr.vmem [resolvable:$true] %s1421
      %1427 = dma.vmem_to_hbm [thread:$0]  %s1422, 256, %s13, [#allocation4], 128, 128, 8
    $region73: #{tpu_custom_call.1} parent=1 // pred_fallthru
      _
    // Predicated region
    $region74: #{tpu_custom_call.1} parent=1 // pred_check
      _
    $region75: #{tpu_custom_call.1} parent=1 // pred_check_branch
      %1429 = sbr.rel (0) target = $region77
    $region76: #{tpu_custom_call.1} parent=1 // pred_region
      %1430 = dma.done [#allocation4], 256
    $region77: #{tpu_custom_call.1} parent=1 // pred_fallthru
      _
    %1431 = vsyncpa [#allocation3], 1
    %1432 = vsyncpa [#allocation6], 1
    %1433 = vsyncpa [#allocation9], 1
    %1434 = vsyncpa [#allocation4], 1

</llo_original>
